<compile_context>
chip_gen: v6e
topology: v6e:2x2x1
jax: 0.10.0
libtpu: 0.0.40
codegen_flags: <defaults>
</compile_context>

<pallas_src>
import jax
import jax.numpy as jnp
from jax import lax
from jax.experimental import pallas as pl
from jax.experimental.pallas import tpu as pltpu

K = 4            # kernel_size of every ConvTranspose1d
LEAK = 0.01      # nn.LeakyReLU default negative_slope
BN_EPS = 1e-5    # nn.BatchNorm1d default eps
PP_WIDTH = 256   # lane width of the packed small-parameter array


# ------------------------------ fused kernel --------------------------------

def _regressor_kernel(x_ref, w1, w2, w3, w4, pp, o_ref):
    """Whole Regressor forward. All refs are whole-array VMEM residents.

    x_ref : (B, L0, C0) channel-last input
    w1..w4: (K*Cin_i, Cout_i) tap-flipped transposed-conv weight matrices
    pp    : (16, W) packed small params:
              rows 3i/3i+1/3i+2 = conv bias / BN gamma / BN beta of layer i
              row 12 = conv5 bias, 13 = linear weight (L5,), 14 = linear bias,
              row 15 = conv5 weight as a (K*C4,)-wide tap-flipped vector
    o_ref : (B, 1) output
    """
    f32 = jnp.float32

    def im2col(x):
        """(B, Lin, Cin) -> (B, Lout, K*Cin); col[b,j,t*Cin+ci] = xpad[b,j+t,ci]."""
        b, lin, cin = x.shape
        lout = lin + K - 1
        zp = jnp.zeros((b, K - 1, cin), f32)
        xp = jnp.concatenate([zp, x, zp], axis=1)          # (B, Lin+2(K-1), Cin)
        cols = [xp[:, t:t + lout, :] for t in range(K)]     # K static shifted reads
        return jnp.concatenate(cols, axis=-1), lout

    def layer(x, w_ref, idx):
        """ConvTranspose1d (+bias) + training-mode BatchNorm1d + LeakyReLU."""
        b, lin, cin = x.shape
        cout = w_ref.shape[1]
        xcol, lout = im2col(x)
        # One lane-dense MXU matmul for all K taps of the layer.
        y = jnp.dot(xcol.reshape(b * lout, K * cin), w_ref[...],
                    preferred_element_type=f32)              # (B*Lout, Cout)
        r = 3 * idx
        y = y + pp[r:r + 1, :cout]                           # conv bias
        n = b * lout
        mean = jnp.sum(y, axis=0, keepdims=True) * (1.0 / n)
        d = y - mean                                          # two-pass variance
        var = jnp.sum(d * d, axis=0, keepdims=True) * (1.0 / n)
        y = d * lax.rsqrt(var + BN_EPS) * pp[r + 1:r + 2, :cout] \
            + pp[r + 2:r + 3, :cout]
        y = jnp.where(y > 0.0, y, LEAK * y)                   # LeakyReLU
        return y.reshape(b, lout, cout)

    x = x_ref[...].astype(f32)
    x = layer(x, w1, 0)
    x = layer(x, w2, 1)
    x = layer(x, w3, 2)
    x = layer(x, w4, 3)

    # Layer 5 (Cout = 1, no BN) + LeakyReLU + Linear: lane-major epilogue.
    b, l4, c4 = x.shape
    xcol5, l5 = im2col(x)                                     # (B, L5, K*C4), K*C4 = 128
    w5v = pp[15:16, :K * c4].reshape(1, 1, K * c4)
    y5 = jnp.sum(xcol5 * w5v, axis=-1)                        # (B, L5), L5 on lanes
    y5 = y5 + pp[12:13, 0:1]                                  # conv5 bias
    y5 = jnp.where(y5 > 0.0, y5, LEAK * y5)
    out = jnp.sum(y5 * pp[13:14, :l5], axis=-1, keepdims=True) + pp[14:15, 0:1]
    o_ref[...] = out                                          # (B, 1)


# ----------------------- parameter preparation (once) ------------------------

def prepare_params(conv_ws, conv_bs, gammas, betas, lin_w, lin_b):
    """Hoisted, once-per-model weight prep (no per-forward transposes).

    Conv weight (Cin, Cout, K) -> tap-flipped (K*Cin, Cout) matrix Wm so that
      y[b, j, co] = sum_{t,ci} xpad[b, j+t, ci] * Wm[t*Cin+ci, co]
    reproduces ConvTranspose1d(stride=1, padding=0) exactly.
    All tiny vectors are packed into a single (16, W) f32 array `pp`.
    """
    def wmat(w):
        cin, cout, k = w.shape
        return jnp.transpose(w[:, :, ::-1].astype(jnp.float32),
                             (2, 0, 1)).reshape(k * cin, cout)

    w1, w2, w3, w4 = (wmat(conv_ws[i]) for i in range(4))
    c4 = conv_ws[4].shape[0]
    w5vec = jnp.transpose(conv_ws[4][:, :, ::-1].astype(jnp.float32),
                          (2, 0, 1)).reshape(K * c4)
    l5 = lin_w.shape[0]
    width = max(PP_WIDTH, l5, K * c4, *(conv_ws[i].shape[1] for i in range(4)))

    def row(v):
        v = jnp.asarray(v, jnp.float32).reshape(-1)
        return jnp.pad(v, (0, width - v.shape[0]))

    rows = []
    for i in range(4):
        rows += [row(conv_bs[i]), row(gammas[i]), row(betas[i])]
    rows += [row(conv_bs[4]), row(lin_w), row(lin_b), row(w5vec)]
    pp = jnp.stack(rows, axis=0)                              # (16, width)
    return dict(w1=w1, w2=w2, w3=w3, w4=w4, pp=pp)


# -------------------------------- forward -----------------------------------

@jax.jit
def regressor_forward(x_ncl, params):
    """x_ncl: (B, koopman_size, L) like PyTorch; returns (B, 1)."""
    B = x_ncl.shape[0]
    x = jnp.transpose(x_ncl, (0, 2, 1)).astype(jnp.float32)   # -> (B, L0, C0)
    vmem = pl.BlockSpec(memory_space=pltpu.MemorySpace.VMEM)
    return pl.pallas_call(
        _regressor_kernel,
        out_shape=jax.ShapeDtypeStruct((B, 1), jnp.float32),
        in_specs=[vmem] * 6,
        out_specs=vmem,
    )(x, params['w1'], params['w2'], params['w3'], params['w4'], params['pp'])


# ------------------------- pure-JAX reference (check) ------------------------

def regressor_reference(x_ncl, conv_ws, conv_bs, gammas, betas, lin_w, lin_b):
    x = jnp.transpose(x_ncl, (0, 2, 1)).astype(jnp.float32)
    for i in range(5):
        B, L, Cin = x.shape
        Cout = conv_ws[i].shape[1]
        Lout = L + K - 1
        xp = jnp.pad(x, ((0, 0), (K - 1, K - 1), (0, 0)))
        wf = jnp.transpose(conv_ws[i][:, :, ::-1], (2, 0, 1))
        y = jnp.zeros((B, Lout, Cout), jnp.float32)
        for k in range(K):
            y = y + jnp.einsum('blc,co->blo', xp[:, k:k + Lout, :], wf[k])
        y = y + conv_bs[i]
        if i < 4:   # training-mode BatchNorm1d
            mean = jnp.mean(y, axis=(0, 1), keepdims=True)
            var = jnp.mean((y - mean) ** 2, axis=(0, 1), keepdims=True)
            y = (y - mean) * lax.rsqrt(var + BN_EPS) * gammas[i] + betas[i]
        x = jnp.where(y > 0, y, LEAK * y)
    flat = x.reshape(x.shape[0], -1)
    return flat @ lin_w + lin_b


# ----------------------------------- main ------------------------------------

if __name__ == "__main__":
    B, KOOP, L = 2, 8, 8                       # small deterministic shapes
    channels = [KOOP, 256, 128, 64, 32, 1]

    key = jax.random.PRNGKey(0)
    keys = jax.random.split(key, 16)

    conv_ws, conv_bs, gammas, betas = [], [], [], []
    ki = 0
    for i in range(5):
        cin, cout = channels[i], channels[i + 1]
        conv_ws.append(0.1 * jax.random.normal(keys[ki], (cin, cout, K),
                                               jnp.float32)); ki += 1
        conv_bs.append(0.1 * jax.random.normal(keys[ki], (cout,),
                                               jnp.float32)); ki += 1
        gammas.append(jnp.ones((cout,), jnp.float32))   # BN default init
        betas.append(jnp.zeros((cout,), jnp.float32))

    # LazyLinear(1): in_features = flattened conv5 output = L + 5*(K-1)
    Lf = L + 5 * (K - 1)
    lin_w = 0.1 * jax.random.normal(keys[ki], (Lf, 1), jnp.float32); ki += 1
    lin_b = 0.1 * jax.random.normal(keys[ki], (1,), jnp.float32); ki += 1

    x = jax.random.normal(keys[ki], (B, KOOP, L), jnp.float32)

    params = prepare_params(conv_ws, conv_bs, gammas, betas, lin_w, lin_b)
    out = regressor_forward(x, params)
    out = jax.block_until_ready(out)

    ref = regressor_reference(x, conv_ws, conv_bs, gammas, betas, lin_w, lin_b)
    assert out.shape == (B, 1), out.shape
    assert bool(jnp.allclose(out, ref, rtol=1e-3, atol=1e-3)), (out, ref)

    print("KERNEL_OK")
</pallas_src>

<mosaic_0001>
module attributes {stable_mosaic.version = 11 : i64} {
  func.func @_regressor_kernel(%arg0: memref<2x8x8xf32, #tpu.memory_space<vmem>>, %arg1: memref<32x256xf32, #tpu.memory_space<vmem>>, %arg2: memref<1024x128xf32, #tpu.memory_space<vmem>>, %arg3: memref<512x64xf32, #tpu.memory_space<vmem>>, %arg4: memref<256x32xf32, #tpu.memory_space<vmem>>, %arg5: memref<16x256xf32, #tpu.memory_space<vmem>>, %arg6: memref<2x1xf32, #tpu.memory_space<vmem>>) attributes {dimension_semantics = [], scalar_prefetch = 0 : i64, scratch_operands = 0 : i64, tpu.core_type = #tpu.core_type<tc>} {
    %c0 = arith.constant 0 : index
    %c0_0 = arith.constant 0 : index
    %c0_1 = arith.constant 0 : index
    %0 = vector.load %arg0[%c0, %c0_0, %c0_1] : memref<2x8x8xf32, #tpu.memory_space<vmem>>, vector<2x8x8xf32>
    %cst = arith.constant 0.000000e+00 : f32
    %1 = vector.broadcast %cst : f32 to vector<2x3x8xf32>
    %2 = tpu.concatenate %1, %0, %1 in 1 : vector<2x3x8xf32>, vector<2x8x8xf32>, vector<2x3x8xf32> -> vector<2x14x8xf32>
    %3 = vector.extract_strided_slice %2 {offsets = [0, 0, 0], sizes = [2, 11, 8], strides = [1, 1, 1]} : vector<2x14x8xf32> to vector<2x11x8xf32>
    %4 = vector.extract_strided_slice %2 {offsets = [0, 1, 0], sizes = [2, 11, 8], strides = [1, 1, 1]} : vector<2x14x8xf32> to vector<2x11x8xf32>
    %5 = vector.extract_strided_slice %2 {offsets = [0, 2, 0], sizes = [2, 11, 8], strides = [1, 1, 1]} : vector<2x14x8xf32> to vector<2x11x8xf32>
    %6 = vector.extract_strided_slice %2 {offsets = [0, 3, 0], sizes = [2, 11, 8], strides = [1, 1, 1]} : vector<2x14x8xf32> to vector<2x11x8xf32>
    %7 = tpu.concatenate %3, %4, %5, %6 in 2 : vector<2x11x8xf32>, vector<2x11x8xf32>, vector<2x11x8xf32>, vector<2x11x8xf32> -> vector<2x11x32xf32>
    %8 = vector.shape_cast %7 : vector<2x11x32xf32> to vector<22x32xf32>
    %c0_2 = arith.constant 0 : index
    %c0_3 = arith.constant 0 : index
    %9 = vector.load %arg1[%c0_2, %c0_3] : memref<32x256xf32, #tpu.memory_space<vmem>>, vector<32x256xf32>
    %cst_4 = arith.constant dense<0.000000e+00> : vector<22x256xf32>
    %10 = tpu.matmul %8, %9, %cst_4 {dimension_numbers = #tpu.dot_dimension_numbers<[1], [0], [0], [1], [0, 0, 1, 1], [], []>} : vector<22x32xf32>, vector<32x256xf32>, vector<22x256xf32> -> vector<22x256xf32>
    %c0_5 = arith.constant 0 : index
    %c0_6 = arith.constant 0 : index
    %11 = vector.load %arg5[%c0_5, %c0_6] : memref<16x256xf32, #tpu.memory_space<vmem>>, vector<1x256xf32>
    %12 = vector.broadcast %11 : vector<1x256xf32> to vector<22x256xf32>
    %13 = arith.addf %10, %12 : vector<22x256xf32>
    %cst_7 = arith.constant dense<0.000000e+00> : vector<256xf32>
    %14 = vector.multi_reduction <add>, %13, %cst_7 [0] : vector<22x256xf32> to vector<256xf32>
    %15 = vector.shape_cast %14 : vector<256xf32> to vector<1x256xf32>
    %cst_8 = arith.constant 0.0454545468 : f32
    %16 = vector.broadcast %cst_8 : f32 to vector<1x256xf32>
    %17 = arith.mulf %15, %16 : vector<1x256xf32>
    %18 = vector.broadcast %17 : vector<1x256xf32> to vector<22x256xf32>
    %19 = arith.subf %13, %18 : vector<22x256xf32>
    %20 = arith.mulf %19, %19 : vector<22x256xf32>
    %cst_9 = arith.constant dense<0.000000e+00> : vector<256xf32>
    %21 = vector.multi_reduction <add>, %20, %cst_9 [0] : vector<22x256xf32> to vector<256xf32>
    %22 = vector.shape_cast %21 : vector<256xf32> to vector<1x256xf32>
    %cst_10 = arith.constant 0.0454545468 : f32
    %23 = vector.broadcast %cst_10 : f32 to vector<1x256xf32>
    %24 = arith.mulf %22, %23 : vector<1x256xf32>
    %cst_11 = arith.constant 9.99999974E-6 : f32
    %25 = vector.broadcast %cst_11 : f32 to vector<1x256xf32>
    %26 = arith.addf %24, %25 : vector<1x256xf32>
    %27 = math.rsqrt %26 : vector<1x256xf32>
    %28 = vector.broadcast %27 : vector<1x256xf32> to vector<22x256xf32>
    %29 = arith.mulf %19, %28 : vector<22x256xf32>
    %c1 = arith.constant 1 : index
    %c0_12 = arith.constant 0 : index
    %30 = vector.load %arg5[%c1, %c0_12] : memref<16x256xf32, #tpu.memory_space<vmem>>, vector<1x256xf32>
    %31 = vector.broadcast %30 : vector<1x256xf32> to vector<22x256xf32>
    %32 = arith.mulf %29, %31 : vector<22x256xf32>
    %c2 = arith.constant 2 : index
    %c0_13 = arith.constant 0 : index
    %33 = vector.load %arg5[%c2, %c0_13] : memref<16x256xf32, #tpu.memory_space<vmem>>, vector<1x256xf32>
    %34 = vector.broadcast %33 : vector<1x256xf32> to vector<22x256xf32>
    %35 = arith.addf %32, %34 : vector<22x256xf32>
    %cst_14 = arith.constant 0.000000e+00 : f32
    %36 = vector.broadcast %cst_14 : f32 to vector<22x256xf32>
    %37 = arith.cmpf ogt, %35, %36 : vector<22x256xf32>
    %cst_15 = arith.constant 0.00999999977 : f32
    %38 = vector.broadcast %cst_15 : f32 to vector<22x256xf32>
    %39 = arith.mulf %38, %35 : vector<22x256xf32>
    %40 = arith.select %37, %35, %39 : vector<22x256xi1>, vector<22x256xf32>
    %41 = vector.shape_cast %40 : vector<22x256xf32> to vector<2x11x256xf32>
    %cst_16 = arith.constant 0.000000e+00 : f32
    %42 = vector.broadcast %cst_16 : f32 to vector<2x3x256xf32>
    %43 = tpu.concatenate %42, %41, %42 in 1 : vector<2x3x256xf32>, vector<2x11x256xf32>, vector<2x3x256xf32> -> vector<2x17x256xf32>
    %44 = vector.extract_strided_slice %43 {offsets = [0, 0, 0], sizes = [2, 14, 256], strides = [1, 1, 1]} : vector<2x17x256xf32> to vector<2x14x256xf32>
    %45 = vector.extract_strided_slice %43 {offsets = [0, 1, 0], sizes = [2, 14, 256], strides = [1, 1, 1]} : vector<2x17x256xf32> to vector<2x14x256xf32>
    %46 = vector.extract_strided_slice %43 {offsets = [0, 2, 0], sizes = [2, 14, 256], strides = [1, 1, 1]} : vector<2x17x256xf32> to vector<2x14x256xf32>
    %47 = vector.extract_strided_slice %43 {offsets = [0, 3, 0], sizes = [2, 14, 256], strides = [1, 1, 1]} : vector<2x17x256xf32> to vector<2x14x256xf32>
    %48 = tpu.concatenate %44, %45, %46, %47 in 2 : vector<2x14x256xf32>, vector<2x14x256xf32>, vector<2x14x256xf32>, vector<2x14x256xf32> -> vector<2x14x1024xf32>
    %49 = vector.shape_cast %48 : vector<2x14x1024xf32> to vector<28x1024xf32>
    %c0_17 = arith.constant 0 : index
    %c0_18 = arith.constant 0 : index
    %50 = vector.load %arg2[%c0_17, %c0_18] : memref<1024x128xf32, #tpu.memory_space<vmem>>, vector<1024x128xf32>
    %cst_19 = arith.constant dense<0.000000e+00> : vector<28x128xf32>
    %51 = tpu.matmul %49, %50, %cst_19 {dimension_numbers = #tpu.dot_dimension_numbers<[1], [0], [0], [1], [0, 0, 1, 1], [], []>} : vector<28x1024xf32>, vector<1024x128xf32>, vector<28x128xf32> -> vector<28x128xf32>
    %c3 = arith.constant 3 : index
    %c0_20 = arith.constant 0 : index
    %52 = vector.load %arg5[%c3, %c0_20] : memref<16x256xf32, #tpu.memory_space<vmem>>, vector<1x128xf32>
    %53 = vector.broadcast %52 : vector<1x128xf32> to vector<28x128xf32>
    %54 = arith.addf %51, %53 : vector<28x128xf32>
    %cst_21 = arith.constant dense<0.000000e+00> : vector<128xf32>
    %55 = vector.multi_reduction <add>, %54, %cst_21 [0] : vector<28x128xf32> to vector<128xf32>
    %56 = vector.shape_cast %55 : vector<128xf32> to vector<1x128xf32>
    %cst_22 = arith.constant 0.0357142873 : f32
    %57 = vector.broadcast %cst_22 : f32 to vector<1x128xf32>
    %58 = arith.mulf %56, %57 : vector<1x128xf32>
    %59 = vector.broadcast %58 : vector<1x128xf32> to vector<28x128xf32>
    %60 = arith.subf %54, %59 : vector<28x128xf32>
    %61 = arith.mulf %60, %60 : vector<28x128xf32>
    %cst_23 = arith.constant dense<0.000000e+00> : vector<128xf32>
    %62 = vector.multi_reduction <add>, %61, %cst_23 [0] : vector<28x128xf32> to vector<128xf32>
    %63 = vector.shape_cast %62 : vector<128xf32> to vector<1x128xf32>
    %cst_24 = arith.constant 0.0357142873 : f32
    %64 = vector.broadcast %cst_24 : f32 to vector<1x128xf32>
    %65 = arith.mulf %63, %64 : vector<1x128xf32>
    %cst_25 = arith.constant 9.99999974E-6 : f32
    %66 = vector.broadcast %cst_25 : f32 to vector<1x128xf32>
    %67 = arith.addf %65, %66 : vector<1x128xf32>
    %68 = math.rsqrt %67 : vector<1x128xf32>
    %69 = vector.broadcast %68 : vector<1x128xf32> to vector<28x128xf32>
    %70 = arith.mulf %60, %69 : vector<28x128xf32>
    %c4 = arith.constant 4 : index
    %c0_26 = arith.constant 0 : index
    %71 = vector.load %arg5[%c4, %c0_26] : memref<16x256xf32, #tpu.memory_space<vmem>>, vector<1x128xf32>
    %72 = vector.broadcast %71 : vector<1x128xf32> to vector<28x128xf32>
    %73 = arith.mulf %70, %72 : vector<28x128xf32>
    %c5 = arith.constant 5 : index
    %c0_27 = arith.constant 0 : index
    %74 = vector.load %arg5[%c5, %c0_27] : memref<16x256xf32, #tpu.memory_space<vmem>>, vector<1x128xf32>
    %75 = vector.broadcast %74 : vector<1x128xf32> to vector<28x128xf32>
    %76 = arith.addf %73, %75 : vector<28x128xf32>
    %cst_28 = arith.constant 0.000000e+00 : f32
    %77 = vector.broadcast %cst_28 : f32 to vector<28x128xf32>
    %78 = arith.cmpf ogt, %76, %77 : vector<28x128xf32>
    %cst_29 = arith.constant 0.00999999977 : f32
    %79 = vector.broadcast %cst_29 : f32 to vector<28x128xf32>
    %80 = arith.mulf %79, %76 : vector<28x128xf32>
    %81 = arith.select %78, %76, %80 : vector<28x128xi1>, vector<28x128xf32>
    %82 = vector.shape_cast %81 : vector<28x128xf32> to vector<2x14x128xf32>
    %cst_30 = arith.constant 0.000000e+00 : f32
    %83 = vector.broadcast %cst_30 : f32 to vector<2x3x128xf32>
    %84 = tpu.concatenate %83, %82, %83 in 1 : vector<2x3x128xf32>, vector<2x14x128xf32>, vector<2x3x128xf32> -> vector<2x20x128xf32>
    %85 = vector.extract_strided_slice %84 {offsets = [0, 0, 0], sizes = [2, 17, 128], strides = [1, 1, 1]} : vector<2x20x128xf32> to vector<2x17x128xf32>
    %86 = vector.extract_strided_slice %84 {offsets = [0, 1, 0], sizes = [2, 17, 128], strides = [1, 1, 1]} : vector<2x20x128xf32> to vector<2x17x128xf32>
    %87 = vector.extract_strided_slice %84 {offsets = [0, 2, 0], sizes = [2, 17, 128], strides = [1, 1, 1]} : vector<2x20x128xf32> to vector<2x17x128xf32>
    %88 = vector.extract_strided_slice %84 {offsets = [0, 3, 0], sizes = [2, 17, 128], strides = [1, 1, 1]} : vector<2x20x128xf32> to vector<2x17x128xf32>
    %89 = tpu.concatenate %85, %86, %87, %88 in 2 : vector<2x17x128xf32>, vector<2x17x128xf32>, vector<2x17x128xf32>, vector<2x17x128xf32> -> vector<2x17x512xf32>
    %90 = vector.shape_cast %89 : vector<2x17x512xf32> to vector<34x512xf32>
    %c0_31 = arith.constant 0 : index
    %c0_32 = arith.constant 0 : index
    %91 = vector.load %arg3[%c0_31, %c0_32] : memref<512x64xf32, #tpu.memory_space<vmem>>, vector<512x64xf32>
    %cst_33 = arith.constant dense<0.000000e+00> : vector<34x64xf32>
    %92 = tpu.matmul %90, %91, %cst_33 {dimension_numbers = #tpu.dot_dimension_numbers<[1], [0], [0], [1], [0, 0, 1, 1], [], []>} : vector<34x512xf32>, vector<512x64xf32>, vector<34x64xf32> -> vector<34x64xf32>
    %c6 = arith.constant 6 : index
    %c0_34 = arith.constant 0 : index
    %93 = vector.load %arg5[%c6, %c0_34] : memref<16x256xf32, #tpu.memory_space<vmem>>, vector<1x64xf32>
    %94 = vector.broadcast %93 : vector<1x64xf32> to vector<34x64xf32>
    %95 = arith.addf %92, %94 : vector<34x64xf32>
    %cst_35 = arith.constant dense<0.000000e+00> : vector<64xf32>
    %96 = vector.multi_reduction <add>, %95, %cst_35 [0] : vector<34x64xf32> to vector<64xf32>
    %97 = vector.shape_cast %96 : vector<64xf32> to vector<1x64xf32>
    %cst_36 = arith.constant 0.0294117648 : f32
    %98 = vector.broadcast %cst_36 : f32 to vector<1x64xf32>
    %99 = arith.mulf %97, %98 : vector<1x64xf32>
    %100 = vector.broadcast %99 : vector<1x64xf32> to vector<34x64xf32>
    %101 = arith.subf %95, %100 : vector<34x64xf32>
    %102 = arith.mulf %101, %101 : vector<34x64xf32>
    %cst_37 = arith.constant dense<0.000000e+00> : vector<64xf32>
    %103 = vector.multi_reduction <add>, %102, %cst_37 [0] : vector<34x64xf32> to vector<64xf32>
    %104 = vector.shape_cast %103 : vector<64xf32> to vector<1x64xf32>
    %cst_38 = arith.constant 0.0294117648 : f32
    %105 = vector.broadcast %cst_38 : f32 to vector<1x64xf32>
    %106 = arith.mulf %104, %105 : vector<1x64xf32>
    %cst_39 = arith.constant 9.99999974E-6 : f32
    %107 = vector.broadcast %cst_39 : f32 to vector<1x64xf32>
    %108 = arith.addf %106, %107 : vector<1x64xf32>
    %109 = math.rsqrt %108 : vector<1x64xf32>
    %110 = vector.broadcast %109 : vector<1x64xf32> to vector<34x64xf32>
    %111 = arith.mulf %101, %110 : vector<34x64xf32>
    %c7 = arith.constant 7 : index
    %c0_40 = arith.constant 0 : index
    %112 = vector.load %arg5[%c7, %c0_40] : memref<16x256xf32, #tpu.memory_space<vmem>>, vector<1x64xf32>
    %113 = vector.broadcast %112 : vector<1x64xf32> to vector<34x64xf32>
    %114 = arith.mulf %111, %113 : vector<34x64xf32>
    %c8 = arith.constant 8 : index
    %c0_41 = arith.constant 0 : index
    %115 = vector.load %arg5[%c8, %c0_41] : memref<16x256xf32, #tpu.memory_space<vmem>>, vector<1x64xf32>
    %116 = vector.broadcast %115 : vector<1x64xf32> to vector<34x64xf32>
    %117 = arith.addf %114, %116 : vector<34x64xf32>
    %cst_42 = arith.constant 0.000000e+00 : f32
    %118 = vector.broadcast %cst_42 : f32 to vector<34x64xf32>
    %119 = arith.cmpf ogt, %117, %118 : vector<34x64xf32>
    %cst_43 = arith.constant 0.00999999977 : f32
    %120 = vector.broadcast %cst_43 : f32 to vector<34x64xf32>
    %121 = arith.mulf %120, %117 : vector<34x64xf32>
    %122 = arith.select %119, %117, %121 : vector<34x64xi1>, vector<34x64xf32>
    %123 = vector.shape_cast %122 : vector<34x64xf32> to vector<2x17x64xf32>
    %cst_44 = arith.constant 0.000000e+00 : f32
    %124 = vector.broadcast %cst_44 : f32 to vector<2x3x64xf32>
    %125 = tpu.concatenate %124, %123, %124 in 1 : vector<2x3x64xf32>, vector<2x17x64xf32>, vector<2x3x64xf32> -> vector<2x23x64xf32>
    %126 = vector.extract_strided_slice %125 {offsets = [0, 0, 0], sizes = [2, 20, 64], strides = [1, 1, 1]} : vector<2x23x64xf32> to vector<2x20x64xf32>
    %127 = vector.extract_strided_slice %125 {offsets = [0, 1, 0], sizes = [2, 20, 64], strides = [1, 1, 1]} : vector<2x23x64xf32> to vector<2x20x64xf32>
    %128 = vector.extract_strided_slice %125 {offsets = [0, 2, 0], sizes = [2, 20, 64], strides = [1, 1, 1]} : vector<2x23x64xf32> to vector<2x20x64xf32>
    %129 = vector.extract_strided_slice %125 {offsets = [0, 3, 0], sizes = [2, 20, 64], strides = [1, 1, 1]} : vector<2x23x64xf32> to vector<2x20x64xf32>
    %130 = tpu.concatenate %126, %127, %128, %129 in 2 : vector<2x20x64xf32>, vector<2x20x64xf32>, vector<2x20x64xf32>, vector<2x20x64xf32> -> vector<2x20x256xf32>
    %131 = vector.shape_cast %130 : vector<2x20x256xf32> to vector<40x256xf32>
    %c0_45 = arith.constant 0 : index
    %c0_46 = arith.constant 0 : index
    %132 = vector.load %arg4[%c0_45, %c0_46] : memref<256x32xf32, #tpu.memory_space<vmem>>, vector<256x32xf32>
    %cst_47 = arith.constant dense<0.000000e+00> : vector<40x32xf32>
    %133 = tpu.matmul %131, %132, %cst_47 {dimension_numbers = #tpu.dot_dimension_numbers<[1], [0], [0], [1], [0, 0, 1, 1], [], []>} : vector<40x256xf32>, vector<256x32xf32>, vector<40x32xf32> -> vector<40x32xf32>
    %c9 = arith.constant 9 : index
    %c0_48 = arith.constant 0 : index
    %134 = vector.load %arg5[%c9, %c0_48] : memref<16x256xf32, #tpu.memory_space<vmem>>, vector<1x32xf32>
    %135 = vector.broadcast %134 : vector<1x32xf32> to vector<40x32xf32>
    %136 = arith.addf %133, %135 : vector<40x32xf32>
    %cst_49 = arith.constant dense<0.000000e+00> : vector<32xf32>
    %137 = vector.multi_reduction <add>, %136, %cst_49 [0] : vector<40x32xf32> to vector<32xf32>
    %138 = vector.shape_cast %137 : vector<32xf32> to vector<1x32xf32>
    %cst_50 = arith.constant 2.500000e-02 : f32
    %139 = vector.broadcast %cst_50 : f32 to vector<1x32xf32>
    %140 = arith.mulf %138, %139 : vector<1x32xf32>
    %141 = vector.broadcast %140 : vector<1x32xf32> to vector<40x32xf32>
    %142 = arith.subf %136, %141 : vector<40x32xf32>
    %143 = arith.mulf %142, %142 : vector<40x32xf32>
    %cst_51 = arith.constant dense<0.000000e+00> : vector<32xf32>
    %144 = vector.multi_reduction <add>, %143, %cst_51 [0] : vector<40x32xf32> to vector<32xf32>
    %145 = vector.shape_cast %144 : vector<32xf32> to vector<1x32xf32>
    %cst_52 = arith.constant 2.500000e-02 : f32
    %146 = vector.broadcast %cst_52 : f32 to vector<1x32xf32>
    %147 = arith.mulf %145, %146 : vector<1x32xf32>
    %cst_53 = arith.constant 9.99999974E-6 : f32
    %148 = vector.broadcast %cst_53 : f32 to vector<1x32xf32>
    %149 = arith.addf %147, %148 : vector<1x32xf32>
    %150 = math.rsqrt %149 : vector<1x32xf32>
    %151 = vector.broadcast %150 : vector<1x32xf32> to vector<40x32xf32>
    %152 = arith.mulf %142, %151 : vector<40x32xf32>
    %c10 = arith.constant 10 : index
    %c0_54 = arith.constant 0 : index
    %153 = vector.load %arg5[%c10, %c0_54] : memref<16x256xf32, #tpu.memory_space<vmem>>, vector<1x32xf32>
    %154 = vector.broadcast %153 : vector<1x32xf32> to vector<40x32xf32>
    %155 = arith.mulf %152, %154 : vector<40x32xf32>
    %c11 = arith.constant 11 : index
    %c0_55 = arith.constant 0 : index
    %156 = vector.load %arg5[%c11, %c0_55] : memref<16x256xf32, #tpu.memory_space<vmem>>, vector<1x32xf32>
    %157 = vector.broadcast %156 : vector<1x32xf32> to vector<40x32xf32>
    %158 = arith.addf %155, %157 : vector<40x32xf32>
    %cst_56 = arith.constant 0.000000e+00 : f32
    %159 = vector.broadcast %cst_56 : f32 to vector<40x32xf32>
    %160 = arith.cmpf ogt, %158, %159 : vector<40x32xf32>
    %cst_57 = arith.constant 0.00999999977 : f32
    %161 = vector.broadcast %cst_57 : f32 to vector<40x32xf32>
    %162 = arith.mulf %161, %158 : vector<40x32xf32>
    %163 = arith.select %160, %158, %162 : vector<40x32xi1>, vector<40x32xf32>
    %164 = vector.shape_cast %163 : vector<40x32xf32> to vector<2x20x32xf32>
    %cst_58 = arith.constant 0.000000e+00 : f32
    %165 = vector.broadcast %cst_58 : f32 to vector<2x3x32xf32>
    %166 = tpu.concatenate %165, %164, %165 in 1 : vector<2x3x32xf32>, vector<2x20x32xf32>, vector<2x3x32xf32> -> vector<2x26x32xf32>
    %167 = vector.extract_strided_slice %166 {offsets = [0, 0, 0], sizes = [2, 23, 32], strides = [1, 1, 1]} : vector<2x26x32xf32> to vector<2x23x32xf32>
    %168 = vector.extract_strided_slice %166 {offsets = [0, 1, 0], sizes = [2, 23, 32], strides = [1, 1, 1]} : vector<2x26x32xf32> to vector<2x23x32xf32>
    %169 = vector.extract_strided_slice %166 {offsets = [0, 2, 0], sizes = [2, 23, 32], strides = [1, 1, 1]} : vector<2x26x32xf32> to vector<2x23x32xf32>
    %170 = vector.extract_strided_slice %166 {offsets = [0, 3, 0], sizes = [2, 23, 32], strides = [1, 1, 1]} : vector<2x26x32xf32> to vector<2x23x32xf32>
    %171 = tpu.concatenate %167, %168, %169, %170 in 2 : vector<2x23x32xf32>, vector<2x23x32xf32>, vector<2x23x32xf32>, vector<2x23x32xf32> -> vector<2x23x128xf32>
    %c15 = arith.constant 15 : index
    %c0_59 = arith.constant 0 : index
    %172 = vector.load %arg5[%c15, %c0_59] : memref<16x256xf32, #tpu.memory_space<vmem>>, vector<1x128xf32>
    %173 = vector.shape_cast %172 : vector<1x128xf32> to vector<1x1x128xf32>
    %174 = vector.broadcast %173 : vector<1x1x128xf32> to vector<2x23x128xf32>
    %175 = arith.mulf %171, %174 : vector<2x23x128xf32>
    %cst_60 = arith.constant dense<0.000000e+00> : vector<2x23xf32>
    %176 = vector.multi_reduction <add>, %175, %cst_60 [2] : vector<2x23x128xf32> to vector<2x23xf32>
    %c12 = arith.constant 12 : index
    %c0_61 = arith.constant 0 : index
    %177 = vector.load %arg5[%c12, %c0_61] : memref<16x256xf32, #tpu.memory_space<vmem>>, vector<1x1xf32>
    %178 = vector.broadcast %177 : vector<1x1xf32> to vector<2x23xf32>
    %179 = arith.addf %176, %178 : vector<2x23xf32>
    %cst_62 = arith.constant 0.000000e+00 : f32
    %180 = vector.broadcast %cst_62 : f32 to vector<2x23xf32>
    %181 = arith.cmpf ogt, %179, %180 : vector<2x23xf32>
    %cst_63 = arith.constant 0.00999999977 : f32
    %182 = vector.broadcast %cst_63 : f32 to vector<2x23xf32>
    %183 = arith.mulf %182, %179 : vector<2x23xf32>
    %184 = arith.select %181, %179, %183 : vector<2x23xi1>, vector<2x23xf32>
    %c13 = arith.constant 13 : index
    %c0_64 = arith.constant 0 : index
    %185 = vector.load %arg5[%c13, %c0_64] : memref<16x256xf32, #tpu.memory_space<vmem>>, vector<1x23xf32>
    %186 = vector.broadcast %185 : vector<1x23xf32> to vector<2x23xf32>
    %187 = arith.mulf %184, %186 : vector<2x23xf32>
    %cst_65 = arith.constant dense<0.000000e+00> : vector<2xf32>
    %188 = vector.multi_reduction <add>, %187, %cst_65 [1] : vector<2x23xf32> to vector<2xf32>
    %189 = vector.shape_cast %188 : vector<2xf32> to vector<2x1xf32>
    %c14 = arith.constant 14 : index
    %c0_66 = arith.constant 0 : index
    %190 = vector.load %arg5[%c14, %c0_66] : memref<16x256xf32, #tpu.memory_space<vmem>>, vector<1x1xf32>
    %191 = vector.broadcast %190 : vector<1x1xf32> to vector<2x1xf32>
    %192 = arith.addf %189, %191 : vector<2x1xf32>
    %c0_67 = arith.constant 0 : index
    %c0_68 = arith.constant 0 : index
    %193 = vector.load %arg6[%c0_67, %c0_68] : memref<2x1xf32, #tpu.memory_space<vmem>>, vector<2x1xf32>
    tpu.vector_store %arg6[%c0_67, %c0_68], %192 {strides = array<i32>} : memref<2x1xf32, #tpu.memory_space<vmem>>, vector<2x1xf32>,
    return
  }
}

</mosaic_0001>

<llo_original>
// kernel: regressor_forward.1
$region0: #{regressor_forward.1}
  #allocation0 [shape = 'u32[]', space=smem, size = 0x4, offset = 0x4, fixed_abs, tag = 'smem constant byte address 0x4 - core index']
  #allocation1 [shape = 'u32[144,128]{1,0:T(1,128)}', space=vmem, size = 0x12000, scoped, tag = 'internal scratch']
  %s0 = inlined_call_operand.vmem [shape: f32[2,8,8], index: 0, kind: input, shape index: {}]
  %s1 = inlined_call_operand.vmem [shape: f32[32,256], index: 1, kind: input, shape index: {}]
  %s2 = inlined_call_operand.vmem [shape: f32[1024,128], index: 2, kind: input, shape index: {}]
  %s3 = inlined_call_operand.vmem [shape: f32[512,64], index: 3, kind: input, shape index: {}]
  %s4 = inlined_call_operand.vmem [shape: f32[256,32], index: 4, kind: input, shape index: {}]
  %s5 = inlined_call_operand.vmem [shape: f32[16,256], index: 5, kind: input, shape index: {}]
  %s6 = inlined_call_operand.vmem [shape: f32[2,1], index: 6, kind: output, shape index: {}]
  %s7 = sld [smem:[#allocation0]]
  $region34: #{regressor_forward.1} parent=0
    _
  %s9 = ssub.s32 1, %s7
  %s10 = scalar_select 0, %s9, %s7
  // Predicated region
  $region2: #{regressor_forward.1} parent=0 // pred_check
    _
  $region3: #{regressor_forward.1} parent=0 // pred_check_branch
    %12 = sbr.rel (0) target = $region5
  $region4: #{regressor_forward.1} parent=0 // pred_region
    _
  $region5: #{regressor_forward.1} parent=0 // pred_fallthru
    _
  // Predicated region
  $region6: #{regressor_forward.1} parent=0 // pred_check
    _
  $region7: #{regressor_forward.1} parent=0 // pred_check_branch
    %14 = sbr.rel (0) target = $region9
  $region8: #{regressor_forward.1} parent=0 // pred_region
    _
  $region9: #{regressor_forward.1} parent=0 // pred_fallthru
    _
  // Predicated region
  $region10: #{regressor_forward.1} parent=0 // pred_check
    _
  $region11: #{regressor_forward.1} parent=0 // pred_check_branch
    %16 = sbr.rel (0) target = $region13
  $region12: #{regressor_forward.1} parent=0 // pred_region
    _
  $region13: #{regressor_forward.1} parent=0 // pred_fallthru
    _
  // Predicated region
  $region14: #{regressor_forward.1} parent=0 // pred_check
    _
  $region15: #{regressor_forward.1} parent=0 // pred_check_branch
    %18 = sbr.rel (0) target = $region17
  $region16: #{regressor_forward.1} parent=0 // pred_region
    _
  $region17: #{regressor_forward.1} parent=0 // pred_fallthru
    _
  // Predicated region
  $region18: #{regressor_forward.1} parent=0 // pred_check
    _
  $region19: #{regressor_forward.1} parent=0 // pred_check_branch
    %20 = sbr.rel (0) target = $region21
  $region20: #{regressor_forward.1} parent=0 // pred_region
    _
  $region21: #{regressor_forward.1} parent=0 // pred_fallthru
    _
  // Predicated region
  $region22: #{regressor_forward.1} parent=0 // pred_check
    _
  $region23: #{regressor_forward.1} parent=0 // pred_check_branch
    %22 = sbr.rel (0) target = $region25
  $region24: #{regressor_forward.1} parent=0 // pred_region
    _
  $region25: #{regressor_forward.1} parent=0 // pred_fallthru
    _
  %v23 = vld [vmem:[%s0] sm:$0xff]
  %v24 = vld [vmem:[%s0 + $0x8] sm:$0xff]
  %v27 = vrot.slane %v23, 5
  %v28 = vrot.slane %v24, 5
  %vm31 = vcmask 1042432
  %v32 = vsel %vm31, 0.0, %v27
  %v33 = vsel %vm31, 0.0, %v28
  %v34 = vsel %vm31, %v27, 0.0
  %v35 = vsel %vm31, %v28, 0.0
  %vm40 = vcmask 1046528
  %v41 = vrot.slane %v32, 1
  %v42 = vrot.slane %v34, 1
  %v43 = vsel %vm40, %v41, %v42
  %v44 = vrot.slane %v33, 1
  %v45 = vrot.slane %v35, 1
  %v46 = vsel %vm40, %v44, %v45
  %47 = vrot.lane.b32.xlu0 %v43, 8
  %v48 = vpop.permute.xlu0 %47
  %49 = vrot.lane.b32.xlu0 %v42, 8
  %v50 = vpop.permute.xlu0 %49
  %51 = vrot.lane.b32.xlu0 %v46, 8
  %v52 = vpop.permute.xlu0 %51
  %53 = vrot.lane.b32.xlu0 %v45, 8
  %v54 = vpop.permute.xlu0 %53
  %vm59 = vcmask 1045504
  %v60 = vrot.slane %v32, 2
  %v61 = vrot.slane %v34, 2
  %v62 = vsel %vm59, %v60, %v61
  %v63 = vrot.slane %v33, 2
  %v64 = vrot.slane %v35, 2
  %v65 = vsel %vm59, %v63, %v64
  %66 = vrot.lane.b32.xlu0 %v62, 16
  %v67 = vpop.permute.xlu0 %66
  %68 = vrot.lane.b32.xlu0 %v61, 16
  %v69 = vpop.permute.xlu0 %68
  %70 = vrot.lane.b32.xlu0 %v65, 16
  %v71 = vpop.permute.xlu0 %70
  %72 = vrot.lane.b32.xlu0 %v64, 16
  %v73 = vpop.permute.xlu0 %72
  %vm78 = vcmask 1044480
  %v79 = vrot.slane %v32, 3
  %v80 = vrot.slane %v34, 3
  %v81 = vsel %vm78, %v79, %v80
  %v82 = vrot.slane %v33, 3
  %v83 = vrot.slane %v35, 3
  %v84 = vsel %vm78, %v82, %v83
  %85 = vrot.lane.b32.xlu0 %v81, 24
  %v86 = vpop.permute.xlu0 %85
  %87 = vrot.lane.b32.xlu0 %v80, 24
  %v88 = vpop.permute.xlu0 %87
  %89 = vrot.lane.b32.xlu0 %v84, 24
  %v90 = vpop.permute.xlu0 %89
  %91 = vrot.lane.b32.xlu0 %v83, 24
  %v92 = vpop.permute.xlu0 %91
  %vm97 = vcmask 64512
  %v98 = vsel %vm97, %v32, %v48
  %v99 = vsel %vm97, %v34, %v50
  %v100 = vsel %vm97, %v33, %v52
  %v101 = vsel %vm97, %v35, %v54
  %vm102 = vcmask 130048
  %v103 = vsel %vm102, %v98, %v67
  %v104 = vsel %vm102, %v99, %v69
  %v105 = vsel %vm102, %v100, %v71
  %v106 = vsel %vm102, %v101, %v73
  %vm107 = vcmask 195584
  %v108 = vsel %vm107, %v103, %v86
  %v109 = vsel %vm107, %v104, %v88
  %v110 = vsel %vm107, %v105, %v90
  %v111 = vsel %vm107, %v106, %v92
  %v116 = vcombine.high %v108, %v108
  %v118 = vunpack.c.l.s4 1966171168
  %v119 = vunpack.c.0.s8 %v118
  %v120 = vlaneseq
  %v121 = vshrl.u32 %v120, 7
  %v122 = vsub.s32 %v119, %v121
  %v123 = vrot.slane %v108, %v122
  %v125 = vunpack.c.l.s4 1966171168
  %v126 = vunpack.c.0.s8 %v125
  %v127 = vlaneseq
  %v128 = vshrl.u32 %v127, 7
  %v129 = vsub.s32 %v126, %v128
  %v130 = vrot.slane %v116, %v129
  %v131 = vcombine.high %v123, %v123
  %v132 = vcombine.high %v130, %v130
  %v134 = vunpack.c.l.s4 1966171168
  %v135 = vunpack.c.0.s8 %v134
  %v136 = vlaneseq
  %v137 = vshrl.u32 %v136, 7
  %v138 = vsub.s32 %v135, %v137
  %v139 = vrot.slane %v123, %v138
  %v141 = vunpack.c.l.s4 1966171168
  %v142 = vunpack.c.0.s8 %v141
  %v143 = vlaneseq
  %v144 = vshrl.u32 %v143, 7
  %v145 = vsub.s32 %v142, %v144
  %v146 = vrot.slane %v130, %v145
  %v148 = vunpack.c.l.s4 1966171168
  %v149 = vunpack.c.0.s8 %v148
  %v150 = vlaneseq
  %v151 = vshrl.u32 %v150, 7
  %v152 = vsub.s32 %v149, %v151
  %v153 = vrot.slane %v131, %v152
  %v155 = vunpack.c.l.s4 1966171168
  %v156 = vunpack.c.0.s8 %v155
  %v157 = vlaneseq
  %v158 = vshrl.u32 %v157, 7
  %v159 = vsub.s32 %v156, %v158
  %v160 = vrot.slane %v132, %v159
  %v161 = vcombine.high %v139, %v139
  %v162 = vcombine.high %v146, %v146
  %v163 = vcombine.high %v153, %v153
  %v164 = vcombine.high %v160, %v160
  %v166 = vunpack.c.l.s4 1966171168
  %v167 = vunpack.c.0.s8 %v166
  %v168 = vlaneseq
  %v169 = vshrl.u32 %v168, 7
  %v170 = vsub.s32 %v167, %v169
  %v171 = vrot.slane %v109, %v170
  %v172 = vcombine.high %v171, %v171
  %v174 = vunpack.c.l.s4 1966171168
  %v175 = vunpack.c.0.s8 %v174
  %v176 = vlaneseq
  %v177 = vshrl.u32 %v176, 7
  %v178 = vsub.s32 %v175, %v177
  %v179 = vrot.slane %v171, %v178
  %v181 = vunpack.c.l.s4 1966171168
  %v182 = vunpack.c.0.s8 %v181
  %v183 = vlaneseq
  %v184 = vshrl.u32 %v183, 7
  %v185 = vsub.s32 %v182, %v184
  %v186 = vrot.slane %v172, %v185
  %v187 = vcombine.high %v179, %v179
  %v188 = vcombine.high %v110, %v110
  %v190 = vunpack.c.l.s4 1966171168
  %v191 = vunpack.c.0.s8 %v190
  %v192 = vlaneseq
  %v193 = vshrl.u32 %v192, 7
  %v194 = vsub.s32 %v191, %v193
  %v195 = vrot.slane %v110, %v194
  %v197 = vunpack.c.l.s4 1966171168
  %v198 = vunpack.c.0.s8 %v197
  %v199 = vlaneseq
  %v200 = vshrl.u32 %v199, 7
  %v201 = vsub.s32 %v198, %v200
  %v202 = vrot.slane %v188, %v201
  %v203 = vcombine.high %v195, %v195
  %v204 = vcombine.high %v202, %v202
  %v206 = vunpack.c.l.s4 1966171168
  %v207 = vunpack.c.0.s8 %v206
  %v208 = vlaneseq
  %v209 = vshrl.u32 %v208, 7
  %v210 = vsub.s32 %v207, %v209
  %v211 = vrot.slane %v195, %v210
  %v213 = vunpack.c.l.s4 1966171168
  %v214 = vunpack.c.0.s8 %v213
  %v215 = vlaneseq
  %v216 = vshrl.u32 %v215, 7
  %v217 = vsub.s32 %v214, %v216
  %v218 = vrot.slane %v202, %v217
  %v220 = vunpack.c.l.s4 1966171168
  %v221 = vunpack.c.0.s8 %v220
  %v222 = vlaneseq
  %v223 = vshrl.u32 %v222, 7
  %v224 = vsub.s32 %v221, %v223
  %v225 = vrot.slane %v203, %v224
  %v227 = vunpack.c.l.s4 1966171168
  %v228 = vunpack.c.0.s8 %v227
  %v229 = vlaneseq
  %v230 = vshrl.u32 %v229, 7
  %v231 = vsub.s32 %v228, %v230
  %v232 = vrot.slane %v204, %v231
  %v233 = vcombine.high %v211, %v211
  %v234 = vcombine.high %v218, %v218
  %v235 = vcombine.high %v225, %v225
  %v236 = vcombine.high %v232, %v232
  %v238 = vunpack.c.l.s4 1966171168
  %v239 = vunpack.c.0.s8 %v238
  %v240 = vlaneseq
  %v241 = vshrl.u32 %v240, 7
  %v242 = vsub.s32 %v239, %v241
  %v243 = vrot.slane %v111, %v242
  %v244 = vcombine.high %v243, %v243
  %v246 = vunpack.c.l.s4 1966171168
  %v247 = vunpack.c.0.s8 %v246
  %v248 = vlaneseq
  %v249 = vshrl.u32 %v248, 7
  %v250 = vsub.s32 %v247, %v249
  %v251 = vrot.slane %v243, %v250
  %v253 = vunpack.c.l.s4 1966171168
  %v254 = vunpack.c.0.s8 %v253
  %v255 = vlaneseq
  %v256 = vshrl.u32 %v255, 7
  %v257 = vsub.s32 %v254, %v256
  %v258 = vrot.slane %v244, %v257
  %v259 = vcombine.high %v251, %v251
  %v260 = vld [vmem:[%s1] sm:$0xff]
  %v261 = vld [vmem:[%s1 + $0x8] sm:$0xff]
  %v262 = vld [vmem:[%s1 + $0x10] sm:$0xff]
  %v263 = vld [vmem:[%s1 + $0x18] sm:$0xff]
  %v264 = vld [vmem:[%s1 + $0x20] sm:$0xff]
  %v265 = vld [vmem:[%s1 + $0x28] sm:$0xff]
  %v266 = vld [vmem:[%s1 + $0x30] sm:$0xff]
  %v267 = vld [vmem:[%s1 + $0x38] sm:$0xff]
  %v268 = vld [vmem:[%s5] ss:$8 sm:$0x3]
  %v270 = vlaneseq
  %v271 = vshrl.u32 %v270, 7
  %v272 = vsub.s32 0, %v271
  %v273 = vrot.slane %v268, %v272
  %v274 = vlaneseq
  %v275 = vshrl.u32 %v274, 7
  %v276 = vsub.s32 1, %v275
  %v277 = vrot.slane %v268, %v276
  %v280 = vcombine.low %v139, %v153
  %v281 = vcombine.low %v161, %v163
  %v282 = vcombine.low %v146, %v160
  %v283 = vcombine.low %v162, %v164
  %v285 = vunpack.c.l.s4 1966171168
  %v286 = vunpack.c.0.s8 %v285
  %v287 = vlaneseq
  %v288 = vshrl.u32 %v287, 7
  %v289 = vsub.s32 %v286, %v288
  %v290 = vrot.slane %v280, %v289
  %v292 = vunpack.c.l.s4 1966171168
  %v293 = vunpack.c.0.s8 %v292
  %v294 = vlaneseq
  %v295 = vshrl.u32 %v294, 7
  %v296 = vsub.s32 %v293, %v295
  %v297 = vrot.slane %v281, %v296
  %v299 = vunpack.c.l.s4 1966171168
  %v300 = vunpack.c.0.s8 %v299
  %v301 = vlaneseq
  %v302 = vshrl.u32 %v301, 7
  %v303 = vsub.s32 %v300, %v302
  %v304 = vrot.slane %v282, %v303
  %v306 = vunpack.c.l.s4 1966171168
  %v307 = vunpack.c.0.s8 %v306
  %v308 = vlaneseq
  %v309 = vshrl.u32 %v308, 7
  %v310 = vsub.s32 %v307, %v309
  %v311 = vrot.slane %v283, %v310
  %v312 = vcombine.low %v290, %v297
  %v313 = vcombine.low %v304, %v311
  %v315 = vunpack.c.l.s4 1966171168
  %v316 = vunpack.c.0.s8 %v315
  %v317 = vlaneseq
  %v318 = vshrl.u32 %v317, 7
  %v319 = vsub.s32 %v316, %v318
  %v320 = vrot.slane %v312, %v319
  %v322 = vunpack.c.l.s4 1966171168
  %v323 = vunpack.c.0.s8 %v322
  %v324 = vlaneseq
  %v325 = vshrl.u32 %v324, 7
  %v326 = vsub.s32 %v323, %v325
  %v327 = vrot.slane %v313, %v326
  %v328 = vcombine.low %v320, %v327
  %v329 = vcombine.low %v179, %v186
  %v330 = vcombine.low %v187, %v211
  %v331 = vcombine.low %v225, %v233
  %v332 = vcombine.low %v235, %v218
  %v334 = vunpack.c.l.s4 1966171168
  %v335 = vunpack.c.0.s8 %v334
  %v336 = vlaneseq
  %v337 = vshrl.u32 %v336, 7
  %v338 = vsub.s32 %v335, %v337
  %v339 = vrot.slane %v329, %v338
  %v341 = vunpack.c.l.s4 1966171168
  %v342 = vunpack.c.0.s8 %v341
  %v343 = vlaneseq
  %v344 = vshrl.u32 %v343, 7
  %v345 = vsub.s32 %v342, %v344
  %v346 = vrot.slane %v330, %v345
  %v348 = vunpack.c.l.s4 1966171168
  %v349 = vunpack.c.0.s8 %v348
  %v350 = vlaneseq
  %v351 = vshrl.u32 %v350, 7
  %v352 = vsub.s32 %v349, %v351
  %v353 = vrot.slane %v331, %v352
  %v355 = vunpack.c.l.s4 1966171168
  %v356 = vunpack.c.0.s8 %v355
  %v357 = vlaneseq
  %v358 = vshrl.u32 %v357, 7
  %v359 = vsub.s32 %v356, %v358
  %v360 = vrot.slane %v332, %v359
  %v361 = vcombine.low %v339, %v346
  %v362 = vcombine.low %v353, %v360
  %v364 = vunpack.c.l.s4 1966171168
  %v365 = vunpack.c.0.s8 %v364
  %v366 = vlaneseq
  %v367 = vshrl.u32 %v366, 7
  %v368 = vsub.s32 %v365, %v367
  %v369 = vrot.slane %v361, %v368
  %v371 = vunpack.c.l.s4 1966171168
  %v372 = vunpack.c.0.s8 %v371
  %v373 = vlaneseq
  %v374 = vshrl.u32 %v373, 7
  %v375 = vsub.s32 %v372, %v374
  %v376 = vrot.slane %v362, %v375
  %v377 = vcombine.low %v369, %v376
  %v378 = vcombine.low %v232, %v234
  %v379 = vcombine.low %v236, %v251
  %v380 = vcombine.low %v258, %v259
  %v382 = vunpack.c.l.s4 1966171168
  %v383 = vunpack.c.0.s8 %v382
  %v384 = vlaneseq
  %v385 = vshrl.u32 %v384, 7
  %v386 = vsub.s32 %v383, %v385
  %v387 = vrot.slane %v378, %v386
  %v389 = vunpack.c.l.s4 1966171168
  %v390 = vunpack.c.0.s8 %v389
  %v391 = vlaneseq
  %v392 = vshrl.u32 %v391, 7
  %v393 = vsub.s32 %v390, %v392
  %v394 = vrot.slane %v379, %v393
  %v396 = vunpack.c.l.s4 1966171168
  %v397 = vunpack.c.0.s8 %v396
  %v398 = vlaneseq
  %v399 = vshrl.u32 %v398, 7
  %v400 = vsub.s32 %v397, %v399
  %v401 = vrot.slane %v380, %v400
  %v402 = vcombine.low %v387, %v394
  %v404 = vunpack.c.l.s4 1966171168
  %v405 = vunpack.c.0.s8 %v404
  %v406 = vlaneseq
  %v407 = vshrl.u32 %v406, 7
  %v408 = vsub.s32 %v405, %v407
  %v409 = vrot.slane %v402, %v408
  %v411 = vunpack.c.l.s4 1966171168
  %v412 = vunpack.c.0.s8 %v411
  %v413 = vlaneseq
  %v414 = vshrl.u32 %v413, 7
  %v415 = vsub.s32 %v412, %v414
  %v416 = vrot.slane %v401, %v415
  %v417 = vcombine.low %v409, %v416
  %vm418 = vcmask 261120
  %v419 = vsel %vm418, %v328, 0
  %v421 = vsel %vm418, %v377, 0
  %v423 = vsel %vm418, %v417, 0
  %425 = vmatprep.subr.mxu0 0.0
  %426 = vmatpush1.msra.mxu0 0.0
  %427 = vmatprep.subr.mxu0 0.0
  %428 = vmatpush1.msra.mxu0 0.0
  %429 = vmatprep.subr.mxu0 0.0
  %430 = vmatpush1.msra.mxu0 0.0
  %431 = vmatprep.subr.mxu0 0.0
  %432 = vmatpush1.msra.mxu0 0.0
  %433 = vmatprep.subr.mxu0 0.0
  %434 = vmatpush1.msra.mxu0 0.0
  %435 = vmatprep.subr.mxu0 0.0
  %436 = vmatpush1.msra.mxu0 0.0
  %437 = vmatprep.subr.mxu0 0.0
  %438 = vmatpush1.msra.mxu0 0.0
  %439 = vmatprep.subr.mxu0 0.0
  %440 = vmatpush1.msra.mxu0 0.0
  %441 = vmatprep.subr.mxu0 0.0
  %442 = vmatpush1.msra.mxu0 0.0
  %443 = vmatprep.subr.mxu0 0.0
  %444 = vmatpush1.msra.mxu0 0.0
  %445 = vmatprep.subr.mxu0 0.0
  %446 = vmatpush1.msra.mxu0 0.0
  %447 = vmatprep.subr.mxu0 0.0
  %448 = vmatpush1.msra.mxu0 0.0
  %449 = vmatprep.subr.mxu0 %v267
  %450 = vmatpush1.msra.mxu0 %v266
  %451 = vmatprep.subr.mxu0 %v265
  %452 = vmatpush1.msra.mxu0 %v264
  %453 = vmatprep.subr.mxu0 %v263
  %454 = vmatpush1.msra.mxu0 %v262
  %455 = vmatprep.subr.mxu0 %v261
  %456 = vmatpush1.msra.mxu0 %v260
  %457 = vmatprep.subr.mxu0 0.0
  %458 = vmatpush2.msra.mxu0 0.0
  %459 = vmatprep.subr.mxu0 0.0
  %460 = vmatpush2.msra.mxu0 0.0
  %461 = vmatprep.subr.mxu0 0.0
  %462 = vmatpush2.msra.mxu0 0.0
  %463 = vmatprep.subr.mxu0 0.0
  %464 = vmatpush2.msra.mxu0 0.0
  %465 = vmatprep.subr.mxu0 0.0
  %466 = vmatpush2.msra.mxu0 0.0
  %467 = vmatprep.subr.mxu0 0.0
  %468 = vmatpush2.msra.mxu0 0.0
  %469 = vmatprep.subr.mxu0 0.0
  %470 = vmatpush2.msra.mxu0 0.0
  %471 = vmatprep.subr.mxu0 0.0
  %472 = vmatpush2.msra.mxu0 0.0
  %473 = vmatprep.subr.mxu0 0.0
  %474 = vmatpush2.msra.mxu0 0.0
  %475 = vmatprep.subr.mxu0 0.0
  %476 = vmatpush2.msra.mxu0 0.0
  %477 = vmatprep.subr.mxu0 0.0
  %478 = vmatpush2.msra.mxu0 0.0
  %479 = vmatprep.subr.mxu0 0.0
  %480 = vmatpush2.msra.mxu0 0.0
  %481 = vmatprep.subr.mxu0 0.0
  %482 = vmatpush2.msra.mxu0 0.0
  %483 = vmatprep.subr.mxu0 0.0
  %484 = vmatpush2.msra.mxu0 0.0
  %485 = vmatprep.subr.mxu0 0.0
  %486 = vmatpush2.msra.mxu0 0.0
  %487 = vmatprep.subr.mxu0 0.0
  %488 = vmatpush2.msra.mxu0 0.0
  %489 = vmatprep.mubr.f32.mxu0 0.0
  %490 = vmatmul.mubr.f32.gmra.mxu0 %v419
  %v491 = vpop.f32.mrf.mxu0
  %v492 = vadd.f32 %v273, %v491
  %v493 = vpop.f32.mrf.mxu0
  %v494 = vadd.f32 %v277, %v493
  %495 = vmatprep.mubr.f32.mxu0 0.0
  %496 = vmatmul.mubr.f32.gmra.mxu0 %v421
  %v497 = vpop.f32.mrf.mxu0
  %v498 = vadd.f32 %v273, %v497
  %v499 = vpop.f32.mrf.mxu0
  %v500 = vadd.f32 %v277, %v499
  %501 = vmatprep.mubr.f32.mxu0 0.0
  %502 = vmatmul.mubr.f32.gmra.mxu0 %v423
  %v503 = vpop.f32.mrf.mxu0
  %v504 = vadd.f32 %v273, %v503
  %v505 = vpop.f32.mrf.mxu0
  %v506 = vadd.f32 %v277, %v505
  %507 = vdwg.mxu0
  %v508 = vadd.f32 %v492, %v498
  %v509 = vsel %vm59, %v504, 0.0
  %v510 = vadd.f32 %v508, %v509
  %v511 = vrot.slane %v510, 4
  %v512 = vadd.f32 %v510, %v511
  %v513 = vrot.slane %v512, 2
  %v514 = vadd.f32 %v512, %v513
  %v515 = vrot.slane %v514, 1
  %v516 = vadd.f32 %v514, %v515
  %v517 = vadd.f32 %v494, %v500
  %v518 = vsel %vm59, %v506, 0.0
  %v519 = vadd.f32 %v517, %v518
  %v520 = vrot.slane %v519, 4
  %v521 = vadd.f32 %v519, %v520
  %v522 = vrot.slane %v521, 2
  %v523 = vadd.f32 %v521, %v522
  %v524 = vrot.slane %v523, 1
  %v525 = vadd.f32 %v523, %v524
  %v526 = vmul.f32 %v516, 0.045454547
  %v527 = vmul.f32 %v525, 0.045454547
  %v528 = vsub.f32 %v492, %v526
  %v529 = vsub.f32 %v494, %v527
  %v530 = vsub.f32 %v498, %v526
  %v531 = vsub.f32 %v500, %v527
  %v532 = vsub.f32 %v504, %v526
  %v533 = vsub.f32 %v506, %v527
  %v534 = vmul.f32 %v528, %v528
  %v535 = vmul.f32 %v529, %v529
  %v536 = vmul.f32 %v530, %v530
  %v537 = vmul.f32 %v531, %v531
  %v538 = vmul.f32 %v532, %v532
  %v539 = vmul.f32 %v533, %v533
  %v540 = vadd.f32 %v534, %v536
  %v541 = vsel %vm59, %v538, 0.0
  %v542 = vadd.f32 %v540, %v541
  %v543 = vrot.slane %v542, 4
  %v544 = vadd.f32 %v542, %v543
  %v545 = vrot.slane %v544, 2
  %v546 = vadd.f32 %v544, %v545
  %v547 = vrot.slane %v546, 1
  %v548 = vadd.f32 %v546, %v547
  %v549 = vadd.f32 %v535, %v537
  %v550 = vsel %vm59, %v539, 0.0
  %v551 = vadd.f32 %v549, %v550
  %v552 = vrot.slane %v551, 4
  %v553 = vadd.f32 %v551, %v552
  %v554 = vrot.slane %v553, 2
  %v555 = vadd.f32 %v553, %v554
  %v556 = vrot.slane %v555, 1
  %v557 = vadd.f32 %v555, %v556
  %v558 = vmul.f32 %v548, 0.045454547
  %v559 = vmul.f32 %v557, 0.045454547
  %v560 = vadd.f32 %v558, 1e-05
  %v561 = vadd.f32 %v559, 1e-05
  %v562 = vrsqrt.pop %v560
  %v563 = vrsqrt.pop %v561
  %v564 = vmul.f32 %v528, %v562
  %v565 = vmul.f32 %v529, %v563
  %v566 = vmul.f32 %v530, %v562
  %v567 = vmul.f32 %v531, %v563
  %v568 = vmul.f32 %v532, %v562
  %v569 = vmul.f32 %v533, %v563
  %s570 = scalar_lea.vmem %s5, 1
  %v571 = vld [vmem:[%s570] ss:$8 sm:$0x3]
  %v573 = vlaneseq
  %v574 = vshrl.u32 %v573, 7
  %v575 = vsub.s32 0, %v574
  %v576 = vrot.slane %v571, %v575
  %v577 = vlaneseq
  %v578 = vshrl.u32 %v577, 7
  %v579 = vsub.s32 1, %v578
  %v580 = vrot.slane %v571, %v579
  %v583 = vmul.f32 %v564, %v576
  %v584 = vmul.f32 %v565, %v580
  %v585 = vmul.f32 %v566, %v576
  %v586 = vmul.f32 %v567, %v580
  %v587 = vmul.f32 %v568, %v576
  %v588 = vmul.f32 %v569, %v580
  %s589 = scalar_lea.vmem %s5, 2
  %v590 = vld [vmem:[%s589] ss:$8 sm:$0x3]
  %v592 = vlaneseq
  %v593 = vshrl.u32 %v592, 7
  %v594 = vsub.s32 0, %v593
  %v595 = vrot.slane %v590, %v594
  %v596 = vlaneseq
  %v597 = vshrl.u32 %v596, 7
  %v598 = vsub.s32 1, %v597
  %v599 = vrot.slane %v590, %v598
  %v602 = vadd.f32 %v583, %v595
  %v603 = vadd.f32 %v584, %v599
  %v604 = vadd.f32 %v585, %v595
  %v605 = vadd.f32 %v586, %v599
  %v606 = vadd.f32 %v587, %v595
  %v607 = vadd.f32 %v588, %v599
  %vm608 = vcmp.gt.f32.partialorder %v602, 0.0
  %vm609 = vcmp.gt.f32.partialorder %v603, 0.0
  %vm610 = vcmp.gt.f32.partialorder %v604, 0.0
  %vm611 = vcmp.gt.f32.partialorder %v605, 0.0
  %vm612 = vcmp.gt.f32.partialorder %v606, 0.0
  %vm613 = vcmp.gt.f32.partialorder %v607, 0.0
  %v614 = vmul.f32 %v602, 0.01
  %v615 = vmul.f32 %v603, 0.01
  %v616 = vmul.f32 %v604, 0.01
  %v617 = vmul.f32 %v605, 0.01
  %v618 = vmul.f32 %v606, 0.01
  %v619 = vmul.f32 %v607, 0.01
  %v620 = vsel %vm608, %v602, %v614
  %v621 = vsel %vm609, %v603, %v615
  %v622 = vsel %vm610, %v604, %v616
  %v623 = vsel %vm611, %v605, %v617
  %v624 = vsel %vm612, %v606, %v618
  %v625 = vsel %vm613, %v607, %v619
  %v632 = vcombine.low %v620, %v621
  %v633 = vcombine.high %v620, %v621
  %v635 = vunpack.c.l.s4 1966171168
  %v636 = vunpack.c.0.s8 %v635
  %v637 = vlaneseq
  %v638 = vshrl.u32 %v637, 7
  %v639 = vsub.s32 %v636, %v638
  %v640 = vrot.slane %v632, %v639
  %v642 = vunpack.c.l.s4 1966171168
  %v643 = vunpack.c.0.s8 %v642
  %v644 = vlaneseq
  %v645 = vshrl.u32 %v644, 7
  %v646 = vsub.s32 %v643, %v645
  %v647 = vrot.slane %v633, %v646
  %v648 = vcombine.high %v640, %v640
  %v649 = vcombine.high %v647, %v647
  %v651 = vunpack.c.l.s4 1966171168
  %v652 = vunpack.c.0.s8 %v651
  %v653 = vlaneseq
  %v654 = vshrl.u32 %v653, 7
  %v655 = vsub.s32 %v652, %v654
  %v656 = vrot.slane %v640, %v655
  %v658 = vunpack.c.l.s4 1966171168
  %v659 = vunpack.c.0.s8 %v658
  %v660 = vlaneseq
  %v661 = vshrl.u32 %v660, 7
  %v662 = vsub.s32 %v659, %v661
  %v663 = vrot.slane %v647, %v662
  %v665 = vunpack.c.l.s4 1966171168
  %v666 = vunpack.c.0.s8 %v665
  %v667 = vlaneseq
  %v668 = vshrl.u32 %v667, 7
  %v669 = vsub.s32 %v666, %v668
  %v670 = vrot.slane %v648, %v669
  %v672 = vunpack.c.l.s4 1966171168
  %v673 = vunpack.c.0.s8 %v672
  %v674 = vlaneseq
  %v675 = vshrl.u32 %v674, 7
  %v676 = vsub.s32 %v673, %v675
  %v677 = vrot.slane %v649, %v676
  %v678 = vcombine.high %v656, %v656
  %v679 = vcombine.high %v663, %v663
  %v680 = vcombine.high %v670, %v670
  %v681 = vcombine.high %v677, %v677
  %v682 = vcombine.low %v622, %v623
  %v683 = vcombine.high %v622, %v623
  %v685 = vunpack.c.l.s4 1966171168
  %v686 = vunpack.c.0.s8 %v685
  %v687 = vlaneseq
  %v688 = vshrl.u32 %v687, 7
  %v689 = vsub.s32 %v686, %v688
  %v690 = vrot.slane %v682, %v689
  %v692 = vunpack.c.l.s4 1966171168
  %v693 = vunpack.c.0.s8 %v692
  %v694 = vlaneseq
  %v695 = vshrl.u32 %v694, 7
  %v696 = vsub.s32 %v693, %v695
  %v697 = vrot.slane %v683, %v696
  %v698 = vcombine.high %v690, %v690
  %v699 = vcombine.high %v697, %v697
  %v701 = vunpack.c.l.s4 1966171168
  %v702 = vunpack.c.0.s8 %v701
  %v703 = vlaneseq
  %v704 = vshrl.u32 %v703, 7
  %v705 = vsub.s32 %v702, %v704
  %v706 = vrot.slane %v690, %v705
  %v708 = vunpack.c.l.s4 1966171168
  %v709 = vunpack.c.0.s8 %v708
  %v710 = vlaneseq
  %v711 = vshrl.u32 %v710, 7
  %v712 = vsub.s32 %v709, %v711
  %v713 = vrot.slane %v697, %v712
  %v715 = vunpack.c.l.s4 1966171168
  %v716 = vunpack.c.0.s8 %v715
  %v717 = vlaneseq
  %v718 = vshrl.u32 %v717, 7
  %v719 = vsub.s32 %v716, %v718
  %v720 = vrot.slane %v698, %v719
  %v722 = vunpack.c.l.s4 1966171168
  %v723 = vunpack.c.0.s8 %v722
  %v724 = vlaneseq
  %v725 = vshrl.u32 %v724, 7
  %v726 = vsub.s32 %v723, %v725
  %v727 = vrot.slane %v699, %v726
  %v728 = vcombine.high %v706, %v706
  %v729 = vcombine.high %v713, %v713
  %v730 = vcombine.high %v720, %v720
  %v731 = vcombine.high %v727, %v727
  %v732 = vcombine.low %v624, %v625
  %v733 = vcombine.high %v624, %v625
  %v735 = vunpack.c.l.s4 1966171168
  %v736 = vunpack.c.0.s8 %v735
  %v737 = vlaneseq
  %v738 = vshrl.u32 %v737, 7
  %v739 = vsub.s32 %v736, %v738
  %v740 = vrot.slane %v732, %v739
  %v742 = vunpack.c.l.s4 1966171168
  %v743 = vunpack.c.0.s8 %v742
  %v744 = vlaneseq
  %v745 = vshrl.u32 %v744, 7
  %v746 = vsub.s32 %v743, %v745
  %v747 = vrot.slane %v733, %v746
  %v748 = vcombine.high %v740, %v740
  %v749 = vcombine.high %v747, %v747
  %v751 = vunpack.c.l.s4 1966171168
  %v752 = vunpack.c.0.s8 %v751
  %v753 = vlaneseq
  %v754 = vshrl.u32 %v753, 7
  %v755 = vsub.s32 %v752, %v754
  %v756 = vrot.slane %v740, %v755
  %v758 = vunpack.c.l.s4 1966171168
  %v759 = vunpack.c.0.s8 %v758
  %v760 = vlaneseq
  %v761 = vshrl.u32 %v760, 7
  %v762 = vsub.s32 %v759, %v761
  %v763 = vrot.slane %v747, %v762
  %v765 = vunpack.c.l.s4 1966171168
  %v766 = vunpack.c.0.s8 %v765
  %v767 = vlaneseq
  %v768 = vshrl.u32 %v767, 7
  %v769 = vsub.s32 %v766, %v768
  %v770 = vrot.slane %v748, %v769
  %v772 = vunpack.c.l.s4 1966171168
  %v773 = vunpack.c.0.s8 %v772
  %v774 = vlaneseq
  %v775 = vshrl.u32 %v774, 7
  %v776 = vsub.s32 %v773, %v775
  %v777 = vrot.slane %v749, %v776
  %v778 = vcombine.high %v756, %v756
  %v779 = vcombine.high %v770, %v770
  %v780 = vcombine.low %v656, %v656
  %v781 = vcombine.low %v670, %v678
  %v782 = vcombine.low %v680, %v663
  %v784 = vunpack.c.l.s4 1966171168
  %v785 = vunpack.c.0.s8 %v784
  %v786 = vlaneseq
  %v787 = vshrl.u32 %v786, 7
  %v788 = vsub.s32 %v785, %v787
  %v789 = vrot.slane %v780, %v788
  %v791 = vunpack.c.l.s4 1966171168
  %v792 = vunpack.c.0.s8 %v791
  %v793 = vlaneseq
  %v794 = vshrl.u32 %v793, 7
  %v795 = vsub.s32 %v792, %v794
  %v796 = vrot.slane %v781, %v795
  %v798 = vunpack.c.l.s4 1966171168
  %v799 = vunpack.c.0.s8 %v798
  %v800 = vlaneseq
  %v801 = vshrl.u32 %v800, 7
  %v802 = vsub.s32 %v799, %v801
  %v803 = vrot.slane %v782, %v802
  %v804 = vcombine.low %v789, %v789
  %v805 = vcombine.low %v796, %v803
  %v806 = vcombine.high %v796, %v803
  %v808 = vunpack.c.l.s4 1966171168
  %v809 = vunpack.c.0.s8 %v808
  %v810 = vlaneseq
  %v811 = vshrl.u32 %v810, 7
  %v812 = vsub.s32 %v809, %v811
  %v813 = vrot.slane %v804, %v812
  %v815 = vunpack.c.l.s4 1966171168
  %v816 = vunpack.c.0.s8 %v815
  %v817 = vlaneseq
  %v818 = vshrl.u32 %v817, 7
  %v819 = vsub.s32 %v816, %v818
  %v820 = vrot.slane %v789, %v819
  %v822 = vunpack.c.l.s4 1966171168
  %v823 = vunpack.c.0.s8 %v822
  %v824 = vlaneseq
  %v825 = vshrl.u32 %v824, 7
  %v826 = vsub.s32 %v823, %v825
  %v827 = vrot.slane %v805, %v826
  %v829 = vunpack.c.l.s4 1966171168
  %v830 = vunpack.c.0.s8 %v829
  %v831 = vlaneseq
  %v832 = vshrl.u32 %v831, 7
  %v833 = vsub.s32 %v830, %v832
  %v834 = vrot.slane %v806, %v833
  %v835 = vcombine.low %v813, %v827
  %v836 = vcombine.low %v820, %v834
  %v837 = vcombine.low %v677, %v679
  %v838 = vcombine.low %v681, %v706
  %v839 = vcombine.low %v720, %v728
  %v841 = vunpack.c.l.s4 1966171168
  %v842 = vunpack.c.0.s8 %v841
  %v843 = vlaneseq
  %v844 = vshrl.u32 %v843, 7
  %v845 = vsub.s32 %v842, %v844
  %v846 = vrot.slane %v837, %v845
  %v848 = vunpack.c.l.s4 1966171168
  %v849 = vunpack.c.0.s8 %v848
  %v850 = vlaneseq
  %v851 = vshrl.u32 %v850, 7
  %v852 = vsub.s32 %v849, %v851
  %v853 = vrot.slane %v838, %v852
  %v855 = vunpack.c.l.s4 1966171168
  %v856 = vunpack.c.0.s8 %v855
  %v857 = vlaneseq
  %v858 = vshrl.u32 %v857, 7
  %v859 = vsub.s32 %v856, %v858
  %v860 = vrot.slane %v839, %v859
  %v861 = vcombine.low %v846, %v853
  %v862 = vcombine.high %v846, %v853
  %v863 = vcombine.high %v860, %v860
  %v865 = vunpack.c.l.s4 1966171168
  %v866 = vunpack.c.0.s8 %v865
  %v867 = vlaneseq
  %v868 = vshrl.u32 %v867, 7
  %v869 = vsub.s32 %v866, %v868
  %v870 = vrot.slane %v861, %v869
  %v872 = vunpack.c.l.s4 1966171168
  %v873 = vunpack.c.0.s8 %v872
  %v874 = vlaneseq
  %v875 = vshrl.u32 %v874, 7
  %v876 = vsub.s32 %v873, %v875
  %v877 = vrot.slane %v862, %v876
  %v879 = vunpack.c.l.s4 1966171168
  %v880 = vunpack.c.0.s8 %v879
  %v881 = vlaneseq
  %v882 = vshrl.u32 %v881, 7
  %v883 = vsub.s32 %v880, %v882
  %v884 = vrot.slane %v860, %v883
  %v886 = vunpack.c.l.s4 1966171168
  %v887 = vunpack.c.0.s8 %v886
  %v888 = vlaneseq
  %v889 = vshrl.u32 %v888, 7
  %v890 = vsub.s32 %v887, %v889
  %v891 = vrot.slane %v863, %v890
  %v892 = vcombine.low %v870, %v884
  %v893 = vcombine.low %v877, %v891
  %v894 = vcombine.low %v730, %v730
  %v895 = vcombine.low %v713, %v727
  %v896 = vcombine.low %v729, %v731
  %v898 = vunpack.c.l.s4 1966171168
  %v899 = vunpack.c.0.s8 %v898
  %v900 = vlaneseq
  %v901 = vshrl.u32 %v900, 7
  %v902 = vsub.s32 %v899, %v901
  %v903 = vrot.slane %v894, %v902
  %v905 = vunpack.c.l.s4 1966171168
  %v906 = vunpack.c.0.s8 %v905
  %v907 = vlaneseq
  %v908 = vshrl.u32 %v907, 7
  %v909 = vsub.s32 %v906, %v908
  %v910 = vrot.slane %v895, %v909
  %v912 = vunpack.c.l.s4 1966171168
  %v913 = vunpack.c.0.s8 %v912
  %v914 = vlaneseq
  %v915 = vshrl.u32 %v914, 7
  %v916 = vsub.s32 %v913, %v915
  %v917 = vrot.slane %v896, %v916
  %v918 = vcombine.low %v903, %v903
  %v919 = vcombine.low %v910, %v917
  %v920 = vcombine.high %v910, %v917
  %v922 = vunpack.c.l.s4 1966171168
  %v923 = vunpack.c.0.s8 %v922
  %v924 = vlaneseq
  %v925 = vshrl.u32 %v924, 7
  %v926 = vsub.s32 %v923, %v925
  %v927 = vrot.slane %v918, %v926
  %v929 = vunpack.c.l.s4 1966171168
  %v930 = vunpack.c.0.s8 %v929
  %v931 = vlaneseq
  %v932 = vshrl.u32 %v931, 7
  %v933 = vsub.s32 %v930, %v932
  %v934 = vrot.slane %v903, %v933
  %v936 = vunpack.c.l.s4 1966171168
  %v937 = vunpack.c.0.s8 %v936
  %v938 = vlaneseq
  %v939 = vshrl.u32 %v938, 7
  %v940 = vsub.s32 %v937, %v939
  %v941 = vrot.slane %v919, %v940
  %v943 = vunpack.c.l.s4 1966171168
  %v944 = vunpack.c.0.s8 %v943
  %v945 = vlaneseq
  %v946 = vshrl.u32 %v945, 7
  %v947 = vsub.s32 %v944, %v946
  %v948 = vrot.slane %v920, %v947
  %v949 = vcombine.low %v927, %v941
  %v950 = vcombine.low %v934, %v948
  %v951 = vcombine.low %v756, %v770
  %v952 = vcombine.low %v778, %v779
  %v953 = vcombine.low %v763, %v777
  %v955 = vunpack.c.l.s4 1966171168
  %v956 = vunpack.c.0.s8 %v955
  %v957 = vlaneseq
  %v958 = vshrl.u32 %v957, 7
  %v959 = vsub.s32 %v956, %v958
  %v960 = vrot.slane %v951, %v959
  %v962 = vunpack.c.l.s4 1966171168
  %v963 = vunpack.c.0.s8 %v962
  %v964 = vlaneseq
  %v965 = vshrl.u32 %v964, 7
  %v966 = vsub.s32 %v963, %v965
  %v967 = vrot.slane %v952, %v966
  %v969 = vunpack.c.l.s4 1966171168
  %v970 = vunpack.c.0.s8 %v969
  %v971 = vlaneseq
  %v972 = vshrl.u32 %v971, 7
  %v973 = vsub.s32 %v970, %v972
  %v974 = vrot.slane %v953, %v973
  %v975 = vcombine.low %v960, %v967
  %v976 = vcombine.high %v960, %v967
  %v977 = vcombine.high %v974, %v974
  %v979 = vunpack.c.l.s4 1966171168
  %v980 = vunpack.c.0.s8 %v979
  %v981 = vlaneseq
  %v982 = vshrl.u32 %v981, 7
  %v983 = vsub.s32 %v980, %v982
  %v984 = vrot.slane %v975, %v983
  %v986 = vunpack.c.l.s4 1966171168
  %v987 = vunpack.c.0.s8 %v986
  %v988 = vlaneseq
  %v989 = vshrl.u32 %v988, 7
  %v990 = vsub.s32 %v987, %v989
  %v991 = vrot.slane %v976, %v990
  %v993 = vunpack.c.l.s4 1966171168
  %v994 = vunpack.c.0.s8 %v993
  %v995 = vlaneseq
  %v996 = vshrl.u32 %v995, 7
  %v997 = vsub.s32 %v994, %v996
  %v998 = vrot.slane %v974, %v997
  %v1000 = vunpack.c.l.s4 1966171168
  %v1001 = vunpack.c.0.s8 %v1000
  %v1002 = vlaneseq
  %v1003 = vshrl.u32 %v1002, 7
  %v1004 = vsub.s32 %v1001, %v1003
  %v1005 = vrot.slane %v977, %v1004
  %v1006 = vcombine.low %v984, %v998
  %v1007 = vcombine.low %v991, %v1005
  %v1016 = vsel %vm31, 0.0, %v835
  %v1017 = vsel %vm31, 0.0, %v836
  %v1018 = vsel %vm31, 0.0, %v949
  %v1019 = vsel %vm31, 0.0, %v950
  %v1020 = vsel %vm59, %v892, 0.0
  %v1021 = vsel %vm59, %v893, 0.0
  %v1022 = vsel %vm59, %v1006, 0.0
  %v1023 = vsel %vm59, %v1007, 0.0
  %v1032 = vrot.slane %v1016, 1
  %v1033 = vrot.slane %v1020, 1
  %v1034 = vsel %vm40, %v1032, %v1033
  %v1035 = vrot.slane %v1017, 1
  %v1036 = vrot.slane %v1021, 1
  %v1037 = vsel %vm40, %v1035, %v1036
  %v1038 = vrot.slane %v1018, 1
  %v1039 = vrot.slane %v1022, 1
  %v1040 = vsel %vm40, %v1038, %v1039
  %v1041 = vrot.slane %v1019, 1
  %v1042 = vrot.slane %v1023, 1
  %v1043 = vsel %vm40, %v1041, %v1042
  %v1044 = vrot.slane %v1016, 2
  %v1045 = vrot.slane %v1020, 2
  %v1046 = vsel %vm59, %v1044, %v1045
  %v1047 = vrot.slane %v1017, 2
  %v1048 = vrot.slane %v1021, 2
  %v1049 = vsel %vm59, %v1047, %v1048
  %v1050 = vrot.slane %v1018, 2
  %v1051 = vrot.slane %v1022, 2
  %v1052 = vsel %vm59, %v1050, %v1051
  %v1053 = vrot.slane %v1019, 2
  %v1054 = vrot.slane %v1023, 2
  %v1055 = vsel %vm59, %v1053, %v1054
  %v1057 = vrot.slane %v1016, 3
  %v1058 = vrot.slane %v1020, 3
  %v1059 = vsel %vm78, %v1057, %v1058
  %v1060 = vrot.slane %v1017, 3
  %v1061 = vrot.slane %v1021, 3
  %v1062 = vsel %vm78, %v1060, %v1061
  %v1063 = vrot.slane 0.0, 3
  %v1064 = vsel %vm78, %v1058, %v1063
  %v1065 = vsel %vm78, %v1061, %v1063
  %v1066 = vrot.slane %v1018, 3
  %v1067 = vrot.slane %v1022, 3
  %v1068 = vsel %vm78, %v1066, %v1067
  %v1069 = vrot.slane %v1019, 3
  %v1070 = vrot.slane %v1023, 3
  %v1071 = vsel %vm78, %v1069, %v1070
  %v1072 = vsel %vm78, %v1067, %v1063
  %v1073 = vsel %vm78, %v1070, %v1063
  %v1074 = vcombine.low %v1016, %v1017
  %v1075 = vcombine.high %v1016, %v1017
  %v1076 = vcombine.low %v1034, %v1037
  %v1077 = vcombine.high %v1034, %v1037
  %v1079 = vunpack.c.l.s4 1983009808
  %v1080 = vunpack.c.0.s8 %v1079
  %v1081 = vlaneseq
  %v1082 = vshrl.u32 %v1081, 7
  %v1083 = vsub.s32 %v1080, %v1082
  %v1084 = vrot.slane %v1074, %v1083
  %v1086 = vunpack.c.l.s4 1983009808
  %v1087 = vunpack.c.0.s8 %v1086
  %v1088 = vlaneseq
  %v1089 = vshrl.u32 %v1088, 7
  %v1090 = vsub.s32 %v1087, %v1089
  %v1091 = vrot.slane %v1075, %v1090
  %v1093 = vunpack.c.l.s4 1983009808
  %v1094 = vunpack.c.0.s8 %v1093
  %v1095 = vlaneseq
  %v1096 = vshrl.u32 %v1095, 7
  %v1097 = vsub.s32 %v1094, %v1096
  %v1098 = vrot.slane %v1076, %v1097
  %v1100 = vunpack.c.l.s4 1983009808
  %v1101 = vunpack.c.0.s8 %v1100
  %v1102 = vlaneseq
  %v1103 = vshrl.u32 %v1102, 7
  %v1104 = vsub.s32 %v1101, %v1103
  %v1105 = vrot.slane %v1077, %v1104
  %v1106 = vcombine.low %v1084, %v1098
  %v1107 = vcombine.high %v1084, %v1098
  %v1108 = vcombine.low %v1091, %v1105
  %v1109 = vcombine.high %v1091, %v1105
  %v1110 = vcombine.low %v1046, %v1049
  %v1111 = vcombine.high %v1046, %v1049
  %v1112 = vcombine.low %v1059, %v1062
  %v1113 = vcombine.high %v1059, %v1062
  %v1115 = vunpack.c.l.s4 1983009808
  %v1116 = vunpack.c.0.s8 %v1115
  %v1117 = vlaneseq
  %v1118 = vshrl.u32 %v1117, 7
  %v1119 = vsub.s32 %v1116, %v1118
  %v1120 = vrot.slane %v1110, %v1119
  %v1122 = vunpack.c.l.s4 1983009808
  %v1123 = vunpack.c.0.s8 %v1122
  %v1124 = vlaneseq
  %v1125 = vshrl.u32 %v1124, 7
  %v1126 = vsub.s32 %v1123, %v1125
  %v1127 = vrot.slane %v1111, %v1126
  %v1129 = vunpack.c.l.s4 1983009808
  %v1130 = vunpack.c.0.s8 %v1129
  %v1131 = vlaneseq
  %v1132 = vshrl.u32 %v1131, 7
  %v1133 = vsub.s32 %v1130, %v1132
  %v1134 = vrot.slane %v1112, %v1133
  %v1136 = vunpack.c.l.s4 1983009808
  %v1137 = vunpack.c.0.s8 %v1136
  %v1138 = vlaneseq
  %v1139 = vshrl.u32 %v1138, 7
  %v1140 = vsub.s32 %v1137, %v1139
  %v1141 = vrot.slane %v1113, %v1140
  %v1142 = vcombine.low %v1120, %v1134
  %v1143 = vcombine.high %v1120, %v1134
  %v1144 = vcombine.low %v1127, %v1141
  %v1145 = vcombine.high %v1127, %v1141
  %v1146 = vcombine.low %v1020, %v1021
  %v1147 = vcombine.high %v1020, %v1021
  %v1148 = vcombine.low %v1033, %v1036
  %v1149 = vcombine.high %v1033, %v1036
  %v1151 = vunpack.c.l.s4 1983009808
  %v1152 = vunpack.c.0.s8 %v1151
  %v1153 = vlaneseq
  %v1154 = vshrl.u32 %v1153, 7
  %v1155 = vsub.s32 %v1152, %v1154
  %v1156 = vrot.slane %v1146, %v1155
  %v1158 = vunpack.c.l.s4 1983009808
  %v1159 = vunpack.c.0.s8 %v1158
  %v1160 = vlaneseq
  %v1161 = vshrl.u32 %v1160, 7
  %v1162 = vsub.s32 %v1159, %v1161
  %v1163 = vrot.slane %v1147, %v1162
  %v1165 = vunpack.c.l.s4 1983009808
  %v1166 = vunpack.c.0.s8 %v1165
  %v1167 = vlaneseq
  %v1168 = vshrl.u32 %v1167, 7
  %v1169 = vsub.s32 %v1166, %v1168
  %v1170 = vrot.slane %v1148, %v1169
  %v1172 = vunpack.c.l.s4 1983009808
  %v1173 = vunpack.c.0.s8 %v1172
  %v1174 = vlaneseq
  %v1175 = vshrl.u32 %v1174, 7
  %v1176 = vsub.s32 %v1173, %v1175
  %v1177 = vrot.slane %v1149, %v1176
  %v1178 = vcombine.low %v1156, %v1170
  %v1179 = vcombine.high %v1156, %v1170
  %v1180 = vcombine.low %v1163, %v1177
  %v1181 = vcombine.low %v1045, %v1048
  %v1182 = vcombine.high %v1045, %v1048
  %v1183 = vcombine.low %v1064, %v1065
  %v1184 = vcombine.high %v1064, %v1065
  %v1186 = vunpack.c.l.s4 1983009808
  %v1187 = vunpack.c.0.s8 %v1186
  %v1188 = vlaneseq
  %v1189 = vshrl.u32 %v1188, 7
  %v1190 = vsub.s32 %v1187, %v1189
  %v1191 = vrot.slane %v1181, %v1190
  %v1193 = vunpack.c.l.s4 1983009808
  %v1194 = vunpack.c.0.s8 %v1193
  %v1195 = vlaneseq
  %v1196 = vshrl.u32 %v1195, 7
  %v1197 = vsub.s32 %v1194, %v1196
  %v1198 = vrot.slane %v1182, %v1197
  %v1200 = vunpack.c.l.s4 1983009808
  %v1201 = vunpack.c.0.s8 %v1200
  %v1202 = vlaneseq
  %v1203 = vshrl.u32 %v1202, 7
  %v1204 = vsub.s32 %v1201, %v1203
  %v1205 = vrot.slane %v1183, %v1204
  %v1207 = vunpack.c.l.s4 1983009808
  %v1208 = vunpack.c.0.s8 %v1207
  %v1209 = vlaneseq
  %v1210 = vshrl.u32 %v1209, 7
  %v1211 = vsub.s32 %v1208, %v1210
  %v1212 = vrot.slane %v1184, %v1211
  %v1213 = vcombine.low %v1191, %v1205
  %v1214 = vcombine.high %v1191, %v1205
  %v1215 = vcombine.low %v1198, %v1212
  %v1216 = vcombine.low %v1018, %v1019
  %v1217 = vcombine.high %v1018, %v1019
  %v1218 = vcombine.low %v1040, %v1043
  %v1219 = vcombine.high %v1040, %v1043
  %v1221 = vunpack.c.l.s4 1983009808
  %v1222 = vunpack.c.0.s8 %v1221
  %v1223 = vlaneseq
  %v1224 = vshrl.u32 %v1223, 7
  %v1225 = vsub.s32 %v1222, %v1224
  %v1226 = vrot.slane %v1216, %v1225
  %v1228 = vunpack.c.l.s4 1983009808
  %v1229 = vunpack.c.0.s8 %v1228
  %v1230 = vlaneseq
  %v1231 = vshrl.u32 %v1230, 7
  %v1232 = vsub.s32 %v1229, %v1231
  %v1233 = vrot.slane %v1217, %v1232
  %v1235 = vunpack.c.l.s4 1983009808
  %v1236 = vunpack.c.0.s8 %v1235
  %v1237 = vlaneseq
  %v1238 = vshrl.u32 %v1237, 7
  %v1239 = vsub.s32 %v1236, %v1238
  %v1240 = vrot.slane %v1218, %v1239
  %v1242 = vunpack.c.l.s4 1983009808
  %v1243 = vunpack.c.0.s8 %v1242
  %v1244 = vlaneseq
  %v1245 = vshrl.u32 %v1244, 7
  %v1246 = vsub.s32 %v1243, %v1245
  %v1247 = vrot.slane %v1219, %v1246
  %v1248 = vcombine.low %v1226, %v1240
  %v1249 = vcombine.high %v1226, %v1240
  %v1250 = vcombine.low %v1233, %v1247
  %v1251 = vcombine.high %v1233, %v1247
  %v1252 = vcombine.low %v1052, %v1055
  %v1253 = vcombine.high %v1052, %v1055
  %v1254 = vcombine.low %v1068, %v1071
  %v1255 = vcombine.high %v1068, %v1071
  %v1257 = vunpack.c.l.s4 1983009808
  %v1258 = vunpack.c.0.s8 %v1257
  %v1259 = vlaneseq
  %v1260 = vshrl.u32 %v1259, 7
  %v1261 = vsub.s32 %v1258, %v1260
  %v1262 = vrot.slane %v1252, %v1261
  %v1264 = vunpack.c.l.s4 1983009808
  %v1265 = vunpack.c.0.s8 %v1264
  %v1266 = vlaneseq
  %v1267 = vshrl.u32 %v1266, 7
  %v1268 = vsub.s32 %v1265, %v1267
  %v1269 = vrot.slane %v1253, %v1268
  %v1271 = vunpack.c.l.s4 1983009808
  %v1272 = vunpack.c.0.s8 %v1271
  %v1273 = vlaneseq
  %v1274 = vshrl.u32 %v1273, 7
  %v1275 = vsub.s32 %v1272, %v1274
  %v1276 = vrot.slane %v1254, %v1275
  %v1278 = vunpack.c.l.s4 1983009808
  %v1279 = vunpack.c.0.s8 %v1278
  %v1280 = vlaneseq
  %v1281 = vshrl.u32 %v1280, 7
  %v1282 = vsub.s32 %v1279, %v1281
  %v1283 = vrot.slane %v1255, %v1282
  %v1284 = vcombine.low %v1262, %v1276
  %v1285 = vcombine.high %v1262, %v1276
  %v1286 = vcombine.low %v1269, %v1283
  %v1287 = vcombine.high %v1269, %v1283
  %v1288 = vcombine.low %v1022, %v1023
  %v1289 = vcombine.high %v1022, %v1023
  %v1290 = vcombine.low %v1039, %v1042
  %v1291 = vcombine.high %v1039, %v1042
  %v1293 = vunpack.c.l.s4 1983009808
  %v1294 = vunpack.c.0.s8 %v1293
  %v1295 = vlaneseq
  %v1296 = vshrl.u32 %v1295, 7
  %v1297 = vsub.s32 %v1294, %v1296
  %v1298 = vrot.slane %v1288, %v1297
  %v1300 = vunpack.c.l.s4 1983009808
  %v1301 = vunpack.c.0.s8 %v1300
  %v1302 = vlaneseq
  %v1303 = vshrl.u32 %v1302, 7
  %v1304 = vsub.s32 %v1301, %v1303
  %v1305 = vrot.slane %v1289, %v1304
  %v1307 = vunpack.c.l.s4 1983009808
  %v1308 = vunpack.c.0.s8 %v1307
  %v1309 = vlaneseq
  %v1310 = vshrl.u32 %v1309, 7
  %v1311 = vsub.s32 %v1308, %v1310
  %v1312 = vrot.slane %v1290, %v1311
  %v1314 = vunpack.c.l.s4 1983009808
  %v1315 = vunpack.c.0.s8 %v1314
  %v1316 = vlaneseq
  %v1317 = vshrl.u32 %v1316, 7
  %v1318 = vsub.s32 %v1315, %v1317
  %v1319 = vrot.slane %v1291, %v1318
  %v1320 = vcombine.low %v1298, %v1312
  %v1321 = vcombine.high %v1298, %v1312
  %v1322 = vcombine.low %v1305, %v1319
  %v1323 = vcombine.low %v1051, %v1054
  %v1324 = vcombine.high %v1051, %v1054
  %v1325 = vcombine.low %v1072, %v1073
  %v1326 = vcombine.high %v1072, %v1073
  %v1328 = vunpack.c.l.s4 1983009808
  %v1329 = vunpack.c.0.s8 %v1328
  %v1330 = vlaneseq
  %v1331 = vshrl.u32 %v1330, 7
  %v1332 = vsub.s32 %v1329, %v1331
  %v1333 = vrot.slane %v1323, %v1332
  %v1335 = vunpack.c.l.s4 1983009808
  %v1336 = vunpack.c.0.s8 %v1335
  %v1337 = vlaneseq
  %v1338 = vshrl.u32 %v1337, 7
  %v1339 = vsub.s32 %v1336, %v1338
  %v1340 = vrot.slane %v1324, %v1339
  %v1342 = vunpack.c.l.s4 1983009808
  %v1343 = vunpack.c.0.s8 %v1342
  %v1344 = vlaneseq
  %v1345 = vshrl.u32 %v1344, 7
  %v1346 = vsub.s32 %v1343, %v1345
  %v1347 = vrot.slane %v1325, %v1346
  %v1349 = vunpack.c.l.s4 1983009808
  %v1350 = vunpack.c.0.s8 %v1349
  %v1351 = vlaneseq
  %v1352 = vshrl.u32 %v1351, 7
  %v1353 = vsub.s32 %v1350, %v1352
  %v1354 = vrot.slane %v1326, %v1353
  %v1355 = vcombine.low %v1333, %v1347
  %v1356 = vcombine.high %v1333, %v1347
  %v1357 = vcombine.low %v1340, %v1354
  %v1358 = vld [vmem:[%s2] sm:$0xff]
  %v1359 = vld [vmem:[%s2 + $0x8] sm:$0xff]
  %v1360 = vld [vmem:[%s2 + $0x10] sm:$0xff]
  %v1361 = vld [vmem:[%s2 + $0x18] sm:$0xff]
  %v1362 = vld [vmem:[%s2 + $0x20] sm:$0xff]
  %v1363 = vld [vmem:[%s2 + $0x28] sm:$0xff]
  %v1364 = vld [vmem:[%s2 + $0x30] sm:$0xff]
  %v1365 = vld [vmem:[%s2 + $0x38] sm:$0xff]
  %v1366 = vld [vmem:[%s2 + $0x40] sm:$0xff]
  %v1367 = vld [vmem:[%s2 + $0x48] sm:$0xff]
  %v1368 = vld [vmem:[%s2 + $0x50] sm:$0xff]
  %v1369 = vld [vmem:[%s2 + $0x58] sm:$0xff]
  %v1370 = vld [vmem:[%s2 + $0x60] sm:$0xff]
  %v1371 = vld [vmem:[%s2 + $0x68] sm:$0xff]
  %v1372 = vld [vmem:[%s2 + $0x70] sm:$0xff]
  %v1373 = vld [vmem:[%s2 + $0x78] sm:$0xff]
  %v1374 = vld [vmem:[%s2 + $0x80] sm:$0xff]
  %v1375 = vld [vmem:[%s2 + $0x88] sm:$0xff]
  %v1376 = vld [vmem:[%s2 + $0x90] sm:$0xff]
  %v1377 = vld [vmem:[%s2 + $0x98] sm:$0xff]
  %v1378 = vld [vmem:[%s2 + $0xa0] sm:$0xff]
  %v1379 = vld [vmem:[%s2 + $0xa8] sm:$0xff]
  %v1380 = vld [vmem:[%s2 + $0xb0] sm:$0xff]
  %v1381 = vld [vmem:[%s2 + $0xb8] sm:$0xff]
  %v1382 = vld [vmem:[%s2 + $0xc0] sm:$0xff]
  %v1383 = vld [vmem:[%s2 + $0xc8] sm:$0xff]
  %v1384 = vld [vmem:[%s2 + $0xd0] sm:$0xff]
  %v1385 = vld [vmem:[%s2 + $0xd8] sm:$0xff]
  %v1386 = vld [vmem:[%s2 + $0xe0] sm:$0xff]
  %v1387 = vld [vmem:[%s2 + $0xe8] sm:$0xff]
  %v1388 = vld [vmem:[%s2 + $0xf0] sm:$0xff]
  %v1389 = vld [vmem:[%s2 + $0xf8] sm:$0xff]
  %v1390 = vld [vmem:[%s2 + $0x100] sm:$0xff]
  %v1391 = vld [vmem:[%s2 + $0x108] sm:$0xff]
  %v1392 = vld [vmem:[%s2 + $0x110] sm:$0xff]
  %v1393 = vld [vmem:[%s2 + $0x118] sm:$0xff]
  %v1394 = vld [vmem:[%s2 + $0x120] sm:$0xff]
  %v1395 = vld [vmem:[%s2 + $0x128] sm:$0xff]
  %v1396 = vld [vmem:[%s2 + $0x130] sm:$0xff]
  %v1397 = vld [vmem:[%s2 + $0x138] sm:$0xff]
  %v1398 = vld [vmem:[%s2 + $0x140] sm:$0xff]
  %v1399 = vld [vmem:[%s2 + $0x148] sm:$0xff]
  %v1400 = vld [vmem:[%s2 + $0x150] sm:$0xff]
  %v1401 = vld [vmem:[%s2 + $0x158] sm:$0xff]
  %v1402 = vld [vmem:[%s2 + $0x160] sm:$0xff]
  %v1403 = vld [vmem:[%s2 + $0x168] sm:$0xff]
  %v1404 = vld [vmem:[%s2 + $0x170] sm:$0xff]
  %v1405 = vld [vmem:[%s2 + $0x178] sm:$0xff]
  %v1406 = vld [vmem:[%s2 + $0x180] sm:$0xff]
  %v1407 = vld [vmem:[%s2 + $0x188] sm:$0xff]
  %v1408 = vld [vmem:[%s2 + $0x190] sm:$0xff]
  %v1409 = vld [vmem:[%s2 + $0x198] sm:$0xff]
  %v1410 = vld [vmem:[%s2 + $0x1a0] sm:$0xff]
  %v1411 = vld [vmem:[%s2 + $0x1a8] sm:$0xff]
  %v1412 = vld [vmem:[%s2 + $0x1b0] sm:$0xff]
  %v1413 = vld [vmem:[%s2 + $0x1b8] sm:$0xff]
  %v1414 = vld [vmem:[%s2 + $0x1c0] sm:$0xff]
  %v1415 = vld [vmem:[%s2 + $0x1c8] sm:$0xff]
  %v1416 = vld [vmem:[%s2 + $0x1d0] sm:$0xff]
  %v1417 = vld [vmem:[%s2 + $0x1d8] sm:$0xff]
  %v1418 = vld [vmem:[%s2 + $0x1e0] sm:$0xff]
  %v1419 = vld [vmem:[%s2 + $0x1e8] sm:$0xff]
  %v1420 = vld [vmem:[%s2 + $0x1f0] sm:$0xff]
  %v1421 = vld [vmem:[%s2 + $0x1f8] sm:$0xff]
  %v1422 = vld [vmem:[%s2 + $0x200] sm:$0xff]
  %v1423 = vld [vmem:[%s2 + $0x208] sm:$0xff]
  %v1424 = vld [vmem:[%s2 + $0x210] sm:$0xff]
  %v1425 = vld [vmem:[%s2 + $0x218] sm:$0xff]
  %v1426 = vld [vmem:[%s2 + $0x220] sm:$0xff]
  %v1427 = vld [vmem:[%s2 + $0x228] sm:$0xff]
  %v1428 = vld [vmem:[%s2 + $0x230] sm:$0xff]
  %v1429 = vld [vmem:[%s2 + $0x238] sm:$0xff]
  %v1430 = vld [vmem:[%s2 + $0x240] sm:$0xff]
  %v1431 = vld [vmem:[%s2 + $0x248] sm:$0xff]
  %v1432 = vld [vmem:[%s2 + $0x250] sm:$0xff]
  %v1433 = vld [vmem:[%s2 + $0x258] sm:$0xff]
  %v1434 = vld [vmem:[%s2 + $0x260] sm:$0xff]
  %v1435 = vld [vmem:[%s2 + $0x268] sm:$0xff]
  %v1436 = vld [vmem:[%s2 + $0x270] sm:$0xff]
  %v1437 = vld [vmem:[%s2 + $0x278] sm:$0xff]
  %v1438 = vld [vmem:[%s2 + $0x280] sm:$0xff]
  %v1439 = vld [vmem:[%s2 + $0x288] sm:$0xff]
  %v1440 = vld [vmem:[%s2 + $0x290] sm:$0xff]
  %v1441 = vld [vmem:[%s2 + $0x298] sm:$0xff]
  %v1442 = vld [vmem:[%s2 + $0x2a0] sm:$0xff]
  %v1443 = vld [vmem:[%s2 + $0x2a8] sm:$0xff]
  %v1444 = vld [vmem:[%s2 + $0x2b0] sm:$0xff]
  %v1445 = vld [vmem:[%s2 + $0x2b8] sm:$0xff]
  %v1446 = vld [vmem:[%s2 + $0x2c0] sm:$0xff]
  %v1447 = vld [vmem:[%s2 + $0x2c8] sm:$0xff]
  %v1448 = vld [vmem:[%s2 + $0x2d0] sm:$0xff]
  %v1449 = vld [vmem:[%s2 + $0x2d8] sm:$0xff]
  %v1450 = vld [vmem:[%s2 + $0x2e0] sm:$0xff]
  %v1451 = vld [vmem:[%s2 + $0x2e8] sm:$0xff]
  %v1452 = vld [vmem:[%s2 + $0x2f0] sm:$0xff]
  %v1453 = vld [vmem:[%s2 + $0x2f8] sm:$0xff]
  %v1454 = vld [vmem:[%s2 + $0x300] sm:$0xff]
  %v1455 = vld [vmem:[%s2 + $0x308] sm:$0xff]
  %v1456 = vld [vmem:[%s2 + $0x310] sm:$0xff]
  %v1457 = vld [vmem:[%s2 + $0x318] sm:$0xff]
  %v1458 = vld [vmem:[%s2 + $0x320] sm:$0xff]
  %v1459 = vld [vmem:[%s2 + $0x328] sm:$0xff]
  %v1460 = vld [vmem:[%s2 + $0x330] sm:$0xff]
  %v1461 = vld [vmem:[%s2 + $0x338] sm:$0xff]
  %v1462 = vld [vmem:[%s2 + $0x340] sm:$0xff]
  %v1463 = vld [vmem:[%s2 + $0x348] sm:$0xff]
  %v1464 = vld [vmem:[%s2 + $0x350] sm:$0xff]
  %v1465 = vld [vmem:[%s2 + $0x358] sm:$0xff]
  %v1466 = vld [vmem:[%s2 + $0x360] sm:$0xff]
  %v1467 = vld [vmem:[%s2 + $0x368] sm:$0xff]
  %v1468 = vld [vmem:[%s2 + $0x370] sm:$0xff]
  %v1469 = vld [vmem:[%s2 + $0x378] sm:$0xff]
  %v1470 = vld [vmem:[%s2 + $0x380] sm:$0xff]
  %v1471 = vld [vmem:[%s2 + $0x388] sm:$0xff]
  %v1472 = vld [vmem:[%s2 + $0x390] sm:$0xff]
  %v1473 = vld [vmem:[%s2 + $0x398] sm:$0xff]
  %v1474 = vld [vmem:[%s2 + $0x3a0] sm:$0xff]
  %v1475 = vld [vmem:[%s2 + $0x3a8] sm:$0xff]
  %v1476 = vld [vmem:[%s2 + $0x3b0] sm:$0xff]
  %v1477 = vld [vmem:[%s2 + $0x3b8] sm:$0xff]
  %v1478 = vld [vmem:[%s2 + $0x3c0] sm:$0xff]
  %v1479 = vld [vmem:[%s2 + $0x3c8] sm:$0xff]
  %v1480 = vld [vmem:[%s2 + $0x3d0] sm:$0xff]
  %v1481 = vld [vmem:[%s2 + $0x3d8] sm:$0xff]
  %v1482 = vld [vmem:[%s2 + $0x3e0] sm:$0xff]
  %v1483 = vld [vmem:[%s2 + $0x3e8] sm:$0xff]
  %v1484 = vld [vmem:[%s2 + $0x3f0] sm:$0xff]
  %v1485 = vld [vmem:[%s2 + $0x3f8] sm:$0xff]
  %v1486 = vld [vmem:[%s5 + $0x3] ss:$0 sm:$0xff]
  %v1487 = vcombine.low %v1106, %v1107
  %v1488 = vcombine.high %v1106, %v1107
  %v1489 = vcombine.low %v1108, %v1109
  %v1490 = vcombine.high %v1108, %v1109
  %v1492 = vunpack.c.l.s4 1983009808
  %v1493 = vunpack.c.0.s8 %v1492
  %v1494 = vlaneseq
  %v1495 = vshrl.u32 %v1494, 7
  %v1496 = vsub.s32 %v1493, %v1495
  %v1497 = vrot.slane %v1487, %v1496
  %v1499 = vunpack.c.l.s4 1983009808
  %v1500 = vunpack.c.0.s8 %v1499
  %v1501 = vlaneseq
  %v1502 = vshrl.u32 %v1501, 7
  %v1503 = vsub.s32 %v1500, %v1502
  %v1504 = vrot.slane %v1488, %v1503
  %v1506 = vunpack.c.l.s4 1983009808
  %v1507 = vunpack.c.0.s8 %v1506
  %v1508 = vlaneseq
  %v1509 = vshrl.u32 %v1508, 7
  %v1510 = vsub.s32 %v1507, %v1509
  %v1511 = vrot.slane %v1489, %v1510
  %v1513 = vunpack.c.l.s4 1983009808
  %v1514 = vunpack.c.0.s8 %v1513
  %v1515 = vlaneseq
  %v1516 = vshrl.u32 %v1515, 7
  %v1517 = vsub.s32 %v1514, %v1516
  %v1518 = vrot.slane %v1490, %v1517
  %v1519 = vcombine.low %v1497, %v1511
  %v1520 = vcombine.high %v1497, %v1511
  %v1521 = vcombine.low %v1504, %v1518
  %v1522 = vcombine.high %v1504, %v1518
  %v1523 = vcombine.low %v1142, %v1143
  %v1524 = vcombine.high %v1142, %v1143
  %v1525 = vcombine.low %v1144, %v1145
  %v1526 = vcombine.high %v1144, %v1145
  %v1528 = vunpack.c.l.s4 1983009808
  %v1529 = vunpack.c.0.s8 %v1528
  %v1530 = vlaneseq
  %v1531 = vshrl.u32 %v1530, 7
  %v1532 = vsub.s32 %v1529, %v1531
  %v1533 = vrot.slane %v1523, %v1532
  %v1535 = vunpack.c.l.s4 1983009808
  %v1536 = vunpack.c.0.s8 %v1535
  %v1537 = vlaneseq
  %v1538 = vshrl.u32 %v1537, 7
  %v1539 = vsub.s32 %v1536, %v1538
  %v1540 = vrot.slane %v1524, %v1539
  %v1542 = vunpack.c.l.s4 1983009808
  %v1543 = vunpack.c.0.s8 %v1542
  %v1544 = vlaneseq
  %v1545 = vshrl.u32 %v1544, 7
  %v1546 = vsub.s32 %v1543, %v1545
  %v1547 = vrot.slane %v1525, %v1546
  %v1549 = vunpack.c.l.s4 1983009808
  %v1550 = vunpack.c.0.s8 %v1549
  %v1551 = vlaneseq
  %v1552 = vshrl.u32 %v1551, 7
  %v1553 = vsub.s32 %v1550, %v1552
  %v1554 = vrot.slane %v1526, %v1553
  %v1555 = vcombine.low %v1533, %v1547
  %v1556 = vcombine.high %v1533, %v1547
  %v1557 = vcombine.low %v1540, %v1554
  %v1558 = vcombine.high %v1540, %v1554
  %v1559 = vcombine.low %v1178, %v1179
  %v1560 = vcombine.high %v1178, %v1179
  %v1561 = vcombine.low %v1180, %v1248
  %v1562 = vcombine.high %v1180, %v1248
  %v1564 = vunpack.c.l.s4 1983009808
  %v1565 = vunpack.c.0.s8 %v1564
  %v1566 = vlaneseq
  %v1567 = vshrl.u32 %v1566, 7
  %v1568 = vsub.s32 %v1565, %v1567
  %v1569 = vrot.slane %v1559, %v1568
  %v1571 = vunpack.c.l.s4 1983009808
  %v1572 = vunpack.c.0.s8 %v1571
  %v1573 = vlaneseq
  %v1574 = vshrl.u32 %v1573, 7
  %v1575 = vsub.s32 %v1572, %v1574
  %v1576 = vrot.slane %v1560, %v1575
  %v1578 = vunpack.c.l.s4 1983009808
  %v1579 = vunpack.c.0.s8 %v1578
  %v1580 = vlaneseq
  %v1581 = vshrl.u32 %v1580, 7
  %v1582 = vsub.s32 %v1579, %v1581
  %v1583 = vrot.slane %v1561, %v1582
  %v1585 = vunpack.c.l.s4 1983009808
  %v1586 = vunpack.c.0.s8 %v1585
  %v1587 = vlaneseq
  %v1588 = vshrl.u32 %v1587, 7
  %v1589 = vsub.s32 %v1586, %v1588
  %v1590 = vrot.slane %v1562, %v1589
  %v1591 = vcombine.low %v1569, %v1583
  %v1592 = vcombine.high %v1569, %v1583
  %v1593 = vcombine.low %v1576, %v1590
  %v1594 = vcombine.high %v1576, %v1590
  %v1595 = vcombine.low %v1213, %v1214
  %v1596 = vcombine.high %v1213, %v1214
  %v1597 = vcombine.low %v1215, %v1284
  %v1598 = vcombine.high %v1215, %v1284
  %v1600 = vunpack.c.l.s4 1983009808
  %v1601 = vunpack.c.0.s8 %v1600
  %v1602 = vlaneseq
  %v1603 = vshrl.u32 %v1602, 7
  %v1604 = vsub.s32 %v1601, %v1603
  %v1605 = vrot.slane %v1595, %v1604
  %v1607 = vunpack.c.l.s4 1983009808
  %v1608 = vunpack.c.0.s8 %v1607
  %v1609 = vlaneseq
  %v1610 = vshrl.u32 %v1609, 7
  %v1611 = vsub.s32 %v1608, %v1610
  %v1612 = vrot.slane %v1596, %v1611
  %v1614 = vunpack.c.l.s4 1983009808
  %v1615 = vunpack.c.0.s8 %v1614
  %v1616 = vlaneseq
  %v1617 = vshrl.u32 %v1616, 7
  %v1618 = vsub.s32 %v1615, %v1617
  %v1619 = vrot.slane %v1597, %v1618
  %v1621 = vunpack.c.l.s4 1983009808
  %v1622 = vunpack.c.0.s8 %v1621
  %v1623 = vlaneseq
  %v1624 = vshrl.u32 %v1623, 7
  %v1625 = vsub.s32 %v1622, %v1624
  %v1626 = vrot.slane %v1598, %v1625
  %v1627 = vcombine.low %v1605, %v1619
  %v1628 = vcombine.high %v1605, %v1619
  %v1629 = vcombine.low %v1612, %v1626
  %v1630 = vcombine.high %v1612, %v1626
  %v1631 = vcombine.low %v1249, %v1250
  %v1632 = vcombine.high %v1249, %v1250
  %v1633 = vcombine.low %v1251, %v1320
  %v1634 = vcombine.high %v1251, %v1320
  %v1636 = vunpack.c.l.s4 1983009808
  %v1637 = vunpack.c.0.s8 %v1636
  %v1638 = vlaneseq
  %v1639 = vshrl.u32 %v1638, 7
  %v1640 = vsub.s32 %v1637, %v1639
  %v1641 = vrot.slane %v1631, %v1640
  %v1643 = vunpack.c.l.s4 1983009808
  %v1644 = vunpack.c.0.s8 %v1643
  %v1645 = vlaneseq
  %v1646 = vshrl.u32 %v1645, 7
  %v1647 = vsub.s32 %v1644, %v1646
  %v1648 = vrot.slane %v1632, %v1647
  %v1650 = vunpack.c.l.s4 1983009808
  %v1651 = vunpack.c.0.s8 %v1650
  %v1652 = vlaneseq
  %v1653 = vshrl.u32 %v1652, 7
  %v1654 = vsub.s32 %v1651, %v1653
  %v1655 = vrot.slane %v1633, %v1654
  %v1657 = vunpack.c.l.s4 1983009808
  %v1658 = vunpack.c.0.s8 %v1657
  %v1659 = vlaneseq
  %v1660 = vshrl.u32 %v1659, 7
  %v1661 = vsub.s32 %v1658, %v1660
  %v1662 = vrot.slane %v1634, %v1661
  %v1663 = vcombine.low %v1641, %v1655
  %v1664 = vcombine.high %v1641, %v1655
  %v1665 = vcombine.low %v1648, %v1662
  %v1666 = vcombine.high %v1648, %v1662
  %v1667 = vcombine.low %v1285, %v1286
  %v1668 = vcombine.high %v1285, %v1286
  %v1669 = vcombine.low %v1287, %v1355
  %v1670 = vcombine.high %v1287, %v1355
  %v1672 = vunpack.c.l.s4 1983009808
  %v1673 = vunpack.c.0.s8 %v1672
  %v1674 = vlaneseq
  %v1675 = vshrl.u32 %v1674, 7
  %v1676 = vsub.s32 %v1673, %v1675
  %v1677 = vrot.slane %v1667, %v1676
  %v1679 = vunpack.c.l.s4 1983009808
  %v1680 = vunpack.c.0.s8 %v1679
  %v1681 = vlaneseq
  %v1682 = vshrl.u32 %v1681, 7
  %v1683 = vsub.s32 %v1680, %v1682
  %v1684 = vrot.slane %v1668, %v1683
  %v1686 = vunpack.c.l.s4 1983009808
  %v1687 = vunpack.c.0.s8 %v1686
  %v1688 = vlaneseq
  %v1689 = vshrl.u32 %v1688, 7
  %v1690 = vsub.s32 %v1687, %v1689
  %v1691 = vrot.slane %v1669, %v1690
  %v1693 = vunpack.c.l.s4 1983009808
  %v1694 = vunpack.c.0.s8 %v1693
  %v1695 = vlaneseq
  %v1696 = vshrl.u32 %v1695, 7
  %v1697 = vsub.s32 %v1694, %v1696
  %v1698 = vrot.slane %v1670, %v1697
  %v1699 = vcombine.low %v1677, %v1691
  %v1700 = vcombine.high %v1677, %v1691
  %v1701 = vcombine.low %v1684, %v1698
  %v1702 = vcombine.high %v1684, %v1698
  %v1703 = vcombine.low %v1321, %v1322
  %v1704 = vcombine.high %v1321, %v1322
  %v1706 = vunpack.c.l.s4 1983009808
  %v1707 = vunpack.c.0.s8 %v1706
  %v1708 = vlaneseq
  %v1709 = vshrl.u32 %v1708, 7
  %v1710 = vsub.s32 %v1707, %v1709
  %v1711 = vrot.slane %v1703, %v1710
  %v1713 = vunpack.c.l.s4 1983009808
  %v1714 = vunpack.c.0.s8 %v1713
  %v1715 = vlaneseq
  %v1716 = vshrl.u32 %v1715, 7
  %v1717 = vsub.s32 %v1714, %v1716
  %v1718 = vrot.slane %v1704, %v1717
  %v1719 = vcombine.high %v1711, %v1711
  %v1720 = vcombine.high %v1718, %v1718
  %v1721 = vcombine.low %v1356, %v1357
  %v1722 = vcombine.high %v1356, %v1357
  %v1724 = vunpack.c.l.s4 1983009808
  %v1725 = vunpack.c.0.s8 %v1724
  %v1726 = vlaneseq
  %v1727 = vshrl.u32 %v1726, 7
  %v1728 = vsub.s32 %v1725, %v1727
  %v1729 = vrot.slane %v1721, %v1728
  %v1731 = vunpack.c.l.s4 1983009808
  %v1732 = vunpack.c.0.s8 %v1731
  %v1733 = vlaneseq
  %v1734 = vshrl.u32 %v1733, 7
  %v1735 = vsub.s32 %v1732, %v1734
  %v1736 = vrot.slane %v1722, %v1735
  %v1737 = vcombine.high %v1729, %v1729
  %v1738 = vcombine.high %v1736, %v1736
  %1771 = vmatprep.subr.mxu0 0.0
  %1772 = vmatpush1.msra.mxu0 %v1373
  %1773 = vmatprep.subr.mxu0 0.0
  %1774 = vmatpush1.msra.mxu0 %v1372
  %1775 = vmatprep.subr.mxu0 0.0
  %1776 = vmatpush1.msra.mxu0 %v1371
  %1777 = vmatprep.subr.mxu0 0.0
  %1778 = vmatpush1.msra.mxu0 %v1370
  %1779 = vmatprep.subr.mxu0 0.0
  %1780 = vmatpush1.msra.mxu0 %v1369
  %1781 = vmatprep.subr.mxu0 0.0
  %1782 = vmatpush1.msra.mxu0 %v1368
  %1783 = vmatprep.subr.mxu0 0.0
  %1784 = vmatpush1.msra.mxu0 %v1367
  %1785 = vmatprep.subr.mxu0 0.0
  %1786 = vmatpush1.msra.mxu0 %v1366
  %1787 = vmatprep.subr.mxu0 0.0
  %1788 = vmatpush1.msra.mxu0 %v1365
  %1789 = vmatprep.subr.mxu0 0.0
  %1790 = vmatpush1.msra.mxu0 %v1364
  %1791 = vmatprep.subr.mxu0 0.0
  %1792 = vmatpush1.msra.mxu0 %v1363
  %1793 = vmatprep.subr.mxu0 0.0
  %1794 = vmatpush1.msra.mxu0 %v1362
  %1795 = vmatprep.subr.mxu0 0.0
  %1796 = vmatpush1.msra.mxu0 %v1361
  %1797 = vmatprep.subr.mxu0 0.0
  %1798 = vmatpush1.msra.mxu0 %v1360
  %1799 = vmatprep.subr.mxu0 0.0
  %1800 = vmatpush1.msra.mxu0 %v1359
  %1801 = vmatprep.subr.mxu0 0.0
  %1802 = vmatpush1.msra.mxu0 %v1358
  %1803 = vmatprep.subr.mxu0 0.0
  %1804 = vmatpush2.msra.mxu0 %v1389
  %1805 = vmatprep.subr.mxu0 0.0
  %1806 = vmatpush2.msra.mxu0 %v1388
  %1807 = vmatprep.subr.mxu0 0.0
  %1808 = vmatpush2.msra.mxu0 %v1387
  %1809 = vmatprep.subr.mxu0 0.0
  %1810 = vmatpush2.msra.mxu0 %v1386
  %1811 = vmatprep.subr.mxu0 0.0
  %1812 = vmatpush2.msra.mxu0 %v1385
  %1813 = vmatprep.subr.mxu0 0.0
  %1814 = vmatpush2.msra.mxu0 %v1384
  %1815 = vmatprep.subr.mxu0 0.0
  %1816 = vmatpush2.msra.mxu0 %v1383
  %1817 = vmatprep.subr.mxu0 0.0
  %1818 = vmatpush2.msra.mxu0 %v1382
  %1819 = vmatprep.subr.mxu0 0.0
  %1820 = vmatpush2.msra.mxu0 %v1381
  %1821 = vmatprep.subr.mxu0 0.0
  %1822 = vmatpush2.msra.mxu0 %v1380
  %1823 = vmatprep.subr.mxu0 0.0
  %1824 = vmatpush2.msra.mxu0 %v1379
  %1825 = vmatprep.subr.mxu0 0.0
  %1826 = vmatpush2.msra.mxu0 %v1378
  %1827 = vmatprep.subr.mxu0 0.0
  %1828 = vmatpush2.msra.mxu0 %v1377
  %1829 = vmatprep.subr.mxu0 0.0
  %1830 = vmatpush2.msra.mxu0 %v1376
  %1831 = vmatprep.subr.mxu0 0.0
  %1832 = vmatpush2.msra.mxu0 %v1375
  %1833 = vmatprep.subr.mxu0 0.0
  %1834 = vmatpush2.msra.mxu0 %v1374
  %1835 = vmatprep.mubr.f32.mxu0 %v1520
  %1836 = vmatmul.mubr.f32.gmra.mxu0 %v1519
  %v1837 = vpop.f32.mrf.mxu0
  %v1838 = vadd.f32 %v1486, %v1837
  %v1839 = vpop.f32.mrf.mxu0
  %1840 = vmatprep.mubr.f32.mxu0 %v1592
  %1841 = vmatmul.mubr.f32.gmra.mxu0 %v1591
  %v1842 = vpop.f32.mrf.mxu0
  %v1843 = vadd.f32 %v1486, %v1842
  %v1844 = vpop.f32.mrf.mxu0
  %1845 = vmatprep.mubr.f32.mxu0 %v1664
  %1846 = vmatmul.mubr.f32.gmra.mxu0 %v1663
  %v1847 = vpop.f32.mrf.mxu0
  %v1848 = vadd.f32 %v1486, %v1847
  %v1849 = vpop.f32.mrf.mxu0
  %1850 = vmatprep.mubr.f32.mxu0 %v1719
  %1851 = vmatmul.mubr.f32.gmra.mxu0 %v1711
  %v1852 = vpop.f32.mrf.mxu0
  %v1853 = vadd.f32 %v1486, %v1852
  %v1854 = vpop.f32.mrf.mxu0
  %1855 = vdwg.mxu0
  %1856 = vmatprep.subr.mxu0 0.0
  %1857 = vmatpush1.msra.mxu0 %v1405
  %1858 = vmatprep.subr.mxu0 0.0
  %1859 = vmatpush1.msra.mxu0 %v1404
  %1860 = vmatprep.subr.mxu0 0.0
  %1861 = vmatpush1.msra.mxu0 %v1403
  %1862 = vmatprep.subr.mxu0 0.0
  %1863 = vmatpush1.msra.mxu0 %v1402
  %1864 = vmatprep.subr.mxu0 0.0
  %1865 = vmatpush1.msra.mxu0 %v1401
  %1866 = vmatprep.subr.mxu0 0.0
  %1867 = vmatpush1.msra.mxu0 %v1400
  %1868 = vmatprep.subr.mxu0 0.0
  %1869 = vmatpush1.msra.mxu0 %v1399
  %1870 = vmatprep.subr.mxu0 0.0
  %1871 = vmatpush1.msra.mxu0 %v1398
  %1872 = vmatprep.subr.mxu0 0.0
  %1873 = vmatpush1.msra.mxu0 %v1397
  %1874 = vmatprep.subr.mxu0 0.0
  %1875 = vmatpush1.msra.mxu0 %v1396
  %1876 = vmatprep.subr.mxu0 0.0
  %1877 = vmatpush1.msra.mxu0 %v1395
  %1878 = vmatprep.subr.mxu0 0.0
  %1879 = vmatpush1.msra.mxu0 %v1394
  %1880 = vmatprep.subr.mxu0 0.0
  %1881 = vmatpush1.msra.mxu0 %v1393
  %1882 = vmatprep.subr.mxu0 0.0
  %1883 = vmatpush1.msra.mxu0 %v1392
  %1884 = vmatprep.subr.mxu0 0.0
  %1885 = vmatpush1.msra.mxu0 %v1391
  %1886 = vmatprep.subr.mxu0 0.0
  %1887 = vmatpush1.msra.mxu0 %v1390
  %1888 = vmatprep.subr.mxu0 0.0
  %1889 = vmatpush2.msra.mxu0 %v1421
  %1890 = vmatprep.subr.mxu0 0.0
  %1891 = vmatpush2.msra.mxu0 %v1420
  %1892 = vmatprep.subr.mxu0 0.0
  %1893 = vmatpush2.msra.mxu0 %v1419
  %1894 = vmatprep.subr.mxu0 0.0
  %1895 = vmatpush2.msra.mxu0 %v1418
  %1896 = vmatprep.subr.mxu0 0.0
  %1897 = vmatpush2.msra.mxu0 %v1417
  %1898 = vmatprep.subr.mxu0 0.0
  %1899 = vmatpush2.msra.mxu0 %v1416
  %1900 = vmatprep.subr.mxu0 0.0
  %1901 = vmatpush2.msra.mxu0 %v1415
  %1902 = vmatprep.subr.mxu0 0.0
  %1903 = vmatpush2.msra.mxu0 %v1414
  %1904 = vmatprep.subr.mxu0 0.0
  %1905 = vmatpush2.msra.mxu0 %v1413
  %1906 = vmatprep.subr.mxu0 0.0
  %1907 = vmatpush2.msra.mxu0 %v1412
  %1908 = vmatprep.subr.mxu0 0.0
  %1909 = vmatpush2.msra.mxu0 %v1411
  %1910 = vmatprep.subr.mxu0 0.0
  %1911 = vmatpush2.msra.mxu0 %v1410
  %1912 = vmatprep.subr.mxu0 0.0
  %1913 = vmatpush2.msra.mxu0 %v1409
  %1914 = vmatprep.subr.mxu0 0.0
  %1915 = vmatpush2.msra.mxu0 %v1408
  %1916 = vmatprep.subr.mxu0 0.0
  %1917 = vmatpush2.msra.mxu0 %v1407
  %1918 = vmatprep.subr.mxu0 0.0
  %1919 = vmatpush2.msra.mxu0 %v1406
  %1920 = vmatprep.mubr.f32.mxu0 %v1522
  %1921 = vmatmul.mubr.f32.gmra.mxu0 %v1521
  %v1922 = vpop.f32.mrf.mxu0
  %v1923 = vadd.f32 %v1838, %v1922
  %v1924 = vpop.f32.mrf.mxu0
  %1925 = vmatprep.mubr.f32.mxu0 %v1594
  %1926 = vmatmul.mubr.f32.gmra.mxu0 %v1593
  %v1927 = vpop.f32.mrf.mxu0
  %v1928 = vadd.f32 %v1843, %v1927
  %v1929 = vpop.f32.mrf.mxu0
  %1930 = vmatprep.mubr.f32.mxu0 %v1666
  %1931 = vmatmul.mubr.f32.gmra.mxu0 %v1665
  %v1932 = vpop.f32.mrf.mxu0
  %v1933 = vadd.f32 %v1848, %v1932
  %v1934 = vpop.f32.mrf.mxu0
  %1935 = vmatprep.mubr.f32.mxu0 %v1720
  %1936 = vmatmul.mubr.f32.gmra.mxu0 %v1718
  %v1937 = vpop.f32.mrf.mxu0
  %v1938 = vadd.f32 %v1853, %v1937
  %v1939 = vpop.f32.mrf.mxu0
  %1940 = vdwg.mxu0
  %1941 = vmatprep.subr.mxu0 0.0
  %1942 = vmatpush1.msra.mxu0 %v1437
  %1943 = vmatprep.subr.mxu0 0.0
  %1944 = vmatpush1.msra.mxu0 %v1436
  %1945 = vmatprep.subr.mxu0 0.0
  %1946 = vmatpush1.msra.mxu0 %v1435
  %1947 = vmatprep.subr.mxu0 0.0
  %1948 = vmatpush1.msra.mxu0 %v1434
  %1949 = vmatprep.subr.mxu0 0.0
  %1950 = vmatpush1.msra.mxu0 %v1433
  %1951 = vmatprep.subr.mxu0 0.0
  %1952 = vmatpush1.msra.mxu0 %v1432
  %1953 = vmatprep.subr.mxu0 0.0
  %1954 = vmatpush1.msra.mxu0 %v1431
  %1955 = vmatprep.subr.mxu0 0.0
  %1956 = vmatpush1.msra.mxu0 %v1430
  %1957 = vmatprep.subr.mxu0 0.0
  %1958 = vmatpush1.msra.mxu0 %v1429
  %1959 = vmatprep.subr.mxu0 0.0
  %1960 = vmatpush1.msra.mxu0 %v1428
  %1961 = vmatprep.subr.mxu0 0.0
  %1962 = vmatpush1.msra.mxu0 %v1427
  %1963 = vmatprep.subr.mxu0 0.0
  %1964 = vmatpush1.msra.mxu0 %v1426
  %1965 = vmatprep.subr.mxu0 0.0
  %1966 = vmatpush1.msra.mxu0 %v1425
  %1967 = vmatprep.subr.mxu0 0.0
  %1968 = vmatpush1.msra.mxu0 %v1424
  %1969 = vmatprep.subr.mxu0 0.0
  %1970 = vmatpush1.msra.mxu0 %v1423
  %1971 = vmatprep.subr.mxu0 0.0
  %1972 = vmatpush1.msra.mxu0 %v1422
  %1973 = vmatprep.subr.mxu0 0.0
  %1974 = vmatpush2.msra.mxu0 %v1453
  %1975 = vmatprep.subr.mxu0 0.0
  %1976 = vmatpush2.msra.mxu0 %v1452
  %1977 = vmatprep.subr.mxu0 0.0
  %1978 = vmatpush2.msra.mxu0 %v1451
  %1979 = vmatprep.subr.mxu0 0.0
  %1980 = vmatpush2.msra.mxu0 %v1450
  %1981 = vmatprep.subr.mxu0 0.0
  %1982 = vmatpush2.msra.mxu0 %v1449
  %1983 = vmatprep.subr.mxu0 0.0
  %1984 = vmatpush2.msra.mxu0 %v1448
  %1985 = vmatprep.subr.mxu0 0.0
  %1986 = vmatpush2.msra.mxu0 %v1447
  %1987 = vmatprep.subr.mxu0 0.0
  %1988 = vmatpush2.msra.mxu0 %v1446
  %1989 = vmatprep.subr.mxu0 0.0
  %1990 = vmatpush2.msra.mxu0 %v1445
  %1991 = vmatprep.subr.mxu0 0.0
  %1992 = vmatpush2.msra.mxu0 %v1444
  %1993 = vmatprep.subr.mxu0 0.0
  %1994 = vmatpush2.msra.mxu0 %v1443
  %1995 = vmatprep.subr.mxu0 0.0
  %1996 = vmatpush2.msra.mxu0 %v1442
  %1997 = vmatprep.subr.mxu0 0.0
  %1998 = vmatpush2.msra.mxu0 %v1441
  %1999 = vmatprep.subr.mxu0 0.0
  %2000 = vmatpush2.msra.mxu0 %v1440
  %2001 = vmatprep.subr.mxu0 0.0
  %2002 = vmatpush2.msra.mxu0 %v1439
  %2003 = vmatprep.subr.mxu0 0.0
  %2004 = vmatpush2.msra.mxu0 %v1438
  %2005 = vmatprep.mubr.f32.mxu0 %v1556
  %2006 = vmatmul.mubr.f32.gmra.mxu0 %v1555
  %v2007 = vpop.f32.mrf.mxu0
  %v2008 = vadd.f32 %v1923, %v2007
  %v2009 = vpop.f32.mrf.mxu0
  %2010 = vmatprep.mubr.f32.mxu0 %v1628
  %2011 = vmatmul.mubr.f32.gmra.mxu0 %v1627
  %v2012 = vpop.f32.mrf.mxu0
  %v2013 = vadd.f32 %v1928, %v2012
  %v2014 = vpop.f32.mrf.mxu0
  %2015 = vmatprep.mubr.f32.mxu0 %v1700
  %2016 = vmatmul.mubr.f32.gmra.mxu0 %v1699
  %v2017 = vpop.f32.mrf.mxu0
  %v2018 = vadd.f32 %v1933, %v2017
  %v2019 = vpop.f32.mrf.mxu0
  %2020 = vmatprep.mubr.f32.mxu0 %v1737
  %2021 = vmatmul.mubr.f32.gmra.mxu0 %v1729
  %v2022 = vpop.f32.mrf.mxu0
  %v2023 = vadd.f32 %v1938, %v2022
  %v2024 = vpop.f32.mrf.mxu0
  %2025 = vdwg.mxu0
  %2026 = vmatprep.subr.mxu0 0.0
  %2027 = vmatpush1.msra.mxu0 %v1469
  %2028 = vmatprep.subr.mxu0 0.0
  %2029 = vmatpush1.msra.mxu0 %v1468
  %2030 = vmatprep.subr.mxu0 0.0
  %2031 = vmatpush1.msra.mxu0 %v1467
  %2032 = vmatprep.subr.mxu0 0.0
  %2033 = vmatpush1.msra.mxu0 %v1466
  %2034 = vmatprep.subr.mxu0 0.0
  %2035 = vmatpush1.msra.mxu0 %v1465
  %2036 = vmatprep.subr.mxu0 0.0
  %2037 = vmatpush1.msra.mxu0 %v1464
  %2038 = vmatprep.subr.mxu0 0.0
  %2039 = vmatpush1.msra.mxu0 %v1463
  %2040 = vmatprep.subr.mxu0 0.0
  %2041 = vmatpush1.msra.mxu0 %v1462
  %2042 = vmatprep.subr.mxu0 0.0
  %2043 = vmatpush1.msra.mxu0 %v1461
  %2044 = vmatprep.subr.mxu0 0.0
  %2045 = vmatpush1.msra.mxu0 %v1460
  %2046 = vmatprep.subr.mxu0 0.0
  %2047 = vmatpush1.msra.mxu0 %v1459
  %2048 = vmatprep.subr.mxu0 0.0
  %2049 = vmatpush1.msra.mxu0 %v1458
  %2050 = vmatprep.subr.mxu0 0.0
  %2051 = vmatpush1.msra.mxu0 %v1457
  %2052 = vmatprep.subr.mxu0 0.0
  %2053 = vmatpush1.msra.mxu0 %v1456
  %2054 = vmatprep.subr.mxu0 0.0
  %2055 = vmatpush1.msra.mxu0 %v1455
  %2056 = vmatprep.subr.mxu0 0.0
  %2057 = vmatpush1.msra.mxu0 %v1454
  %2058 = vmatprep.subr.mxu0 0.0
  %2059 = vmatpush2.msra.mxu0 %v1485
  %2060 = vmatprep.subr.mxu0 0.0
  %2061 = vmatpush2.msra.mxu0 %v1484
  %2062 = vmatprep.subr.mxu0 0.0
  %2063 = vmatpush2.msra.mxu0 %v1483
  %2064 = vmatprep.subr.mxu0 0.0
  %2065 = vmatpush2.msra.mxu0 %v1482
  %2066 = vmatprep.subr.mxu0 0.0
  %2067 = vmatpush2.msra.mxu0 %v1481
  %2068 = vmatprep.subr.mxu0 0.0
  %2069 = vmatpush2.msra.mxu0 %v1480
  %2070 = vmatprep.subr.mxu0 0.0
  %2071 = vmatpush2.msra.mxu0 %v1479
  %2072 = vmatprep.subr.mxu0 0.0
  %2073 = vmatpush2.msra.mxu0 %v1478
  %2074 = vmatprep.subr.mxu0 0.0
  %2075 = vmatpush2.msra.mxu0 %v1477
  %2076 = vmatprep.subr.mxu0 0.0
  %2077 = vmatpush2.msra.mxu0 %v1476
  %2078 = vmatprep.subr.mxu0 0.0
  %2079 = vmatpush2.msra.mxu0 %v1475
  %2080 = vmatprep.subr.mxu0 0.0
  %2081 = vmatpush2.msra.mxu0 %v1474
  %2082 = vmatprep.subr.mxu0 0.0
  %2083 = vmatpush2.msra.mxu0 %v1473
  %2084 = vmatprep.subr.mxu0 0.0
  %2085 = vmatpush2.msra.mxu0 %v1472
  %2086 = vmatprep.subr.mxu0 0.0
  %2087 = vmatpush2.msra.mxu0 %v1471
  %2088 = vmatprep.subr.mxu0 0.0
  %2089 = vmatpush2.msra.mxu0 %v1470
  %2090 = vmatprep.mubr.f32.mxu0 %v1558
  %2091 = vmatmul.mubr.f32.gmra.mxu0 %v1557
  %v2092 = vpop.f32.mrf.mxu0
  %v2093 = vadd.f32 %v2008, %v2092
  %v2094 = vpop.f32.mrf.mxu0
  %2095 = vmatprep.mubr.f32.mxu0 %v1630
  %2096 = vmatmul.mubr.f32.gmra.mxu0 %v1629
  %v2097 = vpop.f32.mrf.mxu0
  %v2098 = vadd.f32 %v2013, %v2097
  %v2099 = vpop.f32.mrf.mxu0
  %2100 = vmatprep.mubr.f32.mxu0 %v1702
  %2101 = vmatmul.mubr.f32.gmra.mxu0 %v1701
  %v2102 = vpop.f32.mrf.mxu0
  %v2103 = vadd.f32 %v2018, %v2102
  %v2104 = vpop.f32.mrf.mxu0
  %2105 = vmatprep.mubr.f32.mxu0 %v1738
  %2106 = vmatmul.mubr.f32.gmra.mxu0 %v1736
  %v2107 = vpop.f32.mrf.mxu0
  %v2108 = vadd.f32 %v2023, %v2107
  %v2109 = vpop.f32.mrf.mxu0
  %2110 = vdwg.mxu0
  %v2111 = vadd.f32 %v2093, %v2098
  %v2112 = vadd.f32 %v2111, %v2103
  %vm2113 = vcmask 1043456
  %v2114 = vsel %vm2113, %v2108, 0.0
  %v2115 = vadd.f32 %v2112, %v2114
  %v2116 = vrot.slane %v2115, 4
  %v2117 = vadd.f32 %v2115, %v2116
  %v2118 = vrot.slane %v2117, 2
  %v2119 = vadd.f32 %v2117, %v2118
  %v2120 = vrot.slane %v2119, 1
  %v2121 = vadd.f32 %v2119, %v2120
  %v2122 = vmul.f32 %v2121, 0.035714287
  %v2123 = vsub.f32 %v2093, %v2122
  %v2124 = vsub.f32 %v2098, %v2122
  %v2125 = vsub.f32 %v2103, %v2122
  %v2126 = vsub.f32 %v2108, %v2122
  %v2127 = vmul.f32 %v2123, %v2123
  %v2128 = vmul.f32 %v2124, %v2124
  %v2129 = vmul.f32 %v2125, %v2125
  %v2130 = vmul.f32 %v2126, %v2126
  %v2131 = vadd.f32 %v2127, %v2128
  %v2132 = vadd.f32 %v2131, %v2129
  %v2133 = vsel %vm2113, %v2130, 0.0
  %v2134 = vadd.f32 %v2132, %v2133
  %v2135 = vrot.slane %v2134, 4
  %v2136 = vadd.f32 %v2134, %v2135
  %v2137 = vrot.slane %v2136, 2
  %v2138 = vadd.f32 %v2136, %v2137
  %v2139 = vrot.slane %v2138, 1
  %v2140 = vadd.f32 %v2138, %v2139
  %v2141 = vmul.f32 %v2140, 0.035714287
  %v2142 = vadd.f32 %v2141, 1e-05
  %v2143 = vrsqrt.pop %v2142
  %v2144 = vmul.f32 %v2123, %v2143
  %v2145 = vmul.f32 %v2124, %v2143
  %v2146 = vmul.f32 %v2125, %v2143
  %v2147 = vmul.f32 %v2126, %v2143
  %v2148 = vld [vmem:[%s5 + $0x4] ss:$0 sm:$0xff]
  %v2149 = vmul.f32 %v2144, %v2148
  %v2150 = vmul.f32 %v2145, %v2148
  %v2151 = vmul.f32 %v2146, %v2148
  %v2152 = vmul.f32 %v2147, %v2148
  %v2153 = vld [vmem:[%s5 + $0x5] ss:$0 sm:$0xff]
  %v2154 = vadd.f32 %v2149, %v2153
  %v2155 = vadd.f32 %v2150, %v2153
  %v2156 = vadd.f32 %v2151, %v2153
  %v2157 = vadd.f32 %v2152, %v2153
  %vm2158 = vcmp.gt.f32.partialorder %v2154, 0.0
  %vm2159 = vcmp.gt.f32.partialorder %v2155, 0.0
  %vm2160 = vcmp.gt.f32.partialorder %v2156, 0.0
  %vm2161 = vcmp.gt.f32.partialorder %v2157, 0.0
  %v2162 = vmul.f32 %v2154, 0.01
  %v2163 = vmul.f32 %v2155, 0.01
  %v2164 = vmul.f32 %v2156, 0.01
  %v2165 = vmul.f32 %v2157, 0.01
  %v2166 = vsel %vm2158, %v2154, %v2162
  %v2167 = vsel %vm2159, %v2155, %v2163
  %v2168 = vsel %vm2160, %v2156, %v2164
  %v2169 = vsel %vm2161, %v2157, %v2165
  %v2174 = vcombine.high %v2166, %v2166
  %v2176 = vunpack.c.l.s4 1983009808
  %v2177 = vunpack.c.0.s8 %v2176
  %v2178 = vlaneseq
  %v2179 = vshrl.u32 %v2178, 7
  %v2180 = vsub.s32 %v2177, %v2179
  %v2181 = vrot.slane %v2166, %v2180
  %v2183 = vunpack.c.l.s4 1983009808
  %v2184 = vunpack.c.0.s8 %v2183
  %v2185 = vlaneseq
  %v2186 = vshrl.u32 %v2185, 7
  %v2187 = vsub.s32 %v2184, %v2186
  %v2188 = vrot.slane %v2174, %v2187
  %v2189 = vcombine.high %v2181, %v2181
  %v2190 = vcombine.high %v2188, %v2188
  %v2191 = vcombine.high %v2167, %v2167
  %v2193 = vunpack.c.l.s4 1983009808
  %v2194 = vunpack.c.0.s8 %v2193
  %v2195 = vlaneseq
  %v2196 = vshrl.u32 %v2195, 7
  %v2197 = vsub.s32 %v2194, %v2196
  %v2198 = vrot.slane %v2167, %v2197
  %v2200 = vunpack.c.l.s4 1983009808
  %v2201 = vunpack.c.0.s8 %v2200
  %v2202 = vlaneseq
  %v2203 = vshrl.u32 %v2202, 7
  %v2204 = vsub.s32 %v2201, %v2203
  %v2205 = vrot.slane %v2191, %v2204
  %v2206 = vcombine.high %v2198, %v2198
  %v2207 = vcombine.high %v2205, %v2205
  %v2208 = vcombine.high %v2168, %v2168
  %v2210 = vunpack.c.l.s4 1983009808
  %v2211 = vunpack.c.0.s8 %v2210
  %v2212 = vlaneseq
  %v2213 = vshrl.u32 %v2212, 7
  %v2214 = vsub.s32 %v2211, %v2213
  %v2215 = vrot.slane %v2168, %v2214
  %v2217 = vunpack.c.l.s4 1983009808
  %v2218 = vunpack.c.0.s8 %v2217
  %v2219 = vlaneseq
  %v2220 = vshrl.u32 %v2219, 7
  %v2221 = vsub.s32 %v2218, %v2220
  %v2222 = vrot.slane %v2208, %v2221
  %v2223 = vcombine.high %v2215, %v2215
  %v2224 = vcombine.high %v2222, %v2222
  %v2226 = vunpack.c.l.s4 1983009808
  %v2227 = vunpack.c.0.s8 %v2226
  %v2228 = vlaneseq
  %v2229 = vshrl.u32 %v2228, 7
  %v2230 = vsub.s32 %v2227, %v2229
  %v2231 = vrot.slane %v2169, %v2230
  %v2232 = vcombine.high %v2231, %v2231
  %v2233 = vcombine.low %v2181, %v2189
  %v2234 = vcombine.low %v2188, %v2190
  %v2236 = vunpack.c.l.s4 1983009808
  %v2237 = vunpack.c.0.s8 %v2236
  %v2238 = vlaneseq
  %v2239 = vshrl.u32 %v2238, 7
  %v2240 = vsub.s32 %v2237, %v2239
  %v2241 = vrot.slane %v2233, %v2240
  %v2243 = vunpack.c.l.s4 1983009808
  %v2244 = vunpack.c.0.s8 %v2243
  %v2245 = vlaneseq
  %v2246 = vshrl.u32 %v2245, 7
  %v2247 = vsub.s32 %v2244, %v2246
  %v2248 = vrot.slane %v2234, %v2247
  %v2249 = vcombine.low %v2241, %v2248
  %v2250 = vcombine.low %v2198, %v2206
  %v2252 = vunpack.c.l.s4 1983009808
  %v2253 = vunpack.c.0.s8 %v2252
  %v2254 = vlaneseq
  %v2255 = vshrl.u32 %v2254, 7
  %v2256 = vsub.s32 %v2253, %v2255
  %v2257 = vrot.slane %v2250, %v2256
  %v2259 = vunpack.c.l.s4 1983009808
  %v2260 = vunpack.c.0.s8 %v2259
  %v2261 = vlaneseq
  %v2262 = vshrl.u32 %v2261, 7
  %v2263 = vsub.s32 %v2260, %v2262
  %v2264 = vrot.slane %v2205, %v2263
  %v2265 = vcombine.low %v2257, %v2264
  %v2266 = vcombine.low %v2207, %v2215
  %v2267 = vcombine.low %v2223, %v2222
  %v2269 = vunpack.c.l.s4 1983009808
  %v2270 = vunpack.c.0.s8 %v2269
  %v2271 = vlaneseq
  %v2272 = vshrl.u32 %v2271, 7
  %v2273 = vsub.s32 %v2270, %v2272
  %v2274 = vrot.slane %v2266, %v2273
  %v2276 = vunpack.c.l.s4 1983009808
  %v2277 = vunpack.c.0.s8 %v2276
  %v2278 = vlaneseq
  %v2279 = vshrl.u32 %v2278, 7
  %v2280 = vsub.s32 %v2277, %v2279
  %v2281 = vrot.slane %v2267, %v2280
  %v2282 = vcombine.low %v2274, %v2281
  %v2283 = vcombine.low %v2224, %v2231
  %v2285 = vunpack.c.l.s4 1983009808
  %v2286 = vunpack.c.0.s8 %v2285
  %v2287 = vlaneseq
  %v2288 = vshrl.u32 %v2287, 7
  %v2289 = vsub.s32 %v2286, %v2288
  %v2290 = vrot.slane %v2283, %v2289
  %v2292 = vunpack.c.l.s4 1983009808
  %v2293 = vunpack.c.0.s8 %v2292
  %v2294 = vlaneseq
  %v2295 = vshrl.u32 %v2294, 7
  %v2296 = vsub.s32 %v2293, %v2295
  %v2297 = vrot.slane %v2232, %v2296
  %v2298 = vcombine.low %v2290, %v2297
  %v2299 = vrot.slane %v2249, 5
  %v2300 = vrot.slane %v2265, 5
  %v2301 = vsel %vm31, %v2299, %v2300
  %v2302 = vrot.slane %v2282, 5
  %v2303 = vrot.slane %v2298, 5
  %v2304 = vsel %vm31, %v2302, %v2303
  %v2309 = vsel %vm31, 0.0, %v2299
  %v2310 = vsel %vm31, 0.0, %v2302
  %vm2311 = vcmask 1040384
  %v2312 = vsel %vm2311, %v2300, 0.0
  %v2313 = vsel %vm2311, %v2303, 0.0
  %v2318 = vrot.slane %v2309, 1
  %v2319 = vrot.slane %v2301, 1
  %v2320 = vsel %vm40, %v2318, %v2319
  %v2321 = vrot.slane %v2312, 1
  %v2322 = vsel %vm40, %v2319, %v2321
  %v2323 = vrot.slane %v2310, 1
  %v2324 = vrot.slane %v2304, 1
  %v2325 = vsel %vm40, %v2323, %v2324
  %v2326 = vrot.slane %v2313, 1
  %v2327 = vsel %vm40, %v2324, %v2326
  %v2328 = vrot.slane %v2309, 2
  %v2329 = vrot.slane %v2301, 2
  %v2330 = vsel %vm59, %v2328, %v2329
  %v2331 = vrot.slane %v2312, 2
  %v2332 = vsel %vm59, %v2329, %v2331
  %v2333 = vrot.slane %v2310, 2
  %v2334 = vrot.slane %v2304, 2
  %v2335 = vsel %vm59, %v2333, %v2334
  %v2336 = vrot.slane %v2313, 2
  %v2337 = vsel %vm59, %v2334, %v2336
  %v2338 = vrot.slane %v2309, 3
  %v2339 = vrot.slane %v2301, 3
  %v2340 = vsel %vm78, %v2338, %v2339
  %v2341 = vrot.slane %v2312, 3
  %v2342 = vsel %vm78, %v2339, %v2341
  %v2343 = vrot.slane %v2310, 3
  %v2344 = vrot.slane %v2304, 3
  %v2345 = vsel %vm78, %v2343, %v2344
  %v2346 = vrot.slane %v2313, 3
  %v2347 = vsel %vm78, %v2344, %v2346
  %v2348 = vcombine.low %v2309, %v2320
  %v2349 = vcombine.high %v2309, %v2320
  %v2350 = vcombine.low %v2330, %v2340
  %v2351 = vcombine.high %v2330, %v2340
  %v2353 = vunpack.c.l.s4 1966171168
  %v2354 = vunpack.c.0.s8 %v2353
  %v2355 = vlaneseq
  %v2356 = vshrl.u32 %v2355, 7
  %v2357 = vsub.s32 %v2354, %v2356
  %v2358 = vrot.slane %v2348, %v2357
  %v2360 = vunpack.c.l.s4 1966171168
  %v2361 = vunpack.c.0.s8 %v2360
  %v2362 = vlaneseq
  %v2363 = vshrl.u32 %v2362, 7
  %v2364 = vsub.s32 %v2361, %v2363
  %v2365 = vrot.slane %v2349, %v2364
  %v2367 = vunpack.c.l.s4 1966171168
  %v2368 = vunpack.c.0.s8 %v2367
  %v2369 = vlaneseq
  %v2370 = vshrl.u32 %v2369, 7
  %v2371 = vsub.s32 %v2368, %v2370
  %v2372 = vrot.slane %v2350, %v2371
  %v2374 = vunpack.c.l.s4 1966171168
  %v2375 = vunpack.c.0.s8 %v2374
  %v2376 = vlaneseq
  %v2377 = vshrl.u32 %v2376, 7
  %v2378 = vsub.s32 %v2375, %v2377
  %v2379 = vrot.slane %v2351, %v2378
  %v2380 = vcombine.low %v2358, %v2372
  %v2381 = vcombine.high %v2358, %v2372
  %v2382 = vcombine.low %v2365, %v2379
  %v2383 = vcombine.high %v2365, %v2379
  %v2385 = vunpack.c.l.s4 1966171168
  %v2386 = vunpack.c.0.s8 %v2385
  %v2387 = vlaneseq
  %v2388 = vshrl.u32 %v2387, 7
  %v2389 = vsub.s32 %v2386, %v2388
  %v2390 = vrot.slane %v2380, %v2389
  %v2392 = vunpack.c.l.s4 1966171168
  %v2393 = vunpack.c.0.s8 %v2392
  %v2394 = vlaneseq
  %v2395 = vshrl.u32 %v2394, 7
  %v2396 = vsub.s32 %v2393, %v2395
  %v2397 = vrot.slane %v2382, %v2396
  %v2399 = vunpack.c.l.s4 1966171168
  %v2400 = vunpack.c.0.s8 %v2399
  %v2401 = vlaneseq
  %v2402 = vshrl.u32 %v2401, 7
  %v2403 = vsub.s32 %v2400, %v2402
  %v2404 = vrot.slane %v2381, %v2403
  %v2406 = vunpack.c.l.s4 1966171168
  %v2407 = vunpack.c.0.s8 %v2406
  %v2408 = vlaneseq
  %v2409 = vshrl.u32 %v2408, 7
  %v2410 = vsub.s32 %v2407, %v2409
  %v2411 = vrot.slane %v2383, %v2410
  %v2412 = vcombine.high %v2390, %v2390
  %v2413 = vcombine.high %v2397, %v2397
  %v2414 = vcombine.high %v2404, %v2404
  %v2415 = vcombine.high %v2411, %v2411
  %v2416 = vcombine.low %v2301, %v2322
  %v2417 = vcombine.high %v2301, %v2322
  %v2418 = vcombine.low %v2332, %v2342
  %v2419 = vcombine.high %v2332, %v2342
  %v2421 = vunpack.c.l.s4 1966171168
  %v2422 = vunpack.c.0.s8 %v2421
  %v2423 = vlaneseq
  %v2424 = vshrl.u32 %v2423, 7
  %v2425 = vsub.s32 %v2422, %v2424
  %v2426 = vrot.slane %v2416, %v2425
  %v2428 = vunpack.c.l.s4 1966171168
  %v2429 = vunpack.c.0.s8 %v2428
  %v2430 = vlaneseq
  %v2431 = vshrl.u32 %v2430, 7
  %v2432 = vsub.s32 %v2429, %v2431
  %v2433 = vrot.slane %v2417, %v2432
  %v2435 = vunpack.c.l.s4 1966171168
  %v2436 = vunpack.c.0.s8 %v2435
  %v2437 = vlaneseq
  %v2438 = vshrl.u32 %v2437, 7
  %v2439 = vsub.s32 %v2436, %v2438
  %v2440 = vrot.slane %v2418, %v2439
  %v2442 = vunpack.c.l.s4 1966171168
  %v2443 = vunpack.c.0.s8 %v2442
  %v2444 = vlaneseq
  %v2445 = vshrl.u32 %v2444, 7
  %v2446 = vsub.s32 %v2443, %v2445
  %v2447 = vrot.slane %v2419, %v2446
  %v2448 = vcombine.low %v2426, %v2440
  %v2449 = vcombine.high %v2426, %v2440
  %v2450 = vcombine.low %v2433, %v2447
  %v2451 = vcombine.high %v2433, %v2447
  %v2453 = vunpack.c.l.s4 1966171168
  %v2454 = vunpack.c.0.s8 %v2453
  %v2455 = vlaneseq
  %v2456 = vshrl.u32 %v2455, 7
  %v2457 = vsub.s32 %v2454, %v2456
  %v2458 = vrot.slane %v2448, %v2457
  %v2460 = vunpack.c.l.s4 1966171168
  %v2461 = vunpack.c.0.s8 %v2460
  %v2462 = vlaneseq
  %v2463 = vshrl.u32 %v2462, 7
  %v2464 = vsub.s32 %v2461, %v2463
  %v2465 = vrot.slane %v2450, %v2464
  %v2467 = vunpack.c.l.s4 1966171168
  %v2468 = vunpack.c.0.s8 %v2467
  %v2469 = vlaneseq
  %v2470 = vshrl.u32 %v2469, 7
  %v2471 = vsub.s32 %v2468, %v2470
  %v2472 = vrot.slane %v2449, %v2471
  %v2474 = vunpack.c.l.s4 1966171168
  %v2475 = vunpack.c.0.s8 %v2474
  %v2476 = vlaneseq
  %v2477 = vshrl.u32 %v2476, 7
  %v2478 = vsub.s32 %v2475, %v2477
  %v2479 = vrot.slane %v2451, %v2478
  %v2480 = vcombine.high %v2458, %v2458
  %v2481 = vcombine.high %v2465, %v2465
  %v2482 = vcombine.high %v2472, %v2472
  %v2483 = vcombine.high %v2479, %v2479
  %v2484 = vcombine.low %v2312, %v2321
  %v2485 = vcombine.low %v2331, %v2341
  %v2487 = vunpack.c.l.s4 1966171168
  %v2488 = vunpack.c.0.s8 %v2487
  %v2489 = vlaneseq
  %v2490 = vshrl.u32 %v2489, 7
  %v2491 = vsub.s32 %v2488, %v2490
  %v2492 = vrot.slane %v2484, %v2491
  %v2494 = vunpack.c.l.s4 1966171168
  %v2495 = vunpack.c.0.s8 %v2494
  %v2496 = vlaneseq
  %v2497 = vshrl.u32 %v2496, 7
  %v2498 = vsub.s32 %v2495, %v2497
  %v2499 = vrot.slane %v2485, %v2498
  %v2500 = vcombine.low %v2492, %v2499
  %v2502 = vunpack.c.l.s4 1966171168
  %v2503 = vunpack.c.0.s8 %v2502
  %v2504 = vlaneseq
  %v2505 = vshrl.u32 %v2504, 7
  %v2506 = vsub.s32 %v2503, %v2505
  %v2507 = vrot.slane %v2500, %v2506
  %v2508 = vcombine.low %v2310, %v2325
  %v2509 = vcombine.high %v2310, %v2325
  %v2510 = vcombine.low %v2335, %v2345
  %v2511 = vcombine.high %v2335, %v2345
  %v2513 = vunpack.c.l.s4 1966171168
  %v2514 = vunpack.c.0.s8 %v2513
  %v2515 = vlaneseq
  %v2516 = vshrl.u32 %v2515, 7
  %v2517 = vsub.s32 %v2514, %v2516
  %v2518 = vrot.slane %v2508, %v2517
  %v2520 = vunpack.c.l.s4 1966171168
  %v2521 = vunpack.c.0.s8 %v2520
  %v2522 = vlaneseq
  %v2523 = vshrl.u32 %v2522, 7
  %v2524 = vsub.s32 %v2521, %v2523
  %v2525 = vrot.slane %v2509, %v2524
  %v2527 = vunpack.c.l.s4 1966171168
  %v2528 = vunpack.c.0.s8 %v2527
  %v2529 = vlaneseq
  %v2530 = vshrl.u32 %v2529, 7
  %v2531 = vsub.s32 %v2528, %v2530
  %v2532 = vrot.slane %v2510, %v2531
  %v2534 = vunpack.c.l.s4 1966171168
  %v2535 = vunpack.c.0.s8 %v2534
  %v2536 = vlaneseq
  %v2537 = vshrl.u32 %v2536, 7
  %v2538 = vsub.s32 %v2535, %v2537
  %v2539 = vrot.slane %v2511, %v2538
  %v2540 = vcombine.low %v2518, %v2532
  %v2541 = vcombine.high %v2518, %v2532
  %v2542 = vcombine.low %v2525, %v2539
  %v2543 = vcombine.high %v2525, %v2539
  %v2545 = vunpack.c.l.s4 1966171168
  %v2546 = vunpack.c.0.s8 %v2545
  %v2547 = vlaneseq
  %v2548 = vshrl.u32 %v2547, 7
  %v2549 = vsub.s32 %v2546, %v2548
  %v2550 = vrot.slane %v2540, %v2549
  %v2552 = vunpack.c.l.s4 1966171168
  %v2553 = vunpack.c.0.s8 %v2552
  %v2554 = vlaneseq
  %v2555 = vshrl.u32 %v2554, 7
  %v2556 = vsub.s32 %v2553, %v2555
  %v2557 = vrot.slane %v2542, %v2556
  %v2559 = vunpack.c.l.s4 1966171168
  %v2560 = vunpack.c.0.s8 %v2559
  %v2561 = vlaneseq
  %v2562 = vshrl.u32 %v2561, 7
  %v2563 = vsub.s32 %v2560, %v2562
  %v2564 = vrot.slane %v2541, %v2563
  %v2566 = vunpack.c.l.s4 1966171168
  %v2567 = vunpack.c.0.s8 %v2566
  %v2568 = vlaneseq
  %v2569 = vshrl.u32 %v2568, 7
  %v2570 = vsub.s32 %v2567, %v2569
  %v2571 = vrot.slane %v2543, %v2570
  %v2572 = vcombine.high %v2550, %v2550
  %v2573 = vcombine.high %v2557, %v2557
  %v2574 = vcombine.high %v2564, %v2564
  %v2575 = vcombine.high %v2571, %v2571
  %v2576 = vcombine.low %v2304, %v2327
  %v2577 = vcombine.high %v2304, %v2327
  %v2578 = vcombine.low %v2337, %v2347
  %v2579 = vcombine.high %v2337, %v2347
  %v2581 = vunpack.c.l.s4 1966171168
  %v2582 = vunpack.c.0.s8 %v2581
  %v2583 = vlaneseq
  %v2584 = vshrl.u32 %v2583, 7
  %v2585 = vsub.s32 %v2582, %v2584
  %v2586 = vrot.slane %v2576, %v2585
  %v2588 = vunpack.c.l.s4 1966171168
  %v2589 = vunpack.c.0.s8 %v2588
  %v2590 = vlaneseq
  %v2591 = vshrl.u32 %v2590, 7
  %v2592 = vsub.s32 %v2589, %v2591
  %v2593 = vrot.slane %v2577, %v2592
  %v2595 = vunpack.c.l.s4 1966171168
  %v2596 = vunpack.c.0.s8 %v2595
  %v2597 = vlaneseq
  %v2598 = vshrl.u32 %v2597, 7
  %v2599 = vsub.s32 %v2596, %v2598
  %v2600 = vrot.slane %v2578, %v2599
  %v2602 = vunpack.c.l.s4 1966171168
  %v2603 = vunpack.c.0.s8 %v2602
  %v2604 = vlaneseq
  %v2605 = vshrl.u32 %v2604, 7
  %v2606 = vsub.s32 %v2603, %v2605
  %v2607 = vrot.slane %v2579, %v2606
  %v2608 = vcombine.low %v2586, %v2600
  %v2609 = vcombine.high %v2586, %v2600
  %v2610 = vcombine.low %v2593, %v2607
  %v2611 = vcombine.high %v2593, %v2607
  %v2613 = vunpack.c.l.s4 1966171168
  %v2614 = vunpack.c.0.s8 %v2613
  %v2615 = vlaneseq
  %v2616 = vshrl.u32 %v2615, 7
  %v2617 = vsub.s32 %v2614, %v2616
  %v2618 = vrot.slane %v2608, %v2617
  %v2620 = vunpack.c.l.s4 1966171168
  %v2621 = vunpack.c.0.s8 %v2620
  %v2622 = vlaneseq
  %v2623 = vshrl.u32 %v2622, 7
  %v2624 = vsub.s32 %v2621, %v2623
  %v2625 = vrot.slane %v2610, %v2624
  %v2627 = vunpack.c.l.s4 1966171168
  %v2628 = vunpack.c.0.s8 %v2627
  %v2629 = vlaneseq
  %v2630 = vshrl.u32 %v2629, 7
  %v2631 = vsub.s32 %v2628, %v2630
  %v2632 = vrot.slane %v2609, %v2631
  %v2634 = vunpack.c.l.s4 1966171168
  %v2635 = vunpack.c.0.s8 %v2634
  %v2636 = vlaneseq
  %v2637 = vshrl.u32 %v2636, 7
  %v2638 = vsub.s32 %v2635, %v2637
  %v2639 = vrot.slane %v2611, %v2638
  %v2640 = vcombine.high %v2618, %v2618
  %v2641 = vcombine.high %v2625, %v2625
  %v2642 = vcombine.high %v2632, %v2632
  %v2643 = vcombine.high %v2639, %v2639
  %v2644 = vcombine.low %v2313, %v2326
  %v2645 = vcombine.low %v2336, %v2346
  %v2647 = vunpack.c.l.s4 1966171168
  %v2648 = vunpack.c.0.s8 %v2647
  %v2649 = vlaneseq
  %v2650 = vshrl.u32 %v2649, 7
  %v2651 = vsub.s32 %v2648, %v2650
  %v2652 = vrot.slane %v2644, %v2651
  %v2654 = vunpack.c.l.s4 1966171168
  %v2655 = vunpack.c.0.s8 %v2654
  %v2656 = vlaneseq
  %v2657 = vshrl.u32 %v2656, 7
  %v2658 = vsub.s32 %v2655, %v2657
  %v2659 = vrot.slane %v2645, %v2658
  %v2660 = vcombine.low %v2652, %v2659
  %v2662 = vunpack.c.l.s4 1966171168
  %v2663 = vunpack.c.0.s8 %v2662
  %v2664 = vlaneseq
  %v2665 = vshrl.u32 %v2664, 7
  %v2666 = vsub.s32 %v2663, %v2665
  %v2667 = vrot.slane %v2660, %v2666
  %v2668 = vld [vmem:[%s3] sm:$0xff]
  %v2669 = vld [vmem:[%s3 + $0x8] sm:$0xff]
  %v2670 = vld [vmem:[%s3 + $0x10] sm:$0xff]
  %v2671 = vld [vmem:[%s3 + $0x18] sm:$0xff]
  %v2672 = vld [vmem:[%s3 + $0x20] sm:$0xff]
  %v2673 = vld [vmem:[%s3 + $0x28] sm:$0xff]
  %v2674 = vld [vmem:[%s3 + $0x30] sm:$0xff]
  %v2675 = vld [vmem:[%s3 + $0x38] sm:$0xff]
  %v2676 = vld [vmem:[%s3 + $0x40] sm:$0xff]
  %v2677 = vld [vmem:[%s3 + $0x48] sm:$0xff]
  %v2678 = vld [vmem:[%s3 + $0x50] sm:$0xff]
  %v2679 = vld [vmem:[%s3 + $0x58] sm:$0xff]
  %v2680 = vld [vmem:[%s3 + $0x60] sm:$0xff]
  %v2681 = vld [vmem:[%s3 + $0x68] sm:$0xff]
  %v2682 = vld [vmem:[%s3 + $0x70] sm:$0xff]
  %v2683 = vld [vmem:[%s3 + $0x78] sm:$0xff]
  %v2684 = vld [vmem:[%s3 + $0x80] sm:$0xff]
  %v2685 = vld [vmem:[%s3 + $0x88] sm:$0xff]
  %v2686 = vld [vmem:[%s3 + $0x90] sm:$0xff]
  %v2687 = vld [vmem:[%s3 + $0x98] sm:$0xff]
  %v2688 = vld [vmem:[%s3 + $0xa0] sm:$0xff]
  %v2689 = vld [vmem:[%s3 + $0xa8] sm:$0xff]
  %v2690 = vld [vmem:[%s3 + $0xb0] sm:$0xff]
  %v2691 = vld [vmem:[%s3 + $0xb8] sm:$0xff]
  %v2692 = vld [vmem:[%s3 + $0xc0] sm:$0xff]
  %v2693 = vld [vmem:[%s3 + $0xc8] sm:$0xff]
  %v2694 = vld [vmem:[%s3 + $0xd0] sm:$0xff]
  %v2695 = vld [vmem:[%s3 + $0xd8] sm:$0xff]
  %v2696 = vld [vmem:[%s3 + $0xe0] sm:$0xff]
  %v2697 = vld [vmem:[%s3 + $0xe8] sm:$0xff]
  %v2698 = vld [vmem:[%s3 + $0xf0] sm:$0xff]
  %v2699 = vld [vmem:[%s3 + $0xf8] sm:$0xff]
  %v2700 = vld [vmem:[%s3 + $0x100] sm:$0xff]
  %v2701 = vld [vmem:[%s3 + $0x108] sm:$0xff]
  %v2702 = vld [vmem:[%s3 + $0x110] sm:$0xff]
  %v2703 = vld [vmem:[%s3 + $0x118] sm:$0xff]
  %v2704 = vld [vmem:[%s3 + $0x120] sm:$0xff]
  %v2705 = vld [vmem:[%s3 + $0x128] sm:$0xff]
  %v2706 = vld [vmem:[%s3 + $0x130] sm:$0xff]
  %v2707 = vld [vmem:[%s3 + $0x138] sm:$0xff]
  %v2708 = vld [vmem:[%s3 + $0x140] sm:$0xff]
  %v2709 = vld [vmem:[%s3 + $0x148] sm:$0xff]
  %v2710 = vld [vmem:[%s3 + $0x150] sm:$0xff]
  %v2711 = vld [vmem:[%s3 + $0x158] sm:$0xff]
  %v2712 = vld [vmem:[%s3 + $0x160] sm:$0xff]
  %v2713 = vld [vmem:[%s3 + $0x168] sm:$0xff]
  %v2714 = vld [vmem:[%s3 + $0x170] sm:$0xff]
  %v2715 = vld [vmem:[%s3 + $0x178] sm:$0xff]
  %v2716 = vld [vmem:[%s3 + $0x180] sm:$0xff]
  %v2717 = vld [vmem:[%s3 + $0x188] sm:$0xff]
  %v2718 = vld [vmem:[%s3 + $0x190] sm:$0xff]
  %v2719 = vld [vmem:[%s3 + $0x198] sm:$0xff]
  %v2720 = vld [vmem:[%s3 + $0x1a0] sm:$0xff]
  %v2721 = vld [vmem:[%s3 + $0x1a8] sm:$0xff]
  %v2722 = vld [vmem:[%s3 + $0x1b0] sm:$0xff]
  %v2723 = vld [vmem:[%s3 + $0x1b8] sm:$0xff]
  %v2724 = vld [vmem:[%s3 + $0x1c0] sm:$0xff]
  %v2725 = vld [vmem:[%s3 + $0x1c8] sm:$0xff]
  %v2726 = vld [vmem:[%s3 + $0x1d0] sm:$0xff]
  %v2727 = vld [vmem:[%s3 + $0x1d8] sm:$0xff]
  %v2728 = vld [vmem:[%s3 + $0x1e0] sm:$0xff]
  %v2729 = vld [vmem:[%s3 + $0x1e8] sm:$0xff]
  %v2730 = vld [vmem:[%s3 + $0x1f0] sm:$0xff]
  %v2731 = vld [vmem:[%s3 + $0x1f8] sm:$0xff]
  %v2732 = vld [vmem:[%s5 + $0x6] ss:$0 sm:$0xff]
  %v2733 = vcombine.low %v2390, %v2404
  %v2734 = vcombine.low %v2412, %v2414
  %v2735 = vcombine.low %v2397, %v2411
  %v2736 = vcombine.low %v2413, %v2415
  %v2738 = vunpack.c.l.s4 1966171168
  %v2739 = vunpack.c.0.s8 %v2738
  %v2740 = vlaneseq
  %v2741 = vshrl.u32 %v2740, 7
  %v2742 = vsub.s32 %v2739, %v2741
  %v2743 = vrot.slane %v2733, %v2742
  %v2745 = vunpack.c.l.s4 1966171168
  %v2746 = vunpack.c.0.s8 %v2745
  %v2747 = vlaneseq
  %v2748 = vshrl.u32 %v2747, 7
  %v2749 = vsub.s32 %v2746, %v2748
  %v2750 = vrot.slane %v2734, %v2749
  %v2752 = vunpack.c.l.s4 1966171168
  %v2753 = vunpack.c.0.s8 %v2752
  %v2754 = vlaneseq
  %v2755 = vshrl.u32 %v2754, 7
  %v2756 = vsub.s32 %v2753, %v2755
  %v2757 = vrot.slane %v2735, %v2756
  %v2759 = vunpack.c.l.s4 1966171168
  %v2760 = vunpack.c.0.s8 %v2759
  %v2761 = vlaneseq
  %v2762 = vshrl.u32 %v2761, 7
  %v2763 = vsub.s32 %v2760, %v2762
  %v2764 = vrot.slane %v2736, %v2763
  %v2765 = vcombine.low %v2743, %v2750
  %v2766 = vcombine.high %v2743, %v2750
  %v2767 = vcombine.low %v2757, %v2764
  %v2768 = vcombine.high %v2757, %v2764
  %v2770 = vunpack.c.l.s4 1966171168
  %v2771 = vunpack.c.0.s8 %v2770
  %v2772 = vlaneseq
  %v2773 = vshrl.u32 %v2772, 7
  %v2774 = vsub.s32 %v2771, %v2773
  %v2775 = vrot.slane %v2765, %v2774
  %v2777 = vunpack.c.l.s4 1966171168
  %v2778 = vunpack.c.0.s8 %v2777
  %v2779 = vlaneseq
  %v2780 = vshrl.u32 %v2779, 7
  %v2781 = vsub.s32 %v2778, %v2780
  %v2782 = vrot.slane %v2766, %v2781
  %v2784 = vunpack.c.l.s4 1966171168
  %v2785 = vunpack.c.0.s8 %v2784
  %v2786 = vlaneseq
  %v2787 = vshrl.u32 %v2786, 7
  %v2788 = vsub.s32 %v2785, %v2787
  %v2789 = vrot.slane %v2767, %v2788
  %v2791 = vunpack.c.l.s4 1966171168
  %v2792 = vunpack.c.0.s8 %v2791
  %v2793 = vlaneseq
  %v2794 = vshrl.u32 %v2793, 7
  %v2795 = vsub.s32 %v2792, %v2794
  %v2796 = vrot.slane %v2768, %v2795
  %v2797 = vcombine.low %v2775, %v2789
  %v2798 = vcombine.high %v2775, %v2789
  %v2799 = vcombine.low %v2782, %v2796
  %v2800 = vcombine.high %v2782, %v2796
  %v2801 = vcombine.low %v2458, %v2472
  %v2802 = vcombine.low %v2480, %v2482
  %v2803 = vcombine.low %v2465, %v2479
  %v2804 = vcombine.low %v2481, %v2483
  %v2806 = vunpack.c.l.s4 1966171168
  %v2807 = vunpack.c.0.s8 %v2806
  %v2808 = vlaneseq
  %v2809 = vshrl.u32 %v2808, 7
  %v2810 = vsub.s32 %v2807, %v2809
  %v2811 = vrot.slane %v2801, %v2810
  %v2813 = vunpack.c.l.s4 1966171168
  %v2814 = vunpack.c.0.s8 %v2813
  %v2815 = vlaneseq
  %v2816 = vshrl.u32 %v2815, 7
  %v2817 = vsub.s32 %v2814, %v2816
  %v2818 = vrot.slane %v2802, %v2817
  %v2820 = vunpack.c.l.s4 1966171168
  %v2821 = vunpack.c.0.s8 %v2820
  %v2822 = vlaneseq
  %v2823 = vshrl.u32 %v2822, 7
  %v2824 = vsub.s32 %v2821, %v2823
  %v2825 = vrot.slane %v2803, %v2824
  %v2827 = vunpack.c.l.s4 1966171168
  %v2828 = vunpack.c.0.s8 %v2827
  %v2829 = vlaneseq
  %v2830 = vshrl.u32 %v2829, 7
  %v2831 = vsub.s32 %v2828, %v2830
  %v2832 = vrot.slane %v2804, %v2831
  %v2833 = vcombine.low %v2811, %v2818
  %v2834 = vcombine.high %v2811, %v2818
  %v2835 = vcombine.low %v2825, %v2832
  %v2836 = vcombine.high %v2825, %v2832
  %v2838 = vunpack.c.l.s4 1966171168
  %v2839 = vunpack.c.0.s8 %v2838
  %v2840 = vlaneseq
  %v2841 = vshrl.u32 %v2840, 7
  %v2842 = vsub.s32 %v2839, %v2841
  %v2843 = vrot.slane %v2833, %v2842
  %v2845 = vunpack.c.l.s4 1966171168
  %v2846 = vunpack.c.0.s8 %v2845
  %v2847 = vlaneseq
  %v2848 = vshrl.u32 %v2847, 7
  %v2849 = vsub.s32 %v2846, %v2848
  %v2850 = vrot.slane %v2834, %v2849
  %v2852 = vunpack.c.l.s4 1966171168
  %v2853 = vunpack.c.0.s8 %v2852
  %v2854 = vlaneseq
  %v2855 = vshrl.u32 %v2854, 7
  %v2856 = vsub.s32 %v2853, %v2855
  %v2857 = vrot.slane %v2835, %v2856
  %v2859 = vunpack.c.l.s4 1966171168
  %v2860 = vunpack.c.0.s8 %v2859
  %v2861 = vlaneseq
  %v2862 = vshrl.u32 %v2861, 7
  %v2863 = vsub.s32 %v2860, %v2862
  %v2864 = vrot.slane %v2836, %v2863
  %v2865 = vcombine.low %v2843, %v2857
  %v2866 = vcombine.high %v2843, %v2857
  %v2867 = vcombine.low %v2850, %v2864
  %v2868 = vcombine.high %v2850, %v2864
  %v2869 = vcombine.low %v2507, %v2550
  %v2870 = vcombine.low %v2564, %v2572
  %v2871 = vcombine.low %v2574, %v2557
  %v2872 = vcombine.low %v2571, %v2573
  %v2874 = vunpack.c.l.s4 1966171168
  %v2875 = vunpack.c.0.s8 %v2874
  %v2876 = vlaneseq
  %v2877 = vshrl.u32 %v2876, 7
  %v2878 = vsub.s32 %v2875, %v2877
  %v2879 = vrot.slane %v2869, %v2878
  %v2881 = vunpack.c.l.s4 1966171168
  %v2882 = vunpack.c.0.s8 %v2881
  %v2883 = vlaneseq
  %v2884 = vshrl.u32 %v2883, 7
  %v2885 = vsub.s32 %v2882, %v2884
  %v2886 = vrot.slane %v2870, %v2885
  %v2888 = vunpack.c.l.s4 1966171168
  %v2889 = vunpack.c.0.s8 %v2888
  %v2890 = vlaneseq
  %v2891 = vshrl.u32 %v2890, 7
  %v2892 = vsub.s32 %v2889, %v2891
  %v2893 = vrot.slane %v2871, %v2892
  %v2895 = vunpack.c.l.s4 1966171168
  %v2896 = vunpack.c.0.s8 %v2895
  %v2897 = vlaneseq
  %v2898 = vshrl.u32 %v2897, 7
  %v2899 = vsub.s32 %v2896, %v2898
  %v2900 = vrot.slane %v2872, %v2899
  %v2901 = vcombine.low %v2879, %v2886
  %v2902 = vcombine.high %v2879, %v2886
  %v2903 = vcombine.low %v2893, %v2900
  %v2904 = vcombine.high %v2893, %v2900
  %v2906 = vunpack.c.l.s4 1966171168
  %v2907 = vunpack.c.0.s8 %v2906
  %v2908 = vlaneseq
  %v2909 = vshrl.u32 %v2908, 7
  %v2910 = vsub.s32 %v2907, %v2909
  %v2911 = vrot.slane %v2901, %v2910
  %v2913 = vunpack.c.l.s4 1966171168
  %v2914 = vunpack.c.0.s8 %v2913
  %v2915 = vlaneseq
  %v2916 = vshrl.u32 %v2915, 7
  %v2917 = vsub.s32 %v2914, %v2916
  %v2918 = vrot.slane %v2902, %v2917
  %v2920 = vunpack.c.l.s4 1966171168
  %v2921 = vunpack.c.0.s8 %v2920
  %v2922 = vlaneseq
  %v2923 = vshrl.u32 %v2922, 7
  %v2924 = vsub.s32 %v2921, %v2923
  %v2925 = vrot.slane %v2903, %v2924
  %v2927 = vunpack.c.l.s4 1966171168
  %v2928 = vunpack.c.0.s8 %v2927
  %v2929 = vlaneseq
  %v2930 = vshrl.u32 %v2929, 7
  %v2931 = vsub.s32 %v2928, %v2930
  %v2932 = vrot.slane %v2904, %v2931
  %v2933 = vcombine.low %v2911, %v2925
  %v2934 = vcombine.high %v2911, %v2925
  %v2935 = vcombine.low %v2918, %v2932
  %v2936 = vcombine.high %v2918, %v2932
  %v2937 = vcombine.low %v2575, %v2618
  %v2938 = vcombine.low %v2632, %v2640
  %v2939 = vcombine.low %v2642, %v2625
  %v2940 = vcombine.low %v2639, %v2641
  %v2942 = vunpack.c.l.s4 1966171168
  %v2943 = vunpack.c.0.s8 %v2942
  %v2944 = vlaneseq
  %v2945 = vshrl.u32 %v2944, 7
  %v2946 = vsub.s32 %v2943, %v2945
  %v2947 = vrot.slane %v2937, %v2946
  %v2949 = vunpack.c.l.s4 1966171168
  %v2950 = vunpack.c.0.s8 %v2949
  %v2951 = vlaneseq
  %v2952 = vshrl.u32 %v2951, 7
  %v2953 = vsub.s32 %v2950, %v2952
  %v2954 = vrot.slane %v2938, %v2953
  %v2956 = vunpack.c.l.s4 1966171168
  %v2957 = vunpack.c.0.s8 %v2956
  %v2958 = vlaneseq
  %v2959 = vshrl.u32 %v2958, 7
  %v2960 = vsub.s32 %v2957, %v2959
  %v2961 = vrot.slane %v2939, %v2960
  %v2963 = vunpack.c.l.s4 1966171168
  %v2964 = vunpack.c.0.s8 %v2963
  %v2965 = vlaneseq
  %v2966 = vshrl.u32 %v2965, 7
  %v2967 = vsub.s32 %v2964, %v2966
  %v2968 = vrot.slane %v2940, %v2967
  %v2969 = vcombine.low %v2947, %v2954
  %v2970 = vcombine.high %v2947, %v2954
  %v2971 = vcombine.low %v2961, %v2968
  %v2972 = vcombine.high %v2961, %v2968
  %v2974 = vunpack.c.l.s4 1966171168
  %v2975 = vunpack.c.0.s8 %v2974
  %v2976 = vlaneseq
  %v2977 = vshrl.u32 %v2976, 7
  %v2978 = vsub.s32 %v2975, %v2977
  %v2979 = vrot.slane %v2969, %v2978
  %v2981 = vunpack.c.l.s4 1966171168
  %v2982 = vunpack.c.0.s8 %v2981
  %v2983 = vlaneseq
  %v2984 = vshrl.u32 %v2983, 7
  %v2985 = vsub.s32 %v2982, %v2984
  %v2986 = vrot.slane %v2970, %v2985
  %v2988 = vunpack.c.l.s4 1966171168
  %v2989 = vunpack.c.0.s8 %v2988
  %v2990 = vlaneseq
  %v2991 = vshrl.u32 %v2990, 7
  %v2992 = vsub.s32 %v2989, %v2991
  %v2993 = vrot.slane %v2971, %v2992
  %v2995 = vunpack.c.l.s4 1966171168
  %v2996 = vunpack.c.0.s8 %v2995
  %v2997 = vlaneseq
  %v2998 = vshrl.u32 %v2997, 7
  %v2999 = vsub.s32 %v2996, %v2998
  %v3000 = vrot.slane %v2972, %v2999
  %v3001 = vcombine.low %v2979, %v2993
  %v3002 = vcombine.high %v2979, %v2993
  %v3003 = vcombine.low %v2986, %v3000
  %v3004 = vcombine.high %v2986, %v3000
  %v3005 = vcombine.low %v2643, %v2667
  %v3007 = vunpack.c.l.s4 1966171168
  %v3008 = vunpack.c.0.s8 %v3007
  %v3009 = vlaneseq
  %v3010 = vshrl.u32 %v3009, 7
  %v3011 = vsub.s32 %v3008, %v3010
  %v3012 = vrot.slane %v3005, %v3011
  %v3013 = vcombine.high %v3012, %v3012
  %v3015 = vunpack.c.l.s4 1966171168
  %v3016 = vunpack.c.0.s8 %v3015
  %v3017 = vlaneseq
  %v3018 = vshrl.u32 %v3017, 7
  %v3019 = vsub.s32 %v3016, %v3018
  %v3020 = vrot.slane %v3012, %v3019
  %v3022 = vunpack.c.l.s4 1966171168
  %v3023 = vunpack.c.0.s8 %v3022
  %v3024 = vlaneseq
  %v3025 = vshrl.u32 %v3024, 7
  %v3026 = vsub.s32 %v3023, %v3025
  %v3027 = vrot.slane %v3013, %v3026
  %v3028 = vcombine.high %v3020, %v3020
  %v3029 = vcombine.high %v3027, %v3027
  %3050 = vmatprep.subr.mxu0 0.0
  %3051 = vmatpush1.msra.mxu0 %v2683
  %3052 = vmatprep.subr.mxu0 0.0
  %3053 = vmatpush1.msra.mxu0 %v2682
  %3054 = vmatprep.subr.mxu0 0.0
  %3055 = vmatpush1.msra.mxu0 %v2681
  %3056 = vmatprep.subr.mxu0 0.0
  %3057 = vmatpush1.msra.mxu0 %v2680
  %3058 = vmatprep.subr.mxu0 0.0
  %3059 = vmatpush1.msra.mxu0 %v2679
  %3060 = vmatprep.subr.mxu0 0.0
  %3061 = vmatpush1.msra.mxu0 %v2678
  %3062 = vmatprep.subr.mxu0 0.0
  %3063 = vmatpush1.msra.mxu0 %v2677
  %3064 = vmatprep.subr.mxu0 0.0
  %3065 = vmatpush1.msra.mxu0 %v2676
  %3066 = vmatprep.subr.mxu0 0.0
  %3067 = vmatpush1.msra.mxu0 %v2675
  %3068 = vmatprep.subr.mxu0 0.0
  %3069 = vmatpush1.msra.mxu0 %v2674
  %3070 = vmatprep.subr.mxu0 0.0
  %3071 = vmatpush1.msra.mxu0 %v2673
  %3072 = vmatprep.subr.mxu0 0.0
  %3073 = vmatpush1.msra.mxu0 %v2672
  %3074 = vmatprep.subr.mxu0 0.0
  %3075 = vmatpush1.msra.mxu0 %v2671
  %3076 = vmatprep.subr.mxu0 0.0
  %3077 = vmatpush1.msra.mxu0 %v2670
  %3078 = vmatprep.subr.mxu0 0.0
  %3079 = vmatpush1.msra.mxu0 %v2669
  %3080 = vmatprep.subr.mxu0 0.0
  %3081 = vmatpush1.msra.mxu0 %v2668
  %3082 = vmatprep.subr.mxu0 0.0
  %3083 = vmatpush2.msra.mxu0 %v2699
  %3084 = vmatprep.subr.mxu0 0.0
  %3085 = vmatpush2.msra.mxu0 %v2698
  %3086 = vmatprep.subr.mxu0 0.0
  %3087 = vmatpush2.msra.mxu0 %v2697
  %3088 = vmatprep.subr.mxu0 0.0
  %3089 = vmatpush2.msra.mxu0 %v2696
  %3090 = vmatprep.subr.mxu0 0.0
  %3091 = vmatpush2.msra.mxu0 %v2695
  %3092 = vmatprep.subr.mxu0 0.0
  %3093 = vmatpush2.msra.mxu0 %v2694
  %3094 = vmatprep.subr.mxu0 0.0
  %3095 = vmatpush2.msra.mxu0 %v2693
  %3096 = vmatprep.subr.mxu0 0.0
  %3097 = vmatpush2.msra.mxu0 %v2692
  %3098 = vmatprep.subr.mxu0 0.0
  %3099 = vmatpush2.msra.mxu0 %v2691
  %3100 = vmatprep.subr.mxu0 0.0
  %3101 = vmatpush2.msra.mxu0 %v2690
  %3102 = vmatprep.subr.mxu0 0.0
  %3103 = vmatpush2.msra.mxu0 %v2689
  %3104 = vmatprep.subr.mxu0 0.0
  %3105 = vmatpush2.msra.mxu0 %v2688
  %3106 = vmatprep.subr.mxu0 0.0
  %3107 = vmatpush2.msra.mxu0 %v2687
  %3108 = vmatprep.subr.mxu0 0.0
  %3109 = vmatpush2.msra.mxu0 %v2686
  %3110 = vmatprep.subr.mxu0 0.0
  %3111 = vmatpush2.msra.mxu0 %v2685
  %3112 = vmatprep.subr.mxu0 0.0
  %3113 = vmatpush2.msra.mxu0 %v2684
  %3114 = vmatprep.mubr.f32.mxu0 %v2799
  %3115 = vmatmul.mubr.f32.gmra.mxu0 %v2797
  %v3116 = vpop.f32.mrf.mxu0
  %v3117 = vadd.f32 %v2732, %v3116
  %v3118 = vpop.f32.mrf.mxu0
  %3119 = vmatprep.mubr.f32.mxu0 %v2867
  %3120 = vmatmul.mubr.f32.gmra.mxu0 %v2865
  %v3121 = vpop.f32.mrf.mxu0
  %v3122 = vadd.f32 %v2732, %v3121
  %v3123 = vpop.f32.mrf.mxu0
  %3124 = vmatprep.mubr.f32.mxu0 %v2935
  %3125 = vmatmul.mubr.f32.gmra.mxu0 %v2933
  %v3126 = vpop.f32.mrf.mxu0
  %v3127 = vadd.f32 %v2732, %v3126
  %v3128 = vpop.f32.mrf.mxu0
  %3129 = vmatprep.mubr.f32.mxu0 %v3003
  %3130 = vmatmul.mubr.f32.gmra.mxu0 %v3001
  %v3131 = vpop.f32.mrf.mxu0
  %v3132 = vadd.f32 %v2732, %v3131
  %v3133 = vpop.f32.mrf.mxu0
  %3134 = vmatprep.mubr.f32.mxu0 %v3027
  %3135 = vmatmul.mubr.f32.gmra.mxu0 %v3020
  %v3136 = vpop.f32.mrf.mxu0
  %v3137 = vadd.f32 %v2732, %v3136
  %v3138 = vpop.f32.mrf.mxu0
  %3139 = vdwg.mxu0
  %3140 = vmatprep.subr.mxu0 0.0
  %3141 = vmatpush1.msra.mxu0 %v2715
  %3142 = vmatprep.subr.mxu0 0.0
  %3143 = vmatpush1.msra.mxu0 %v2714
  %3144 = vmatprep.subr.mxu0 0.0
  %3145 = vmatpush1.msra.mxu0 %v2713
  %3146 = vmatprep.subr.mxu0 0.0
  %3147 = vmatpush1.msra.mxu0 %v2712
  %3148 = vmatprep.subr.mxu0 0.0
  %3149 = vmatpush1.msra.mxu0 %v2711
  %3150 = vmatprep.subr.mxu0 0.0
  %3151 = vmatpush1.msra.mxu0 %v2710
  %3152 = vmatprep.subr.mxu0 0.0
  %3153 = vmatpush1.msra.mxu0 %v2709
  %3154 = vmatprep.subr.mxu0 0.0
  %3155 = vmatpush1.msra.mxu0 %v2708
  %3156 = vmatprep.subr.mxu0 0.0
  %3157 = vmatpush1.msra.mxu0 %v2707
  %3158 = vmatprep.subr.mxu0 0.0
  %3159 = vmatpush1.msra.mxu0 %v2706
  %3160 = vmatprep.subr.mxu0 0.0
  %3161 = vmatpush1.msra.mxu0 %v2705
  %3162 = vmatprep.subr.mxu0 0.0
  %3163 = vmatpush1.msra.mxu0 %v2704
  %3164 = vmatprep.subr.mxu0 0.0
  %3165 = vmatpush1.msra.mxu0 %v2703
  %3166 = vmatprep.subr.mxu0 0.0
  %3167 = vmatpush1.msra.mxu0 %v2702
  %3168 = vmatprep.subr.mxu0 0.0
  %3169 = vmatpush1.msra.mxu0 %v2701
  %3170 = vmatprep.subr.mxu0 0.0
  %3171 = vmatpush1.msra.mxu0 %v2700
  %3172 = vmatprep.subr.mxu0 0.0
  %3173 = vmatpush2.msra.mxu0 %v2731
  %3174 = vmatprep.subr.mxu0 0.0
  %3175 = vmatpush2.msra.mxu0 %v2730
  %3176 = vmatprep.subr.mxu0 0.0
  %3177 = vmatpush2.msra.mxu0 %v2729
  %3178 = vmatprep.subr.mxu0 0.0
  %3179 = vmatpush2.msra.mxu0 %v2728
  %3180 = vmatprep.subr.mxu0 0.0
  %3181 = vmatpush2.msra.mxu0 %v2727
  %3182 = vmatprep.subr.mxu0 0.0
  %3183 = vmatpush2.msra.mxu0 %v2726
  %3184 = vmatprep.subr.mxu0 0.0
  %3185 = vmatpush2.msra.mxu0 %v2725
  %3186 = vmatprep.subr.mxu0 0.0
  %3187 = vmatpush2.msra.mxu0 %v2724
  %3188 = vmatprep.subr.mxu0 0.0
  %3189 = vmatpush2.msra.mxu0 %v2723
  %3190 = vmatprep.subr.mxu0 0.0
  %3191 = vmatpush2.msra.mxu0 %v2722
  %3192 = vmatprep.subr.mxu0 0.0
  %3193 = vmatpush2.msra.mxu0 %v2721
  %3194 = vmatprep.subr.mxu0 0.0
  %3195 = vmatpush2.msra.mxu0 %v2720
  %3196 = vmatprep.subr.mxu0 0.0
  %3197 = vmatpush2.msra.mxu0 %v2719
  %3198 = vmatprep.subr.mxu0 0.0
  %3199 = vmatpush2.msra.mxu0 %v2718
  %3200 = vmatprep.subr.mxu0 0.0
  %3201 = vmatpush2.msra.mxu0 %v2717
  %3202 = vmatprep.subr.mxu0 0.0
  %3203 = vmatpush2.msra.mxu0 %v2716
  %3204 = vmatprep.mubr.f32.mxu0 %v2800
  %3205 = vmatmul.mubr.f32.gmra.mxu0 %v2798
  %v3206 = vpop.f32.mrf.mxu0
  %v3207 = vadd.f32 %v3117, %v3206
  %v3208 = vpop.f32.mrf.mxu0
  %3209 = vmatprep.mubr.f32.mxu0 %v2868
  %3210 = vmatmul.mubr.f32.gmra.mxu0 %v2866
  %v3211 = vpop.f32.mrf.mxu0
  %v3212 = vadd.f32 %v3122, %v3211
  %v3213 = vpop.f32.mrf.mxu0
  %3214 = vmatprep.mubr.f32.mxu0 %v2936
  %3215 = vmatmul.mubr.f32.gmra.mxu0 %v2934
  %v3216 = vpop.f32.mrf.mxu0
  %v3217 = vadd.f32 %v3127, %v3216
  %v3218 = vpop.f32.mrf.mxu0
  %3219 = vmatprep.mubr.f32.mxu0 %v3004
  %3220 = vmatmul.mubr.f32.gmra.mxu0 %v3002
  %v3221 = vpop.f32.mrf.mxu0
  %v3222 = vadd.f32 %v3132, %v3221
  %v3223 = vpop.f32.mrf.mxu0
  %3224 = vmatprep.mubr.f32.mxu0 %v3029
  %3225 = vmatmul.mubr.f32.gmra.mxu0 %v3028
  %v3226 = vpop.f32.mrf.mxu0
  %v3227 = vadd.f32 %v3137, %v3226
  %v3228 = vpop.f32.mrf.mxu0
  %3229 = vdwg.mxu0
  %vm3230 = vcmask 523264
  %v3231 = vsel %vm3230, %v3207, 0.0
  %v3232 = vsel %vm3230, %v3212, 0.0
  %v3233 = vadd.f32 %v3231, %v3232
  %v3234 = vsel %vm3230, %v3217, 0.0
  %v3235 = vadd.f32 %v3233, %v3234
  %v3236 = vsel %vm3230, %v3222, 0.0
  %v3237 = vadd.f32 %v3235, %v3236
  %vm3238 = vcmask 517120
  %v3239 = vsel %vm3238, %v3227, 0.0
  %v3240 = vadd.f32 %v3237, %v3239
  %v3241 = vrot.slane %v3240, 4
  %v3242 = vadd.f32 %v3240, %v3241
  %v3243 = vrot.slane %v3242, 2
  %v3244 = vadd.f32 %v3242, %v3243
  %v3245 = vrot.slane %v3244, 1
  %v3246 = vadd.f32 %v3244, %v3245
  %v3247 = vmul.f32 %v3246, 0.029411765
  %v3248 = vsub.f32 %v3207, %v3247
  %v3249 = vsub.f32 %v3212, %v3247
  %v3250 = vsub.f32 %v3217, %v3247
  %v3251 = vsub.f32 %v3222, %v3247
  %v3252 = vsub.f32 %v3227, %v3247
  %v3253 = vmul.f32 %v3248, %v3248
  %v3254 = vmul.f32 %v3249, %v3249
  %v3255 = vmul.f32 %v3250, %v3250
  %v3256 = vmul.f32 %v3251, %v3251
  %v3257 = vmul.f32 %v3252, %v3252
  %v3258 = vsel %vm3230, %v3253, 0.0
  %v3259 = vsel %vm3230, %v3254, 0.0
  %v3260 = vadd.f32 %v3258, %v3259
  %v3261 = vsel %vm3230, %v3255, 0.0
  %v3262 = vadd.f32 %v3260, %v3261
  %v3263 = vsel %vm3230, %v3256, 0.0
  %v3264 = vadd.f32 %v3262, %v3263
  %v3265 = vsel %vm3238, %v3257, 0.0
  %v3266 = vadd.f32 %v3264, %v3265
  %v3267 = vrot.slane %v3266, 4
  %v3268 = vadd.f32 %v3266, %v3267
  %v3269 = vrot.slane %v3268, 2
  %v3270 = vadd.f32 %v3268, %v3269
  %v3271 = vrot.slane %v3270, 1
  %v3272 = vadd.f32 %v3270, %v3271
  %v3273 = vmul.f32 %v3272, 0.029411765
  %v3274 = vadd.f32 %v3273, 1e-05
  %v3275 = vrsqrt.pop %v3274
  %v3276 = vmul.f32 %v3248, %v3275
  %v3277 = vmul.f32 %v3249, %v3275
  %v3278 = vmul.f32 %v3250, %v3275
  %v3279 = vmul.f32 %v3251, %v3275
  %v3280 = vmul.f32 %v3252, %v3275
  %v3281 = vld [vmem:[%s5 + $0x7] ss:$0 sm:$0xff]
  %v3282 = vmul.f32 %v3276, %v3281
  %v3283 = vmul.f32 %v3277, %v3281
  %v3284 = vmul.f32 %v3278, %v3281
  %v3285 = vmul.f32 %v3279, %v3281
  %v3286 = vmul.f32 %v3280, %v3281
  %v3287 = vld [vmem:[%s5 + $0x10] ss:$0 sm:$0xff]
  %v3288 = vadd.f32 %v3282, %v3287
  %v3289 = vadd.f32 %v3283, %v3287
  %v3290 = vadd.f32 %v3284, %v3287
  %v3291 = vadd.f32 %v3285, %v3287
  %v3292 = vadd.f32 %v3286, %v3287
  %vm3293 = vcmp.gt.f32.partialorder %v3288, 0.0
  %vm3294 = vcmp.gt.f32.partialorder %v3289, 0.0
  %vm3295 = vcmp.gt.f32.partialorder %v3290, 0.0
  %vm3296 = vcmp.gt.f32.partialorder %v3291, 0.0
  %vm3297 = vcmp.gt.f32.partialorder %v3292, 0.0
  %v3298 = vmul.f32 %v3288, 0.01
  %v3299 = vmul.f32 %v3289, 0.01
  %v3300 = vmul.f32 %v3290, 0.01
  %v3301 = vmul.f32 %v3291, 0.01
  %v3302 = vmul.f32 %v3292, 0.01
  %v3303 = vsel %vm3293, %v3288, %v3298
  %v3304 = vsel %vm3294, %v3289, %v3299
  %v3305 = vsel %vm3295, %v3290, %v3300
  %v3306 = vsel %vm3296, %v3291, %v3301
  %v3307 = vsel %vm3297, %v3292, %v3302
  %v3313 = vcombine.high %v3303, %v3303
  %v3315 = vunpack.c.l.s4 1966171168
  %v3316 = vunpack.c.0.s8 %v3315
  %v3317 = vlaneseq
  %v3318 = vshrl.u32 %v3317, 7
  %v3319 = vsub.s32 %v3316, %v3318
  %v3320 = vrot.slane %v3303, %v3319
  %v3322 = vunpack.c.l.s4 1966171168
  %v3323 = vunpack.c.0.s8 %v3322
  %v3324 = vlaneseq
  %v3325 = vshrl.u32 %v3324, 7
  %v3326 = vsub.s32 %v3323, %v3325
  %v3327 = vrot.slane %v3313, %v3326
  %v3328 = vcombine.high %v3320, %v3320
  %v3329 = vcombine.high %v3327, %v3327
  %v3331 = vunpack.c.l.s4 1966171168
  %v3332 = vunpack.c.0.s8 %v3331
  %v3333 = vlaneseq
  %v3334 = vshrl.u32 %v3333, 7
  %v3335 = vsub.s32 %v3332, %v3334
  %v3336 = vrot.slane %v3320, %v3335
  %v3338 = vunpack.c.l.s4 1966171168
  %v3339 = vunpack.c.0.s8 %v3338
  %v3340 = vlaneseq
  %v3341 = vshrl.u32 %v3340, 7
  %v3342 = vsub.s32 %v3339, %v3341
  %v3343 = vrot.slane %v3327, %v3342
  %v3345 = vunpack.c.l.s4 1966171168
  %v3346 = vunpack.c.0.s8 %v3345
  %v3347 = vlaneseq
  %v3348 = vshrl.u32 %v3347, 7
  %v3349 = vsub.s32 %v3346, %v3348
  %v3350 = vrot.slane %v3328, %v3349
  %v3352 = vunpack.c.l.s4 1966171168
  %v3353 = vunpack.c.0.s8 %v3352
  %v3354 = vlaneseq
  %v3355 = vshrl.u32 %v3354, 7
  %v3356 = vsub.s32 %v3353, %v3355
  %v3357 = vrot.slane %v3329, %v3356
  %v3358 = vcombine.high %v3336, %v3336
  %v3359 = vcombine.high %v3343, %v3343
  %v3360 = vcombine.high %v3350, %v3350
  %v3361 = vcombine.high %v3357, %v3357
  %v3362 = vcombine.high %v3304, %v3304
  %v3364 = vunpack.c.l.s4 1966171168
  %v3365 = vunpack.c.0.s8 %v3364
  %v3366 = vlaneseq
  %v3367 = vshrl.u32 %v3366, 7
  %v3368 = vsub.s32 %v3365, %v3367
  %v3369 = vrot.slane %v3304, %v3368
  %v3371 = vunpack.c.l.s4 1966171168
  %v3372 = vunpack.c.0.s8 %v3371
  %v3373 = vlaneseq
  %v3374 = vshrl.u32 %v3373, 7
  %v3375 = vsub.s32 %v3372, %v3374
  %v3376 = vrot.slane %v3362, %v3375
  %v3377 = vcombine.high %v3369, %v3369
  %v3378 = vcombine.high %v3376, %v3376
  %v3380 = vunpack.c.l.s4 1966171168
  %v3381 = vunpack.c.0.s8 %v3380
  %v3382 = vlaneseq
  %v3383 = vshrl.u32 %v3382, 7
  %v3384 = vsub.s32 %v3381, %v3383
  %v3385 = vrot.slane %v3369, %v3384
  %v3387 = vunpack.c.l.s4 1966171168
  %v3388 = vunpack.c.0.s8 %v3387
  %v3389 = vlaneseq
  %v3390 = vshrl.u32 %v3389, 7
  %v3391 = vsub.s32 %v3388, %v3390
  %v3392 = vrot.slane %v3376, %v3391
  %v3394 = vunpack.c.l.s4 1966171168
  %v3395 = vunpack.c.0.s8 %v3394
  %v3396 = vlaneseq
  %v3397 = vshrl.u32 %v3396, 7
  %v3398 = vsub.s32 %v3395, %v3397
  %v3399 = vrot.slane %v3377, %v3398
  %v3401 = vunpack.c.l.s4 1966171168
  %v3402 = vunpack.c.0.s8 %v3401
  %v3403 = vlaneseq
  %v3404 = vshrl.u32 %v3403, 7
  %v3405 = vsub.s32 %v3402, %v3404
  %v3406 = vrot.slane %v3378, %v3405
  %v3407 = vcombine.high %v3385, %v3385
  %v3408 = vcombine.high %v3392, %v3392
  %v3409 = vcombine.high %v3399, %v3399
  %v3410 = vcombine.high %v3406, %v3406
  %v3411 = vcombine.high %v3305, %v3305
  %v3413 = vunpack.c.l.s4 1966171168
  %v3414 = vunpack.c.0.s8 %v3413
  %v3415 = vlaneseq
  %v3416 = vshrl.u32 %v3415, 7
  %v3417 = vsub.s32 %v3414, %v3416
  %v3418 = vrot.slane %v3305, %v3417
  %v3420 = vunpack.c.l.s4 1966171168
  %v3421 = vunpack.c.0.s8 %v3420
  %v3422 = vlaneseq
  %v3423 = vshrl.u32 %v3422, 7
  %v3424 = vsub.s32 %v3421, %v3423
  %v3425 = vrot.slane %v3411, %v3424
  %v3426 = vcombine.high %v3418, %v3418
  %v3427 = vcombine.high %v3425, %v3425
  %v3429 = vunpack.c.l.s4 1966171168
  %v3430 = vunpack.c.0.s8 %v3429
  %v3431 = vlaneseq
  %v3432 = vshrl.u32 %v3431, 7
  %v3433 = vsub.s32 %v3430, %v3432
  %v3434 = vrot.slane %v3418, %v3433
  %v3436 = vunpack.c.l.s4 1966171168
  %v3437 = vunpack.c.0.s8 %v3436
  %v3438 = vlaneseq
  %v3439 = vshrl.u32 %v3438, 7
  %v3440 = vsub.s32 %v3437, %v3439
  %v3441 = vrot.slane %v3425, %v3440
  %v3443 = vunpack.c.l.s4 1966171168
  %v3444 = vunpack.c.0.s8 %v3443
  %v3445 = vlaneseq
  %v3446 = vshrl.u32 %v3445, 7
  %v3447 = vsub.s32 %v3444, %v3446
  %v3448 = vrot.slane %v3426, %v3447
  %v3450 = vunpack.c.l.s4 1966171168
  %v3451 = vunpack.c.0.s8 %v3450
  %v3452 = vlaneseq
  %v3453 = vshrl.u32 %v3452, 7
  %v3454 = vsub.s32 %v3451, %v3453
  %v3455 = vrot.slane %v3427, %v3454
  %v3456 = vcombine.high %v3434, %v3434
  %v3457 = vcombine.high %v3441, %v3441
  %v3458 = vcombine.high %v3448, %v3448
  %v3459 = vcombine.high %v3455, %v3455
  %v3460 = vcombine.high %v3306, %v3306
  %v3462 = vunpack.c.l.s4 1966171168
  %v3463 = vunpack.c.0.s8 %v3462
  %v3464 = vlaneseq
  %v3465 = vshrl.u32 %v3464, 7
  %v3466 = vsub.s32 %v3463, %v3465
  %v3467 = vrot.slane %v3306, %v3466
  %v3469 = vunpack.c.l.s4 1966171168
  %v3470 = vunpack.c.0.s8 %v3469
  %v3471 = vlaneseq
  %v3472 = vshrl.u32 %v3471, 7
  %v3473 = vsub.s32 %v3470, %v3472
  %v3474 = vrot.slane %v3460, %v3473
  %v3475 = vcombine.high %v3467, %v3467
  %v3476 = vcombine.high %v3474, %v3474
  %v3478 = vunpack.c.l.s4 1966171168
  %v3479 = vunpack.c.0.s8 %v3478
  %v3480 = vlaneseq
  %v3481 = vshrl.u32 %v3480, 7
  %v3482 = vsub.s32 %v3479, %v3481
  %v3483 = vrot.slane %v3467, %v3482
  %v3485 = vunpack.c.l.s4 1966171168
  %v3486 = vunpack.c.0.s8 %v3485
  %v3487 = vlaneseq
  %v3488 = vshrl.u32 %v3487, 7
  %v3489 = vsub.s32 %v3486, %v3488
  %v3490 = vrot.slane %v3474, %v3489
  %v3492 = vunpack.c.l.s4 1966171168
  %v3493 = vunpack.c.0.s8 %v3492
  %v3494 = vlaneseq
  %v3495 = vshrl.u32 %v3494, 7
  %v3496 = vsub.s32 %v3493, %v3495
  %v3497 = vrot.slane %v3475, %v3496
  %v3499 = vunpack.c.l.s4 1966171168
  %v3500 = vunpack.c.0.s8 %v3499
  %v3501 = vlaneseq
  %v3502 = vshrl.u32 %v3501, 7
  %v3503 = vsub.s32 %v3500, %v3502
  %v3504 = vrot.slane %v3476, %v3503
  %v3505 = vcombine.high %v3483, %v3483
  %v3506 = vcombine.high %v3490, %v3490
  %v3507 = vcombine.high %v3497, %v3497
  %v3508 = vcombine.high %v3504, %v3504
  %v3510 = vunpack.c.l.s4 1966171168
  %v3511 = vunpack.c.0.s8 %v3510
  %v3512 = vlaneseq
  %v3513 = vshrl.u32 %v3512, 7
  %v3514 = vsub.s32 %v3511, %v3513
  %v3515 = vrot.slane %v3307, %v3514
  %v3516 = vcombine.high %v3515, %v3515
  %v3518 = vunpack.c.l.s4 1966171168
  %v3519 = vunpack.c.0.s8 %v3518
  %v3520 = vlaneseq
  %v3521 = vshrl.u32 %v3520, 7
  %v3522 = vsub.s32 %v3519, %v3521
  %v3523 = vrot.slane %v3515, %v3522
  %v3525 = vunpack.c.l.s4 1966171168
  %v3526 = vunpack.c.0.s8 %v3525
  %v3527 = vlaneseq
  %v3528 = vshrl.u32 %v3527, 7
  %v3529 = vsub.s32 %v3526, %v3528
  %v3530 = vrot.slane %v3516, %v3529
  %v3531 = vcombine.low %v3336, %v3336
  %v3532 = vcombine.low %v3350, %v3358
  %v3533 = vcombine.low %v3360, %v3343
  %v3535 = vunpack.c.l.s4 1966171168
  %v3536 = vunpack.c.0.s8 %v3535
  %v3537 = vlaneseq
  %v3538 = vshrl.u32 %v3537, 7
  %v3539 = vsub.s32 %v3536, %v3538
  %v3540 = vrot.slane %v3531, %v3539
  %v3542 = vunpack.c.l.s4 1966171168
  %v3543 = vunpack.c.0.s8 %v3542
  %v3544 = vlaneseq
  %v3545 = vshrl.u32 %v3544, 7
  %v3546 = vsub.s32 %v3543, %v3545
  %v3547 = vrot.slane %v3532, %v3546
  %v3549 = vunpack.c.l.s4 1966171168
  %v3550 = vunpack.c.0.s8 %v3549
  %v3551 = vlaneseq
  %v3552 = vshrl.u32 %v3551, 7
  %v3553 = vsub.s32 %v3550, %v3552
  %v3554 = vrot.slane %v3533, %v3553
  %v3555 = vcombine.low %v3540, %v3540
  %v3556 = vcombine.low %v3547, %v3554
  %v3558 = vunpack.c.l.s4 1966171168
  %v3559 = vunpack.c.0.s8 %v3558
  %v3560 = vlaneseq
  %v3561 = vshrl.u32 %v3560, 7
  %v3562 = vsub.s32 %v3559, %v3561
  %v3563 = vrot.slane %v3555, %v3562
  %v3565 = vunpack.c.l.s4 1966171168
  %v3566 = vunpack.c.0.s8 %v3565
  %v3567 = vlaneseq
  %v3568 = vshrl.u32 %v3567, 7
  %v3569 = vsub.s32 %v3566, %v3568
  %v3570 = vrot.slane %v3556, %v3569
  %v3571 = vcombine.low %v3563, %v3570
  %v3572 = vcombine.low %v3357, %v3359
  %v3573 = vcombine.low %v3361, %v3385
  %v3574 = vcombine.low %v3399, %v3407
  %v3575 = vcombine.low %v3409, %v3392
  %v3577 = vunpack.c.l.s4 1966171168
  %v3578 = vunpack.c.0.s8 %v3577
  %v3579 = vlaneseq
  %v3580 = vshrl.u32 %v3579, 7
  %v3581 = vsub.s32 %v3578, %v3580
  %v3582 = vrot.slane %v3572, %v3581
  %v3584 = vunpack.c.l.s4 1966171168
  %v3585 = vunpack.c.0.s8 %v3584
  %v3586 = vlaneseq
  %v3587 = vshrl.u32 %v3586, 7
  %v3588 = vsub.s32 %v3585, %v3587
  %v3589 = vrot.slane %v3573, %v3588
  %v3591 = vunpack.c.l.s4 1966171168
  %v3592 = vunpack.c.0.s8 %v3591
  %v3593 = vlaneseq
  %v3594 = vshrl.u32 %v3593, 7
  %v3595 = vsub.s32 %v3592, %v3594
  %v3596 = vrot.slane %v3574, %v3595
  %v3598 = vunpack.c.l.s4 1966171168
  %v3599 = vunpack.c.0.s8 %v3598
  %v3600 = vlaneseq
  %v3601 = vshrl.u32 %v3600, 7
  %v3602 = vsub.s32 %v3599, %v3601
  %v3603 = vrot.slane %v3575, %v3602
  %v3604 = vcombine.low %v3582, %v3589
  %v3605 = vcombine.low %v3596, %v3603
  %v3607 = vunpack.c.l.s4 1966171168
  %v3608 = vunpack.c.0.s8 %v3607
  %v3609 = vlaneseq
  %v3610 = vshrl.u32 %v3609, 7
  %v3611 = vsub.s32 %v3608, %v3610
  %v3612 = vrot.slane %v3604, %v3611
  %v3614 = vunpack.c.l.s4 1966171168
  %v3615 = vunpack.c.0.s8 %v3614
  %v3616 = vlaneseq
  %v3617 = vshrl.u32 %v3616, 7
  %v3618 = vsub.s32 %v3615, %v3617
  %v3619 = vrot.slane %v3605, %v3618
  %v3620 = vcombine.low %v3612, %v3619
  %v3621 = vcombine.low %v3406, %v3408
  %v3622 = vcombine.low %v3410, %v3434
  %v3624 = vunpack.c.l.s4 1966171168
  %v3625 = vunpack.c.0.s8 %v3624
  %v3626 = vlaneseq
  %v3627 = vshrl.u32 %v3626, 7
  %v3628 = vsub.s32 %v3625, %v3627
  %v3629 = vrot.slane %v3621, %v3628
  %v3631 = vunpack.c.l.s4 1966171168
  %v3632 = vunpack.c.0.s8 %v3631
  %v3633 = vlaneseq
  %v3634 = vshrl.u32 %v3633, 7
  %v3635 = vsub.s32 %v3632, %v3634
  %v3636 = vrot.slane %v3622, %v3635
  %v3637 = vcombine.low %v3629, %v3636
  %v3639 = vunpack.c.l.s4 1966171168
  %v3640 = vunpack.c.0.s8 %v3639
  %v3641 = vlaneseq
  %v3642 = vshrl.u32 %v3641, 7
  %v3643 = vsub.s32 %v3640, %v3642
  %v3644 = vrot.slane %v3637, %v3643
  %v3645 = vcombine.low %v3448, %v3448
  %v3646 = vcombine.low %v3456, %v3458
  %v3647 = vcombine.low %v3441, %v3455
  %v3649 = vunpack.c.l.s4 1966171168
  %v3650 = vunpack.c.0.s8 %v3649
  %v3651 = vlaneseq
  %v3652 = vshrl.u32 %v3651, 7
  %v3653 = vsub.s32 %v3650, %v3652
  %v3654 = vrot.slane %v3645, %v3653
  %v3656 = vunpack.c.l.s4 1966171168
  %v3657 = vunpack.c.0.s8 %v3656
  %v3658 = vlaneseq
  %v3659 = vshrl.u32 %v3658, 7
  %v3660 = vsub.s32 %v3657, %v3659
  %v3661 = vrot.slane %v3646, %v3660
  %v3663 = vunpack.c.l.s4 1966171168
  %v3664 = vunpack.c.0.s8 %v3663
  %v3665 = vlaneseq
  %v3666 = vshrl.u32 %v3665, 7
  %v3667 = vsub.s32 %v3664, %v3666
  %v3668 = vrot.slane %v3647, %v3667
  %v3669 = vcombine.low %v3654, %v3654
  %v3670 = vcombine.low %v3661, %v3668
  %v3672 = vunpack.c.l.s4 1966171168
  %v3673 = vunpack.c.0.s8 %v3672
  %v3674 = vlaneseq
  %v3675 = vshrl.u32 %v3674, 7
  %v3676 = vsub.s32 %v3673, %v3675
  %v3677 = vrot.slane %v3669, %v3676
  %v3679 = vunpack.c.l.s4 1966171168
  %v3680 = vunpack.c.0.s8 %v3679
  %v3681 = vlaneseq
  %v3682 = vshrl.u32 %v3681, 7
  %v3683 = vsub.s32 %v3680, %v3682
  %v3684 = vrot.slane %v3670, %v3683
  %v3685 = vcombine.low %v3677, %v3684
  %v3686 = vcombine.low %v3457, %v3459
  %v3687 = vcombine.low %v3483, %v3497
  %v3688 = vcombine.low %v3505, %v3507
  %v3689 = vcombine.low %v3490, %v3504
  %v3691 = vunpack.c.l.s4 1966171168
  %v3692 = vunpack.c.0.s8 %v3691
  %v3693 = vlaneseq
  %v3694 = vshrl.u32 %v3693, 7
  %v3695 = vsub.s32 %v3692, %v3694
  %v3696 = vrot.slane %v3686, %v3695
  %v3698 = vunpack.c.l.s4 1966171168
  %v3699 = vunpack.c.0.s8 %v3698
  %v3700 = vlaneseq
  %v3701 = vshrl.u32 %v3700, 7
  %v3702 = vsub.s32 %v3699, %v3701
  %v3703 = vrot.slane %v3687, %v3702
  %v3705 = vunpack.c.l.s4 1966171168
  %v3706 = vunpack.c.0.s8 %v3705
  %v3707 = vlaneseq
  %v3708 = vshrl.u32 %v3707, 7
  %v3709 = vsub.s32 %v3706, %v3708
  %v3710 = vrot.slane %v3688, %v3709
  %v3712 = vunpack.c.l.s4 1966171168
  %v3713 = vunpack.c.0.s8 %v3712
  %v3714 = vlaneseq
  %v3715 = vshrl.u32 %v3714, 7
  %v3716 = vsub.s32 %v3713, %v3715
  %v3717 = vrot.slane %v3689, %v3716
  %v3718 = vcombine.low %v3696, %v3703
  %v3719 = vcombine.low %v3710, %v3717
  %v3721 = vunpack.c.l.s4 1966171168
  %v3722 = vunpack.c.0.s8 %v3721
  %v3723 = vlaneseq
  %v3724 = vshrl.u32 %v3723, 7
  %v3725 = vsub.s32 %v3722, %v3724
  %v3726 = vrot.slane %v3718, %v3725
  %v3728 = vunpack.c.l.s4 1966171168
  %v3729 = vunpack.c.0.s8 %v3728
  %v3730 = vlaneseq
  %v3731 = vshrl.u32 %v3730, 7
  %v3732 = vsub.s32 %v3729, %v3731
  %v3733 = vrot.slane %v3719, %v3732
  %v3734 = vcombine.low %v3726, %v3733
  %v3735 = vcombine.low %v3506, %v3508
  %v3736 = vcombine.low %v3523, %v3530
  %v3738 = vunpack.c.l.s4 1966171168
  %v3739 = vunpack.c.0.s8 %v3738
  %v3740 = vlaneseq
  %v3741 = vshrl.u32 %v3740, 7
  %v3742 = vsub.s32 %v3739, %v3741
  %v3743 = vrot.slane %v3735, %v3742
  %v3745 = vunpack.c.l.s4 1966171168
  %v3746 = vunpack.c.0.s8 %v3745
  %v3747 = vlaneseq
  %v3748 = vshrl.u32 %v3747, 7
  %v3749 = vsub.s32 %v3746, %v3748
  %v3750 = vrot.slane %v3736, %v3749
  %v3751 = vcombine.low %v3743, %v3750
  %v3753 = vunpack.c.l.s4 1966171168
  %v3754 = vunpack.c.0.s8 %v3753
  %v3755 = vlaneseq
  %v3756 = vshrl.u32 %v3755, 7
  %v3757 = vsub.s32 %v3754, %v3756
  %v3758 = vrot.slane %v3751, %v3757
  %v3765 = vsel %vm31, 0.0, %v3571
  %v3766 = vsel %vm31, 0.0, %v3685
  %v3767 = vsel %vm2113, %v3644, 0.0
  %v3768 = vsel %vm2113, %v3758, 0.0
  %v3773 = vrot.slane %v3765, 1
  %v3774 = vrot.slane %v3620, 1
  %v3775 = vsel %vm40, %v3773, %v3774
  %v3776 = vrot.slane %v3767, 1
  %v3777 = vsel %vm40, %v3774, %v3776
  %v3778 = vrot.slane %v3766, 1
  %v3779 = vrot.slane %v3734, 1
  %v3780 = vsel %vm40, %v3778, %v3779
  %v3781 = vrot.slane %v3768, 1
  %v3782 = vsel %vm40, %v3779, %v3781
  %3783 = vrot.lane.b32.xlu0 %v3775, 64
  %v3784 = vpop.permute.xlu0 %3783
  %3785 = vrot.lane.b32.xlu0 %v3777, 64
  %v3786 = vpop.permute.xlu0 %3785
  %3787 = vrot.lane.b32.xlu0 %v3776, 64
  %v3788 = vpop.permute.xlu0 %3787
  %3789 = vrot.lane.b32.xlu0 %v3780, 64
  %v3790 = vpop.permute.xlu0 %3789
  %3791 = vrot.lane.b32.xlu0 %v3782, 64
  %v3792 = vpop.permute.xlu0 %3791
  %3793 = vrot.lane.b32.xlu0 %v3781, 64
  %v3794 = vpop.permute.xlu0 %3793
  %v3801 = vrot.slane %v3765, 2
  %v3802 = vrot.slane %v3620, 2
  %v3803 = vsel %vm59, %v3801, %v3802
  %v3804 = vrot.slane %v3767, 2
  %v3805 = vsel %vm59, %v3802, %v3804
  %v3806 = vrot.slane %v3766, 2
  %v3807 = vrot.slane %v3734, 2
  %v3808 = vsel %vm59, %v3806, %v3807
  %v3809 = vrot.slane %v3768, 2
  %v3810 = vsel %vm59, %v3807, %v3809
  %v3817 = vrot.slane %v3765, 3
  %v3818 = vrot.slane %v3620, 3
  %v3819 = vsel %vm78, %v3817, %v3818
  %v3820 = vrot.slane %v3767, 3
  %v3821 = vsel %vm78, %v3818, %v3820
  %v3822 = vrot.slane %v3766, 3
  %v3823 = vrot.slane %v3734, 3
  %v3824 = vsel %vm78, %v3822, %v3823
  %v3825 = vrot.slane %v3768, 3
  %v3826 = vsel %vm78, %v3823, %v3825
  %3827 = vrot.lane.b32.xlu0 %v3819, 64
  %v3828 = vpop.permute.xlu0 %3827
  %3829 = vrot.lane.b32.xlu0 %v3821, 64
  %v3830 = vpop.permute.xlu0 %3829
  %3831 = vrot.lane.b32.xlu0 %v3820, 64
  %v3832 = vpop.permute.xlu0 %3831
  %3833 = vrot.lane.b32.xlu0 %v3824, 64
  %v3834 = vpop.permute.xlu0 %3833
  %3835 = vrot.lane.b32.xlu0 %v3826, 64
  %v3836 = vpop.permute.xlu0 %3835
  %3837 = vrot.lane.b32.xlu0 %v3825, 64
  %v3838 = vpop.permute.xlu0 %3837
  %v3845 = vsel %vm3230, %v3765, %v3784
  %v3846 = vsel %vm3230, %v3620, %v3786
  %v3847 = vsel %vm3230, %v3767, %v3788
  %v3848 = vsel %vm3230, %v3766, %v3790
  %v3849 = vsel %vm3230, %v3734, %v3792
  %v3850 = vsel %vm3230, %v3768, %v3794
  %v3851 = vsel %vm3230, %v3803, %v3828
  %v3852 = vsel %vm3230, %v3805, %v3830
  %v3853 = vsel %vm3230, %v3804, %v3832
  %v3854 = vsel %vm3230, %v3808, %v3834
  %v3855 = vsel %vm3230, %v3810, %v3836
  %v3856 = vsel %vm3230, %v3809, %v3838
  %v3869 = vcombine.low %v3845, %v3851
  %v3870 = vcombine.high %v3845, %v3851
  %v3871 = vcombine.low %v3846, %v3852
  %v3872 = vcombine.high %v3846, %v3852
  %v3873 = vcombine.low %v3847, %v3853
  %v3874 = vcombine.low %v3848, %v3854
  %v3875 = vcombine.high %v3848, %v3854
  %v3876 = vcombine.low %v3849, %v3855
  %v3877 = vcombine.high %v3849, %v3855
  %v3878 = vcombine.low %v3850, %v3856
  %v3879 = vld [vmem:[%s4] sm:$0xff]
  %v3880 = vld [vmem:[%s4 + $0x8] sm:$0xff]
  %v3881 = vld [vmem:[%s4 + $0x10] sm:$0xff]
  %v3882 = vld [vmem:[%s4 + $0x18] sm:$0xff]
  %v3883 = vld [vmem:[%s4 + $0x20] sm:$0xff]
  %v3884 = vld [vmem:[%s4 + $0x28] sm:$0xff]
  %v3885 = vld [vmem:[%s4 + $0x30] sm:$0xff]
  %v3886 = vld [vmem:[%s4 + $0x38] sm:$0xff]
  %v3887 = vld [vmem:[%s4 + $0x40] sm:$0xff]
  %v3888 = vld [vmem:[%s4 + $0x48] sm:$0xff]
  %v3889 = vld [vmem:[%s4 + $0x50] sm:$0xff]
  %v3890 = vld [vmem:[%s4 + $0x58] sm:$0xff]
  %v3891 = vld [vmem:[%s4 + $0x60] sm:$0xff]
  %v3892 = vld [vmem:[%s4 + $0x68] sm:$0xff]
  %v3893 = vld [vmem:[%s4 + $0x70] sm:$0xff]
  %v3894 = vld [vmem:[%s4 + $0x78] sm:$0xff]
  %v3895 = vld [vmem:[%s4 + $0x80] sm:$0xff]
  %v3896 = vld [vmem:[%s4 + $0x88] sm:$0xff]
  %v3897 = vld [vmem:[%s4 + $0x90] sm:$0xff]
  %v3898 = vld [vmem:[%s4 + $0x98] sm:$0xff]
  %v3899 = vld [vmem:[%s4 + $0xa0] sm:$0xff]
  %v3900 = vld [vmem:[%s4 + $0xa8] sm:$0xff]
  %v3901 = vld [vmem:[%s4 + $0xb0] sm:$0xff]
  %v3902 = vld [vmem:[%s4 + $0xb8] sm:$0xff]
  %v3903 = vld [vmem:[%s4 + $0xc0] sm:$0xff]
  %v3904 = vld [vmem:[%s4 + $0xc8] sm:$0xff]
  %v3905 = vld [vmem:[%s4 + $0xd0] sm:$0xff]
  %v3906 = vld [vmem:[%s4 + $0xd8] sm:$0xff]
  %v3907 = vld [vmem:[%s4 + $0xe0] sm:$0xff]
  %v3908 = vld [vmem:[%s4 + $0xe8] sm:$0xff]
  %v3909 = vld [vmem:[%s4 + $0xf0] sm:$0xff]
  %v3910 = vld [vmem:[%s4 + $0xf8] sm:$0xff]
  %v3911 = vld [vmem:[%s5 + $0x11] ss:$0 sm:$0xff]
  %v3912 = vcombine.low %v3869, %v3870
  %v3913 = vcombine.high %v3869, %v3870
  %v3914 = vcombine.low %v3871, %v3872
  %v3915 = vcombine.high %v3871, %v3872
  %v3916 = vcombine.low %v3873, %v3874
  %v3917 = vcombine.high %v3873, %v3874
  %v3918 = vcombine.low %v3875, %v3876
  %v3919 = vcombine.high %v3875, %v3876
  %v3920 = vcombine.low %v3877, %v3878
  %v3921 = vcombine.high %v3877, %v3878
  %3932 = vmatprep.subr.mxu0 0.0
  %3933 = vmatpush1.msra.mxu0 %v3894
  %3934 = vmatprep.subr.mxu0 0.0
  %3935 = vmatpush1.msra.mxu0 %v3893
  %3936 = vmatprep.subr.mxu0 0.0
  %3937 = vmatpush1.msra.mxu0 %v3892
  %3938 = vmatprep.subr.mxu0 0.0
  %3939 = vmatpush1.msra.mxu0 %v3891
  %3940 = vmatprep.subr.mxu0 0.0
  %3941 = vmatpush1.msra.mxu0 %v3890
  %3942 = vmatprep.subr.mxu0 0.0
  %3943 = vmatpush1.msra.mxu0 %v3889
  %3944 = vmatprep.subr.mxu0 0.0
  %3945 = vmatpush1.msra.mxu0 %v3888
  %3946 = vmatprep.subr.mxu0 0.0
  %3947 = vmatpush1.msra.mxu0 %v3887
  %3948 = vmatprep.subr.mxu0 0.0
  %3949 = vmatpush1.msra.mxu0 %v3886
  %3950 = vmatprep.subr.mxu0 0.0
  %3951 = vmatpush1.msra.mxu0 %v3885
  %3952 = vmatprep.subr.mxu0 0.0
  %3953 = vmatpush1.msra.mxu0 %v3884
  %3954 = vmatprep.subr.mxu0 0.0
  %3955 = vmatpush1.msra.mxu0 %v3883
  %3956 = vmatprep.subr.mxu0 0.0
  %3957 = vmatpush1.msra.mxu0 %v3882
  %3958 = vmatprep.subr.mxu0 0.0
  %3959 = vmatpush1.msra.mxu0 %v3881
  %3960 = vmatprep.subr.mxu0 0.0
  %3961 = vmatpush1.msra.mxu0 %v3880
  %3962 = vmatprep.subr.mxu0 0.0
  %3963 = vmatpush1.msra.mxu0 %v3879
  %3964 = vmatprep.subr.mxu0 0.0
  %3965 = vmatpush2.msra.mxu0 %v3910
  %3966 = vmatprep.subr.mxu0 0.0
  %3967 = vmatpush2.msra.mxu0 %v3909
  %3968 = vmatprep.subr.mxu0 0.0
  %3969 = vmatpush2.msra.mxu0 %v3908
  %3970 = vmatprep.subr.mxu0 0.0
  %3971 = vmatpush2.msra.mxu0 %v3907
  %3972 = vmatprep.subr.mxu0 0.0
  %3973 = vmatpush2.msra.mxu0 %v3906
  %3974 = vmatprep.subr.mxu0 0.0
  %3975 = vmatpush2.msra.mxu0 %v3905
  %3976 = vmatprep.subr.mxu0 0.0
  %3977 = vmatpush2.msra.mxu0 %v3904
  %3978 = vmatprep.subr.mxu0 0.0
  %3979 = vmatpush2.msra.mxu0 %v3903
  %3980 = vmatprep.subr.mxu0 0.0
  %3981 = vmatpush2.msra.mxu0 %v3902
  %3982 = vmatprep.subr.mxu0 0.0
  %3983 = vmatpush2.msra.mxu0 %v3901
  %3984 = vmatprep.subr.mxu0 0.0
  %3985 = vmatpush2.msra.mxu0 %v3900
  %3986 = vmatprep.subr.mxu0 0.0
  %3987 = vmatpush2.msra.mxu0 %v3899
  %3988 = vmatprep.subr.mxu0 0.0
  %3989 = vmatpush2.msra.mxu0 %v3898
  %3990 = vmatprep.subr.mxu0 0.0
  %3991 = vmatpush2.msra.mxu0 %v3897
  %3992 = vmatprep.subr.mxu0 0.0
  %3993 = vmatpush2.msra.mxu0 %v3896
  %3994 = vmatprep.subr.mxu0 0.0
  %3995 = vmatpush2.msra.mxu0 %v3895
  %3996 = vmatprep.mubr.f32.mxu0 %v3913
  %3997 = vmatmul.mubr.f32.gmra.mxu0 %v3912
  %v3998 = vpop.f32.mrf.mxu0
  %v3999 = vadd.f32 %v3911, %v3998
  %v4000 = vpop.f32.mrf.mxu0
  %4001 = vmatprep.mubr.f32.mxu0 %v3915
  %4002 = vmatmul.mubr.f32.gmra.mxu0 %v3914
  %v4003 = vpop.f32.mrf.mxu0
  %v4004 = vadd.f32 %v3911, %v4003
  %v4005 = vpop.f32.mrf.mxu0
  %4006 = vmatprep.mubr.f32.mxu0 %v3917
  %4007 = vmatmul.mubr.f32.gmra.mxu0 %v3916
  %v4008 = vpop.f32.mrf.mxu0
  %v4009 = vadd.f32 %v3911, %v4008
  %v4010 = vpop.f32.mrf.mxu0
  %4011 = vmatprep.mubr.f32.mxu0 %v3919
  %4012 = vmatmul.mubr.f32.gmra.mxu0 %v3918
  %v4013 = vpop.f32.mrf.mxu0
  %v4014 = vadd.f32 %v3911, %v4013
  %v4015 = vpop.f32.mrf.mxu0
  %4016 = vmatprep.mubr.f32.mxu0 %v3921
  %4017 = vmatmul.mubr.f32.gmra.mxu0 %v3920
  %v4018 = vpop.f32.mrf.mxu0
  %v4019 = vadd.f32 %v3911, %v4018
  %v4020 = vpop.f32.mrf.mxu0
  %4021 = vdwg.mxu0
  %v4022 = vsel %vm418, %v3999, 0.0
  %v4023 = vsel %vm418, %v4004, 0.0
  %v4024 = vadd.f32 %v4022, %v4023
  %v4025 = vsel %vm418, %v4009, 0.0
  %v4026 = vadd.f32 %v4024, %v4025
  %v4027 = vsel %vm418, %v4014, 0.0
  %v4028 = vadd.f32 %v4026, %v4027
  %v4029 = vsel %vm418, %v4019, 0.0
  %v4030 = vadd.f32 %v4028, %v4029
  %v4031 = vrot.slane %v4030, 4
  %v4032 = vadd.f32 %v4030, %v4031
  %v4033 = vrot.slane %v4032, 2
  %v4034 = vadd.f32 %v4032, %v4033
  %v4035 = vrot.slane %v4034, 1
  %v4036 = vadd.f32 %v4034, %v4035
  %v4037 = vmul.f32 %v4036, 0.025
  %v4038 = vsub.f32 %v3999, %v4037
  %v4039 = vsub.f32 %v4004, %v4037
  %v4040 = vsub.f32 %v4009, %v4037
  %v4041 = vsub.f32 %v4014, %v4037
  %v4042 = vsub.f32 %v4019, %v4037
  %v4043 = vmul.f32 %v4038, %v4038
  %v4044 = vmul.f32 %v4039, %v4039
  %v4045 = vmul.f32 %v4040, %v4040
  %v4046 = vmul.f32 %v4041, %v4041
  %v4047 = vmul.f32 %v4042, %v4042
  %v4048 = vsel %vm418, %v4043, 0.0
  %v4049 = vsel %vm418, %v4044, 0.0
  %v4050 = vadd.f32 %v4048, %v4049
  %v4051 = vsel %vm418, %v4045, 0.0
  %v4052 = vadd.f32 %v4050, %v4051
  %v4053 = vsel %vm418, %v4046, 0.0
  %v4054 = vadd.f32 %v4052, %v4053
  %v4055 = vsel %vm418, %v4047, 0.0
  %v4056 = vadd.f32 %v4054, %v4055
  %v4057 = vrot.slane %v4056, 4
  %v4058 = vadd.f32 %v4056, %v4057
  %v4059 = vrot.slane %v4058, 2
  %v4060 = vadd.f32 %v4058, %v4059
  %v4061 = vrot.slane %v4060, 1
  %v4062 = vadd.f32 %v4060, %v4061
  %v4063 = vmul.f32 %v4062, 0.025
  %v4064 = vadd.f32 %v4063, 1e-05
  %v4065 = vrsqrt.pop %v4064
  %v4066 = vmul.f32 %v4038, %v4065
  %v4067 = vmul.f32 %v4039, %v4065
  %v4068 = vmul.f32 %v4040, %v4065
  %v4069 = vmul.f32 %v4041, %v4065
  %v4070 = vmul.f32 %v4042, %v4065
  %v4071 = vld [vmem:[%s5 + $0x12] ss:$0 sm:$0xff]
  %v4072 = vmul.f32 %v4066, %v4071
  %v4073 = vmul.f32 %v4067, %v4071
  %v4074 = vmul.f32 %v4068, %v4071
  %v4075 = vmul.f32 %v4069, %v4071
  %v4076 = vmul.f32 %v4070, %v4071
  %v4077 = vld [vmem:[%s5 + $0x13] ss:$0 sm:$0xff]
  %v4078 = vadd.f32 %v4072, %v4077
  %v4079 = vadd.f32 %v4073, %v4077
  %v4080 = vadd.f32 %v4074, %v4077
  %v4081 = vadd.f32 %v4075, %v4077
  %v4082 = vadd.f32 %v4076, %v4077
  %vm4083 = vcmp.gt.f32.partialorder %v4078, 0.0
  %vm4084 = vcmp.gt.f32.partialorder %v4079, 0.0
  %vm4085 = vcmp.gt.f32.partialorder %v4080, 0.0
  %vm4086 = vcmp.gt.f32.partialorder %v4081, 0.0
  %vm4087 = vcmp.gt.f32.partialorder %v4082, 0.0
  %v4088 = vmul.f32 %v4078, 0.01
  %v4089 = vmul.f32 %v4079, 0.01
  %v4090 = vmul.f32 %v4080, 0.01
  %v4091 = vmul.f32 %v4081, 0.01
  %v4092 = vmul.f32 %v4082, 0.01
  %v4093 = vsel %vm4083, %v4078, %v4088
  %v4094 = vsel %vm4084, %v4079, %v4089
  %v4095 = vsel %vm4085, %v4080, %v4090
  %v4096 = vsel %vm4086, %v4081, %v4091
  %v4097 = vsel %vm4087, %v4082, %v4092
  %v4103 = vcombine.high %v4093, %v4093
  %v4104 = vcombine.high %v4094, %v4094
  %v4105 = vcombine.high %v4095, %v4095
  %v4106 = vcombine.high %v4096, %v4096
  %v4107 = vcombine.high %v4097, %v4097
  %v4108 = vcombine.low %v4093, %v4103
  %v4109 = vcombine.low %v4094, %v4104
  %v4110 = vcombine.low %v4105, %v4096
  %v4111 = vcombine.low %v4106, %v4097
  %v4112 = vrot.slane %v4108, 5
  %v4113 = vrot.slane %v4109, 5
  %v4114 = vsel %vm31, %v4112, %v4113
  %v4115 = vrot.slane %v4095, 5
  %v4116 = vsel %vm31, %v4113, %v4115
  %v4117 = vrot.slane %v4110, 5
  %v4118 = vrot.slane %v4111, 5
  %v4119 = vsel %vm31, %v4117, %v4118
  %v4120 = vrot.slane %v4107, 5
  %v4121 = vsel %vm31, %v4118, %v4120
  %v4128 = vsel %vm31, 0.0, %v4112
  %v4129 = vsel %vm31, 0.0, %v4117
  %v4130 = vsel %vm40, %v4116, 0.0
  %v4131 = vsel %vm40, %v4121, 0.0
  %v4136 = vrot.slane %v4128, 1
  %v4137 = vrot.slane %v4114, 1
  %v4138 = vsel %vm40, %v4136, %v4137
  %v4139 = vrot.slane %v4130, 1
  %v4140 = vsel %vm40, %v4137, %v4139
  %v4141 = vrot.slane %v4129, 1
  %v4142 = vrot.slane %v4119, 1
  %v4143 = vsel %vm40, %v4141, %v4142
  %v4144 = vrot.slane %v4131, 1
  %v4145 = vsel %vm40, %v4142, %v4144
  %4146 = vrot.lane.b32.xlu0 %v4138, 32
  %v4147 = vpop.permute.xlu0 %4146
  %4148 = vrot.lane.b32.xlu0 %v4140, 32
  %v4149 = vpop.permute.xlu0 %4148
  %4150 = vrot.lane.b32.xlu0 %v4139, 32
  %v4151 = vpop.permute.xlu0 %4150
  %4152 = vrot.lane.b32.xlu0 %v4143, 32
  %v4153 = vpop.permute.xlu0 %4152
  %4154 = vrot.lane.b32.xlu0 %v4145, 32
  %v4155 = vpop.permute.xlu0 %4154
  %4156 = vrot.lane.b32.xlu0 %v4144, 32
  %v4157 = vpop.permute.xlu0 %4156
  %v4164 = vrot.slane %v4128, 2
  %v4165 = vrot.slane %v4114, 2
  %v4166 = vsel %vm59, %v4164, %v4165
  %v4167 = vrot.slane %v4130, 2
  %v4168 = vsel %vm59, %v4165, %v4167
  %v4169 = vrot.slane 0.0, 2
  %v4170 = vsel %vm59, %v4167, %v4169
  %v4171 = vrot.slane %v4129, 2
  %v4172 = vrot.slane %v4119, 2
  %v4173 = vsel %vm59, %v4171, %v4172
  %v4174 = vrot.slane %v4131, 2
  %v4175 = vsel %vm59, %v4172, %v4174
  %v4176 = vsel %vm59, %v4174, %v4169
  %4177 = vrot.lane.b32.xlu0 %v4166, 64
  %v4178 = vpop.permute.xlu0 %4177
  %4179 = vrot.lane.b32.xlu0 %v4168, 64
  %v4180 = vpop.permute.xlu0 %4179
  %4181 = vrot.lane.b32.xlu0 %v4170, 64
  %v4182 = vpop.permute.xlu0 %4181
  %4183 = vrot.lane.b32.xlu0 %v4173, 64
  %v4184 = vpop.permute.xlu0 %4183
  %4185 = vrot.lane.b32.xlu0 %v4175, 64
  %v4186 = vpop.permute.xlu0 %4185
  %4187 = vrot.lane.b32.xlu0 %v4176, 64
  %v4188 = vpop.permute.xlu0 %4187
  %v4195 = vrot.slane %v4128, 3
  %v4196 = vrot.slane %v4114, 3
  %v4197 = vsel %vm78, %v4195, %v4196
  %v4198 = vrot.slane %v4130, 3
  %v4199 = vsel %vm78, %v4196, %v4198
  %v4200 = vsel %vm78, %v4198, %v1063
  %v4201 = vrot.slane %v4129, 3
  %v4202 = vrot.slane %v4119, 3
  %v4203 = vsel %vm78, %v4201, %v4202
  %v4204 = vrot.slane %v4131, 3
  %v4205 = vsel %vm78, %v4202, %v4204
  %v4206 = vsel %vm78, %v4204, %v1063
  %4207 = vrot.lane.b32.xlu0 %v4197, 96
  %v4208 = vpop.permute.xlu0 %4207
  %4209 = vrot.lane.b32.xlu0 %v4199, 96
  %v4210 = vpop.permute.xlu0 %4209
  %4211 = vrot.lane.b32.xlu0 %v4200, 96
  %v4212 = vpop.permute.xlu0 %4211
  %4213 = vrot.lane.b32.xlu0 %v4203, 96
  %v4214 = vpop.permute.xlu0 %4213
  %4215 = vrot.lane.b32.xlu0 %v4205, 96
  %v4216 = vpop.permute.xlu0 %4215
  %4217 = vrot.lane.b32.xlu0 %v4206, 96
  %v4218 = vpop.permute.xlu0 %4217
  %v4225 = vsel %vm418, %v4128, %v4147
  %v4226 = vsel %vm418, %v4114, %v4149
  %v4227 = vsel %vm418, %v4130, %v4151
  %v4228 = vsel %vm418, %v4129, %v4153
  %v4229 = vsel %vm418, %v4119, %v4155
  %v4230 = vsel %vm418, %v4131, %v4157
  %v4231 = vsel %vm3230, %v4225, %v4178
  %v4232 = vsel %vm3230, %v4226, %v4180
  %v4233 = vsel %vm3230, %v4227, %v4182
  %v4234 = vsel %vm3230, %v4228, %v4184
  %v4235 = vsel %vm3230, %v4229, %v4186
  %v4236 = vsel %vm3230, %v4230, %v4188
  %vm4237 = vcmask 785408
  %v4238 = vsel %vm4237, %v4231, %v4208
  %v4239 = vsel %vm4237, %v4232, %v4210
  %v4240 = vsel %vm4237, %v4233, %v4212
  %v4241 = vsel %vm4237, %v4234, %v4214
  %v4242 = vsel %vm4237, %v4235, %v4216
  %v4243 = vsel %vm4237, %v4236, %v4218
  %v4244 = vld [vmem:[%s5 + $0x17] ss:$0 sm:$0xff]
  %v4245 = vmul.f32 %v4238, %v4244
  %v4246 = vmul.f32 %v4239, %v4244
  %v4247 = vmul.f32 %v4240, %v4244
  %v4248 = vmul.f32 %v4241, %v4244
  %v4249 = vmul.f32 %v4242, %v4244
  %v4250 = vmul.f32 %v4243, %v4244
  %4251 = vadd.xlane.f32.xlu0 %v4245
  %v4252 = vpop.xlane.xlu0 %4251
  %4253 = vadd.xlane.f32.xlu0 %v4246
  %v4254 = vpop.xlane.xlu0 %4253
  %v4255 = vsel %vm40, %v4247, 0.0
  %4256 = vadd.xlane.f32.xlu0 %v4255
  %v4257 = vpop.xlane.xlu0 %4256
  %4258 = vadd.xlane.f32.xlu0 %v4248
  %v4259 = vpop.xlane.xlu0 %4258
  %4260 = vadd.xlane.f32.xlu0 %v4249
  %v4261 = vpop.xlane.xlu0 %4260
  %v4262 = vsel %vm40, %v4250, 0.0
  %4263 = vadd.xlane.f32.xlu0 %v4262
  %v4264 = vpop.xlane.xlu0 %4263
  %v4265 = vld [vmem:[%s5 + $0x14] ss:$0 sm:$0xff]
  %4267 = vset.pattern.permute.xlu0 0
  %4268 = vperm.xlu0 %4267, %v4265
  %v4269 = vpop.permute.xlu0 %4268
  %v4271 = vadd.f32 %v4252, %v4269
  %v4272 = vadd.f32 %v4254, %v4269
  %v4273 = vadd.f32 %v4257, %v4269
  %v4274 = vadd.f32 %v4259, %v4269
  %v4275 = vadd.f32 %v4261, %v4269
  %v4276 = vadd.f32 %v4264, %v4269
  %vm4277 = vcmp.gt.f32.partialorder %v4271, 0.0
  %vm4278 = vcmp.gt.f32.partialorder %v4272, 0.0
  %vm4279 = vcmp.gt.f32.partialorder %v4273, 0.0
  %vm4280 = vcmp.gt.f32.partialorder %v4274, 0.0
  %vm4281 = vcmp.gt.f32.partialorder %v4275, 0.0
  %vm4282 = vcmp.gt.f32.partialorder %v4276, 0.0
  %v4283 = vmul.f32 %v4271, 0.01
  %v4284 = vmul.f32 %v4272, 0.01
  %v4285 = vmul.f32 %v4273, 0.01
  %v4286 = vmul.f32 %v4274, 0.01
  %v4287 = vmul.f32 %v4275, 0.01
  %v4288 = vmul.f32 %v4276, 0.01
  %v4289 = vsel %vm4277, %v4271, %v4283
  %v4290 = vsel %vm4278, %v4272, %v4284
  %v4291 = vsel %vm4279, %v4273, %v4285
  %v4292 = vsel %vm4280, %v4274, %v4286
  %v4293 = vsel %vm4281, %v4275, %v4287
  %v4294 = vsel %vm4282, %v4276, %v4288
  %v4295 = vld [vmem:[%s5 + $0x15] ss:$0 sm:$0xff]
  %4298 = vbcast.lane.b32.xlu0 %v4295, 256
  %v4299 = vpop.permute.xlu0 %4298
  %s4301 = sor.u32 256, 8
  %4302 = vbcast.lane.b32.xlu0 %v4295, %s4301
  %v4303 = vpop.permute.xlu0 %4302
  %s4305 = sor.u32 256, 16
  %4306 = vbcast.lane.b32.xlu0 %v4295, %s4305
  %v4307 = vpop.permute.xlu0 %4306
  %v4311 = vmul.f32 %v4289, %v4299
  %v4312 = vmul.f32 %v4290, %v4303
  %v4313 = vmul.f32 %v4291, %v4307
  %v4314 = vmul.f32 %v4292, %v4299
  %v4315 = vmul.f32 %v4293, %v4303
  %v4316 = vmul.f32 %v4294, %v4307
  %4323 = vset.pattern.permute.xlu0 0
  %4324 = vperm.xlu0 %4323, %v4311
  %v4325 = vpop.permute.xlu0 %4324
  %4326 = vset.pattern.permute.xlu0 0
  %4327 = vperm.xlu0 %4326, %v4312
  %v4328 = vpop.permute.xlu0 %4327
  %4329 = vset.pattern.permute.xlu0 0
  %4330 = vperm.xlu0 %4329, %v4313
  %v4331 = vpop.permute.xlu0 %4330
  %4332 = vset.pattern.permute.xlu0 0
  %4333 = vperm.xlu0 %4332, %v4314
  %v4334 = vpop.permute.xlu0 %4333
  %4335 = vset.pattern.permute.xlu0 0
  %4336 = vperm.xlu0 %4335, %v4315
  %v4337 = vpop.permute.xlu0 %4336
  %4338 = vset.pattern.permute.xlu0 0
  %4339 = vperm.xlu0 %4338, %v4316
  %v4340 = vpop.permute.xlu0 %4339
  %v4341 = vlaneseq
  %v4342 = vand.u32 %v4341, 127
  %v4343 = vlaneseq
  %v4344 = vshrl.u32 %v4343, 7
  %v4345 = vsub.s32 %v4342, %v4344
  %v4346 = vrot.slane %v4325, %v4345
  %v4347 = vadd.s32 %v4342, 4294967288
  %v4348 = vlaneseq
  %v4349 = vshrl.u32 %v4348, 7
  %v4350 = vsub.s32 %v4347, %v4349
  %v4351 = vrot.slane %v4328, %v4350
  %vm4352 = vcmask 130112
  %v4353 = vsel %vm4352, %v4351, %v4346
  %v4354 = vadd.s32 %v4342, 4294967280
  %v4355 = vlaneseq
  %v4356 = vshrl.u32 %v4355, 7
  %v4357 = vsub.s32 %v4354, %v4356
  %v4358 = vrot.slane %v4331, %v4357
  %vm4359 = vcmask 195712
  %v4360 = vsel %vm4359, %v4358, %v4353
  %v4361 = vlaneseq
  %v4362 = vshrl.u32 %v4361, 7
  %v4363 = vsub.s32 %v4342, %v4362
  %v4364 = vrot.slane %v4334, %v4363
  %v4365 = vlaneseq
  %v4366 = vshrl.u32 %v4365, 7
  %v4367 = vsub.s32 %v4347, %v4366
  %v4368 = vrot.slane %v4337, %v4367
  %v4369 = vsel %vm4352, %v4368, %v4364
  %v4370 = vlaneseq
  %v4371 = vshrl.u32 %v4370, 7
  %v4372 = vsub.s32 %v4354, %v4371
  %v4373 = vrot.slane %v4340, %v4372
  %v4374 = vsel %vm4359, %v4373, %v4369
  %vm4375 = vcmask 1041409
  %v4376 = vsel %vm4375, %v4374, %v4360
  %vm4378 = vcmask 181248
  %v4379 = vsel %vm4378, %v4376, 0.0
  %4380 = vadd.xlane.f32.xlu0 %v4379
  %v4381 = vpop.xlane.xlu0 %4380
  %v4382 = vld [vmem:[%s5 + $0x16] ss:$0 sm:$0xff]
  %v4383 = vadd.f32 %v4381, %v4382
  %vm4384 = vcmask 1024
  %4385 = vst.msk [vmem:[%s6] sm:$0x3] %vm4384, %v4383
  // Predicated region
  $region26: #{regressor_forward.1} parent=0 // pred_check
    _
  $region27: #{regressor_forward.1} parent=0 // pred_check_branch
    %4387 = sbr.rel (0) target = $region29
  $region28: #{regressor_forward.1} parent=0 // pred_region
    _
  $region29: #{regressor_forward.1} parent=0 // pred_fallthru
    _
  // Predicated region
  $region30: #{regressor_forward.1} parent=0 // pred_check
    _
  $region31: #{regressor_forward.1} parent=0 // pred_check_branch
    %4389 = sbr.rel (0) target = $region33
  $region32: #{regressor_forward.1} parent=0 // pred_region
    _
  $region33: #{regressor_forward.1} parent=0 // pred_fallthru
    _

</llo_original>
